<compile_context>
chip_gen: v6e
topology: v6e:2x2x1
jax: 0.10.0
libtpu: 0.0.40
codegen_flags: <defaults>
</compile_context>

<pallas_src>
import numpy as np

import jax
import jax.numpy as jnp
from jax.experimental import pallas as pl
from jax.experimental.pallas import tpu as pltpu

# ------------------------------ network sizes -------------------------------
H, W, C_IN, K = 32, 32, 3, 5
OC1, OC1B = 6, 8                 # conv1 out-channels, padded lane block
OH1, OW1 = H - K + 1, W - K + 1  # 28, 28
PH1, PW1 = OH1 // 2, OW1 // 2    # 14, 14
OC2, OC2B = 16, 16               # conv2 out-channels (already a nice block)
OH2, OW2 = PH1 - K + 1, PW1 - K + 1  # 10, 10
PH2, PW2 = OH2 // 2, OW2 // 2    # 5, 5
F1, F2, F3 = 120, 84, 10
LANES = 128
MXU_DTYPE = jnp.bfloat16         # MXU operand dtype; accumulation stays f32


# ------------------------------ fused kernel --------------------------------

def _lenet_kernel(x_ref, t1_ref, c1b_ref, eo1_ref, rr1_ref,
                  t2_ref, c2b_ref, eo2_ref, rr2_ref,
                  w1_ref, fb1_ref, w2_ref, fb2_ref, w3_ref, fb3_ref,
                  o_ref):
    """One image per grid step: conv1+pool1+conv2+pool2+fc1+fc2+fc3."""
    f32 = jnp.float32

    def pool2x2(a, eo_ref, rr_ref):
        # Exact 2x2/2 max pool without strided slices / reshapes:
        #  - 0/1 lane-selection matmuls pick the even / odd column blocks,
        #  - 0/1 row-selection matmuls pick the even / odd rows,
        #  - jnp.maximum combines them.  (f32 selection => exact.)
        we = jnp.dot(a, eo_ref[0], preferred_element_type=f32)
        wo = jnp.dot(a, eo_ref[1], preferred_element_type=f32)
        wmax = jnp.maximum(we, wo)
        he = jnp.dot(rr_ref[0], wmax, preferred_element_type=f32)
        ho = jnp.dot(rr_ref[1], wmax, preferred_element_type=f32)
        return jnp.maximum(he, ho)

    # ---- conv1: 5 wide-contraction Toeplitz matmuls (K-dim = W*C = 96) ----
    x = x_ref[0]                                           # (32, 96) f32
    y1 = jnp.zeros((OH1, OW1 * OC1B), f32)                 # (28, 224) = 8 vregs
    for ki in range(K):
        y1 = y1 + jnp.dot(x[ki:ki + OH1, :].astype(MXU_DTYPE), t1_ref[ki],
                          preferred_element_type=f32)
    a1 = jnp.maximum(y1 + c1b_ref[...], 0.0)               # bias + ReLU
    p1 = pool2x2(a1, eo1_ref, rr1_ref)                     # (14, 112) f32

    # ---- conv2: same structure (K-dim = 14*8 = 112) ----
    y2 = jnp.zeros((OH2, OW2 * OC2B), f32)                 # (10, 160)
    for ki in range(K):
        y2 = y2 + jnp.dot(p1[ki:ki + OH2, :].astype(MXU_DTYPE), t2_ref[ki],
                          preferred_element_type=f32)
    a2 = jnp.maximum(y2 + c2b_ref[...], 0.0)
    p2 = pool2x2(a2, eo2_ref, rr2_ref)                     # (5, 80) f32

    # ---- fc1: PyTorch (c,h,w) flatten folded into 5 row-wise matmuls ----
    h = jnp.zeros((1, LANES), f32)
    for r in range(PH2):
        h = h + jnp.dot(p2[r:r + 1, :].astype(MXU_DTYPE), w1_ref[r],
                        preferred_element_type=f32)
    h = jnp.maximum(h + fb1_ref[...], 0.0)

    # ---- fc2 / fc3 ----
    h = jnp.dot(h.astype(MXU_DTYPE), w2_ref[...], preferred_element_type=f32)
    h = jnp.maximum(h + fb2_ref[...], 0.0)
    h = jnp.dot(h.astype(MXU_DTYPE), w3_ref[...], preferred_element_type=f32)
    o_ref[0] = h + fb3_ref[...]                            # lane-dense (1, 128)


# --------------------- one-time weight packing (hoisted) --------------------

def _toeplitz(w_oihw, w_in, cpad, ocpad):
    """Block-Toeplitz conv weights: T[ki][w*cpad+c, ow*ocpad+oc] = w[oc,c,ki,w-ow]."""
    oc, c, k, _ = w_oihw.shape
    ow = w_in - k + 1
    t = np.zeros((k, w_in * cpad, ow * ocpad), np.float32)
    for ki in range(k):
        for kj in range(k):
            blk = w_oihw[:, :, ki, kj].T                   # (c, oc)
            for j in range(ow):
                wc = j + kj
                t[ki, wc * cpad:wc * cpad + c, j * ocpad:j * ocpad + oc] = blk
    return t


def _tile_bias(b, ow, ocpad):
    out = np.zeros((1, ow * ocpad), np.float32)
    for j in range(ow):
        out[0, j * ocpad:j * ocpad + b.shape[0]] = b
    return out


def _pool_lane_select(ow, cb):
    """(2, ow*cb, (ow//2)*cb) 0/1 matrices selecting even / odd ow-blocks."""
    pw = ow // 2
    e = np.zeros((ow * cb, pw * cb), np.float32)
    o = np.zeros((ow * cb, pw * cb), np.float32)
    for p in range(pw):
        for c in range(cb):
            e[(2 * p) * cb + c, p * cb + c] = 1.0
            o[(2 * p + 1) * cb + c, p * cb + c] = 1.0
    return np.stack([e, o])


def _pool_row_select(oh):
    """(2, oh//2, oh) 0/1 matrices selecting even / odd rows."""
    ph = oh // 2
    e = np.zeros((ph, oh), np.float32)
    o = np.zeros((ph, oh), np.float32)
    for p in range(ph):
        e[p, 2 * p] = 1.0
        o[p, 2 * p + 1] = 1.0
    return np.stack([e, o])


def pack_params(p):
    """One-time packing of PyTorch-layout params into MXU-friendly constants."""
    f32 = np.float32
    cw1, cb1 = np.asarray(p["conv1_w"], f32), np.asarray(p["conv1_b"], f32)
    cw2, cb2 = np.asarray(p["conv2_w"], f32), np.asarray(p["conv2_b"], f32)
    fw1, fb1 = np.asarray(p["fc1_w"], f32), np.asarray(p["fc1_b"], f32)
    fw2, fb2 = np.asarray(p["fc2_w"], f32), np.asarray(p["fc2_b"], f32)
    fw3, fb3 = np.asarray(p["fc3_w"], f32), np.asarray(p["fc3_b"], f32)

    t1 = _toeplitz(cw1, W, C_IN, OC1B)                  # (5,  96, 224)
    c1b = _tile_bias(cb1, OW1, OC1B)                    # (1, 224)
    eo1 = _pool_lane_select(OW1, OC1B)                  # (2, 224, 112)
    rr1 = _pool_row_select(OH1)                         # (2,  14,  28)

    t2 = _toeplitz(cw2, PW1, OC1B, OC2B)                # (5, 112, 160)
    c2b = _tile_bias(cb2, OW2, OC2B)                    # (1, 160)
    eo2 = _pool_lane_select(OW2, OC2B)                  # (2, 160,  80)
    rr2 = _pool_row_select(OH2)                         # (2,   5,  10)

    # fc1 weights indexed by pooled row, with PyTorch's (c,h,w) flatten order.
    w1p = np.zeros((PH2, PW2 * OC2B, LANES), f32)
    for ph in range(PH2):
        for pw in range(PW2):
            for c in range(OC2):
                w1p[ph, pw * OC2B + c, :F1] = fw1[:, c * PH2 * PW2 + ph * PW2 + pw]
    b1p = np.zeros((1, LANES), f32); b1p[0, :F1] = fb1
    w2p = np.zeros((LANES, LANES), f32); w2p[:F1, :F2] = fw2.T
    b2p = np.zeros((1, LANES), f32); b2p[0, :F2] = fb2
    w3p = np.zeros((LANES, LANES), f32); w3p[:F2, :F3] = fw3.T
    b3p = np.zeros((1, LANES), f32); b3p[0, :F3] = fb3

    bf = MXU_DTYPE
    return (
        jnp.asarray(t1, bf), jnp.asarray(c1b), jnp.asarray(eo1), jnp.asarray(rr1),
        jnp.asarray(t2, bf), jnp.asarray(c2b), jnp.asarray(eo2), jnp.asarray(rr2),
        jnp.asarray(w1p, bf), jnp.asarray(b1p),
        jnp.asarray(w2p, bf), jnp.asarray(b2p),
        jnp.asarray(w3p, bf), jnp.asarray(b3p),
    )


# ------------------------------ forward wrapper ------------------------------

def lenet_forward(x_nchw, packed):
    """x_nchw: (N, 3, 32, 32) f32 -> logits (N, 10) f32 via one fused kernel."""
    N = x_nchw.shape[0]
    xh = jnp.transpose(x_nchw, (0, 2, 3, 1)).reshape(N, H, W * C_IN)  # (N,32,96)

    out = pl.pallas_call(
        _lenet_kernel,
        out_shape=jax.ShapeDtypeStruct((N, 1, LANES), jnp.float32),
        grid=(N,),
        in_specs=[
            pl.BlockSpec((1, H, W * C_IN), lambda n: (n, 0, 0)),            # image
            pl.BlockSpec((K, W * C_IN, OW1 * OC1B), lambda n: (0, 0, 0)),   # t1
            pl.BlockSpec((1, OW1 * OC1B), lambda n: (0, 0)),                # c1b
            pl.BlockSpec((2, OW1 * OC1B, PW1 * OC1B), lambda n: (0, 0, 0)), # eo1
            pl.BlockSpec((2, PH1, OH1), lambda n: (0, 0, 0)),               # rr1
            pl.BlockSpec((K, PW1 * OC1B, OW2 * OC2B), lambda n: (0, 0, 0)), # t2
            pl.BlockSpec((1, OW2 * OC2B), lambda n: (0, 0)),                # c2b
            pl.BlockSpec((2, OW2 * OC2B, PW2 * OC2B), lambda n: (0, 0, 0)), # eo2
            pl.BlockSpec((2, PH2, OH2), lambda n: (0, 0, 0)),               # rr2
            pl.BlockSpec((PH2, PW2 * OC2B, LANES), lambda n: (0, 0, 0)),    # w1p
            pl.BlockSpec((1, LANES), lambda n: (0, 0)),                     # b1p
            pl.BlockSpec((LANES, LANES), lambda n: (0, 0)),                 # w2p
            pl.BlockSpec((1, LANES), lambda n: (0, 0)),                     # b2p
            pl.BlockSpec((LANES, LANES), lambda n: (0, 0)),                 # w3p
            pl.BlockSpec((1, LANES), lambda n: (0, 0)),                     # b3p
        ],
        out_specs=pl.BlockSpec((1, 1, LANES), lambda n: (n, 0, 0)),
        compiler_params=pltpu.CompilerParams(
            dimension_semantics=("parallel",),       # batch steps across TCs
            vmem_limit_bytes=32 * 1024 * 1024,
        ),
    )(xh, *packed)

    return out.reshape(N, LANES)[:, :F3]


# ------------------------------ init & reference ----------------------------

def init_params(key):
    """Deterministic PyTorch-default-style init (uniform +/- 1/sqrt(fan_in))."""
    def uniform(k, shape, fan_in):
        bound = 1.0 / np.sqrt(float(fan_in))
        return jax.random.uniform(k, shape, jnp.float32, -bound, bound)

    ks = jax.random.split(key, 10)
    return {
        "conv1_w": uniform(ks[0], (6, 3, 5, 5), 3 * 5 * 5),
        "conv1_b": uniform(ks[1], (6,), 3 * 5 * 5),
        "conv2_w": uniform(ks[2], (16, 6, 5, 5), 6 * 5 * 5),
        "conv2_b": uniform(ks[3], (16,), 6 * 5 * 5),
        "fc1_w": uniform(ks[4], (120, 400), 400),
        "fc1_b": uniform(ks[5], (120,), 400),
        "fc2_w": uniform(ks[6], (84, 120), 120),
        "fc2_b": uniform(ks[7], (84,), 120),
        "fc3_w": uniform(ks[8], (10, 84), 84),
        "fc3_b": uniform(ks[9], (10,), 84),
    }


def reference_forward(x, p):
    """Plain-JAX f32 reference with exact PyTorch forward semantics."""
    def conv(h, w, b):
        y = jax.lax.conv_general_dilated(
            h, w, window_strides=(1, 1), padding="VALID",
            dimension_numbers=("NCHW", "OIHW", "NCHW"))
        return y + b[None, :, None, None]

    def pool(h):
        return jax.lax.reduce_window(h, -jnp.inf, jax.lax.max,
                                     (1, 1, 2, 2), (1, 1, 2, 2), "VALID")

    h = pool(jax.nn.relu(conv(x, p["conv1_w"], p["conv1_b"])))
    h = pool(jax.nn.relu(conv(h, p["conv2_w"], p["conv2_b"])))
    h = h.reshape(h.shape[0], -1)
    h = jax.nn.relu(h @ p["fc1_w"].T + p["fc1_b"])
    h = jax.nn.relu(h @ p["fc2_w"].T + p["fc2_b"])
    return h @ p["fc3_w"].T + p["fc3_b"]


if __name__ == "__main__":
    key = jax.random.PRNGKey(0)
    k_x, k_p = jax.random.split(key)
    x = jax.random.normal(k_x, (2, 3, 32, 32), dtype=jnp.float32)
    params = init_params(k_p)

    packed = pack_params(params)          # one-time weight packing (hoisted)

    out = jax.block_until_ready(jax.jit(lenet_forward)(x, packed))
    assert out.shape == (2, 10) and out.dtype == jnp.float32

    ref = jax.block_until_ready(jax.jit(reference_forward)(x, params))
    max_err = float(jnp.max(jnp.abs(out - ref)))
    # bf16 MXU operands (f32 accumulation) are an intentional precision choice.
    assert max_err < 1e-1, f"mismatch vs reference: {max_err}"

    print("KERNEL_OK")
</pallas_src>

<mosaic_0001>
module attributes {stable_mosaic.version = 11 : i64} {
  func.func @_lenet_kernel(%arg0: i32, %arg1: memref<1x32x96xf32, #tpu.memory_space<vmem>>, %arg2: memref<5x96x224xbf16, #tpu.memory_space<vmem>>, %arg3: memref<1x224xf32, #tpu.memory_space<vmem>>, %arg4: memref<2x224x112xf32, #tpu.memory_space<vmem>>, %arg5: memref<2x14x28xf32, #tpu.memory_space<vmem>>, %arg6: memref<5x112x160xbf16, #tpu.memory_space<vmem>>, %arg7: memref<1x160xf32, #tpu.memory_space<vmem>>, %arg8: memref<2x160x80xf32, #tpu.memory_space<vmem>>, %arg9: memref<2x5x10xf32, #tpu.memory_space<vmem>>, %arg10: memref<5x80x128xbf16, #tpu.memory_space<vmem>>, %arg11: memref<1x128xf32, #tpu.memory_space<vmem>>, %arg12: memref<128x128xbf16, #tpu.memory_space<vmem>>, %arg13: memref<1x128xf32, #tpu.memory_space<vmem>>, %arg14: memref<128x128xbf16, #tpu.memory_space<vmem>>, %arg15: memref<1x128xf32, #tpu.memory_space<vmem>>, %arg16: memref<1x1x128xf32, #tpu.memory_space<vmem>>) attributes {dimension_semantics = [#tpu.dimension_semantics<parallel>], iteration_bounds = array<i64: 2>, scalar_prefetch = 0 : i64, scratch_operands = 0 : i64, tpu.core_type = #tpu.core_type<tc>, window_params = [{transform_indices = @transform_0, window_bounds = array<i64: 1, 32, 96>}, {pipeline_mode = #tpu.pipeline_mode<synchronous>, transform_indices = @transform_1, window_bounds = array<i64: 5, 96, 224>}, {pipeline_mode = #tpu.pipeline_mode<synchronous>, transform_indices = @transform_2, window_bounds = array<i64: 1, 224>}, {pipeline_mode = #tpu.pipeline_mode<synchronous>, transform_indices = @transform_3, window_bounds = array<i64: 2, 224, 112>}, {pipeline_mode = #tpu.pipeline_mode<synchronous>, transform_indices = @transform_4, window_bounds = array<i64: 2, 14, 28>}, {pipeline_mode = #tpu.pipeline_mode<synchronous>, transform_indices = @transform_5, window_bounds = array<i64: 5, 112, 160>}, {pipeline_mode = #tpu.pipeline_mode<synchronous>, transform_indices = @transform_6, window_bounds = array<i64: 1, 160>}, {pipeline_mode = #tpu.pipeline_mode<synchronous>, transform_indices = @transform_7, window_bounds = array<i64: 2, 160, 80>}, {pipeline_mode = #tpu.pipeline_mode<synchronous>, transform_indices = @transform_8, window_bounds = array<i64: 2, 5, 10>}, {pipeline_mode = #tpu.pipeline_mode<synchronous>, transform_indices = @transform_9, window_bounds = array<i64: 5, 80, 128>}, {pipeline_mode = #tpu.pipeline_mode<synchronous>, transform_indices = @transform_10, window_bounds = array<i64: 1, 128>}, {pipeline_mode = #tpu.pipeline_mode<synchronous>, transform_indices = @transform_11, window_bounds = array<i64: 128, 128>}, {pipeline_mode = #tpu.pipeline_mode<synchronous>, transform_indices = @transform_12, window_bounds = array<i64: 1, 128>}, {pipeline_mode = #tpu.pipeline_mode<synchronous>, transform_indices = @transform_13, window_bounds = array<i64: 128, 128>}, {pipeline_mode = #tpu.pipeline_mode<synchronous>, transform_indices = @transform_14, window_bounds = array<i64: 1, 128>}, {transform_indices = @transform_15, window_bounds = array<i64: 1, 1, 128>}]} {
    %c0 = arith.constant 0 : index
    %c0_0 = arith.constant 0 : index
    %c0_1 = arith.constant 0 : index
    %0 = vector.load %arg1[%c0, %c0_0, %c0_1] : memref<1x32x96xf32, #tpu.memory_space<vmem>>, vector<1x32x96xf32>
    %1 = vector.shape_cast %0 : vector<1x32x96xf32> to vector<32x96xf32>
    %cst = arith.constant 0.000000e+00 : f32
    %2 = vector.broadcast %cst : f32 to vector<28x224xf32>
    %3 = vector.extract_strided_slice %1 {offsets = [0, 0], sizes = [28, 96], strides = [1, 1]} : vector<32x96xf32> to vector<28x96xf32>
    %4 = arith.truncf %3 : vector<28x96xf32> to vector<28x96xbf16>
    %c0_2 = arith.constant 0 : index
    %c0_3 = arith.constant 0 : index
    %c0_4 = arith.constant 0 : index
    %5 = vector.load %arg2[%c0_2, %c0_3, %c0_4] : memref<5x96x224xbf16, #tpu.memory_space<vmem>>, vector<1x96x224xbf16>
    %6 = vector.shape_cast %5 : vector<1x96x224xbf16> to vector<96x224xbf16>
    %cst_5 = arith.constant dense<0.000000e+00> : vector<28x224xf32>
    %7 = tpu.matmul %4, %6, %cst_5 {dimension_numbers = #tpu.dot_dimension_numbers<[1], [0], [0], [1], [0, 0, 1, 1], [], []>} : vector<28x96xbf16>, vector<96x224xbf16>, vector<28x224xf32> -> vector<28x224xf32>
    %8 = arith.addf %2, %7 : vector<28x224xf32>
    %9 = vector.extract_strided_slice %1 {offsets = [1, 0], sizes = [28, 96], strides = [1, 1]} : vector<32x96xf32> to vector<28x96xf32>
    %10 = arith.truncf %9 : vector<28x96xf32> to vector<28x96xbf16>
    %c1 = arith.constant 1 : index
    %c0_6 = arith.constant 0 : index
    %c0_7 = arith.constant 0 : index
    %11 = vector.load %arg2[%c1, %c0_6, %c0_7] : memref<5x96x224xbf16, #tpu.memory_space<vmem>>, vector<1x96x224xbf16>
    %12 = vector.shape_cast %11 : vector<1x96x224xbf16> to vector<96x224xbf16>
    %cst_8 = arith.constant dense<0.000000e+00> : vector<28x224xf32>
    %13 = tpu.matmul %10, %12, %cst_8 {dimension_numbers = #tpu.dot_dimension_numbers<[1], [0], [0], [1], [0, 0, 1, 1], [], []>} : vector<28x96xbf16>, vector<96x224xbf16>, vector<28x224xf32> -> vector<28x224xf32>
    %14 = arith.addf %8, %13 : vector<28x224xf32>
    %15 = vector.extract_strided_slice %1 {offsets = [2, 0], sizes = [28, 96], strides = [1, 1]} : vector<32x96xf32> to vector<28x96xf32>
    %16 = arith.truncf %15 : vector<28x96xf32> to vector<28x96xbf16>
    %c2 = arith.constant 2 : index
    %c0_9 = arith.constant 0 : index
    %c0_10 = arith.constant 0 : index
    %17 = vector.load %arg2[%c2, %c0_9, %c0_10] : memref<5x96x224xbf16, #tpu.memory_space<vmem>>, vector<1x96x224xbf16>
    %18 = vector.shape_cast %17 : vector<1x96x224xbf16> to vector<96x224xbf16>
    %cst_11 = arith.constant dense<0.000000e+00> : vector<28x224xf32>
    %19 = tpu.matmul %16, %18, %cst_11 {dimension_numbers = #tpu.dot_dimension_numbers<[1], [0], [0], [1], [0, 0, 1, 1], [], []>} : vector<28x96xbf16>, vector<96x224xbf16>, vector<28x224xf32> -> vector<28x224xf32>
    %20 = arith.addf %14, %19 : vector<28x224xf32>
    %21 = vector.extract_strided_slice %1 {offsets = [3, 0], sizes = [28, 96], strides = [1, 1]} : vector<32x96xf32> to vector<28x96xf32>
    %22 = arith.truncf %21 : vector<28x96xf32> to vector<28x96xbf16>
    %c3 = arith.constant 3 : index
    %c0_12 = arith.constant 0 : index
    %c0_13 = arith.constant 0 : index
    %23 = vector.load %arg2[%c3, %c0_12, %c0_13] : memref<5x96x224xbf16, #tpu.memory_space<vmem>>, vector<1x96x224xbf16>
    %24 = vector.shape_cast %23 : vector<1x96x224xbf16> to vector<96x224xbf16>
    %cst_14 = arith.constant dense<0.000000e+00> : vector<28x224xf32>
    %25 = tpu.matmul %22, %24, %cst_14 {dimension_numbers = #tpu.dot_dimension_numbers<[1], [0], [0], [1], [0, 0, 1, 1], [], []>} : vector<28x96xbf16>, vector<96x224xbf16>, vector<28x224xf32> -> vector<28x224xf32>
    %26 = arith.addf %20, %25 : vector<28x224xf32>
    %27 = vector.extract_strided_slice %1 {offsets = [4, 0], sizes = [28, 96], strides = [1, 1]} : vector<32x96xf32> to vector<28x96xf32>
    %28 = arith.truncf %27 : vector<28x96xf32> to vector<28x96xbf16>
    %c4 = arith.constant 4 : index
    %c0_15 = arith.constant 0 : index
    %c0_16 = arith.constant 0 : index
    %29 = vector.load %arg2[%c4, %c0_15, %c0_16] : memref<5x96x224xbf16, #tpu.memory_space<vmem>>, vector<1x96x224xbf16>
    %30 = vector.shape_cast %29 : vector<1x96x224xbf16> to vector<96x224xbf16>
    %cst_17 = arith.constant dense<0.000000e+00> : vector<28x224xf32>
    %31 = tpu.matmul %28, %30, %cst_17 {dimension_numbers = #tpu.dot_dimension_numbers<[1], [0], [0], [1], [0, 0, 1, 1], [], []>} : vector<28x96xbf16>, vector<96x224xbf16>, vector<28x224xf32> -> vector<28x224xf32>
    %32 = arith.addf %26, %31 : vector<28x224xf32>
    %c0_18 = arith.constant 0 : index
    %c0_19 = arith.constant 0 : index
    %33 = vector.load %arg3[%c0_18, %c0_19] : memref<1x224xf32, #tpu.memory_space<vmem>>, vector<1x224xf32>
    %34 = vector.broadcast %33 : vector<1x224xf32> to vector<28x224xf32>
    %35 = arith.addf %32, %34 : vector<28x224xf32>
    %cst_20 = arith.constant 0.000000e+00 : f32
    %36 = vector.broadcast %cst_20 : f32 to vector<28x224xf32>
    %37 = arith.maximumf %35, %36 : vector<28x224xf32>
    %c0_21 = arith.constant 0 : index
    %c0_22 = arith.constant 0 : index
    %c0_23 = arith.constant 0 : index
    %38 = vector.load %arg4[%c0_21, %c0_22, %c0_23] : memref<2x224x112xf32, #tpu.memory_space<vmem>>, vector<1x224x112xf32>
    %39 = vector.shape_cast %38 : vector<1x224x112xf32> to vector<224x112xf32>
    %cst_24 = arith.constant dense<0.000000e+00> : vector<28x112xf32>
    %40 = tpu.matmul %37, %39, %cst_24 {dimension_numbers = #tpu.dot_dimension_numbers<[1], [0], [0], [1], [0, 0, 1, 1], [], []>} : vector<28x224xf32>, vector<224x112xf32>, vector<28x112xf32> -> vector<28x112xf32>
    %c1_25 = arith.constant 1 : index
    %c0_26 = arith.constant 0 : index
    %c0_27 = arith.constant 0 : index
    %41 = vector.load %arg4[%c1_25, %c0_26, %c0_27] : memref<2x224x112xf32, #tpu.memory_space<vmem>>, vector<1x224x112xf32>
    %42 = vector.shape_cast %41 : vector<1x224x112xf32> to vector<224x112xf32>
    %cst_28 = arith.constant dense<0.000000e+00> : vector<28x112xf32>
    %43 = tpu.matmul %37, %42, %cst_28 {dimension_numbers = #tpu.dot_dimension_numbers<[1], [0], [0], [1], [0, 0, 1, 1], [], []>} : vector<28x224xf32>, vector<224x112xf32>, vector<28x112xf32> -> vector<28x112xf32>
    %44 = arith.maximumf %40, %43 : vector<28x112xf32>
    %c0_29 = arith.constant 0 : index
    %c0_30 = arith.constant 0 : index
    %c0_31 = arith.constant 0 : index
    %45 = vector.load %arg5[%c0_29, %c0_30, %c0_31] : memref<2x14x28xf32, #tpu.memory_space<vmem>>, vector<1x14x28xf32>
    %46 = vector.shape_cast %45 : vector<1x14x28xf32> to vector<14x28xf32>
    %cst_32 = arith.constant dense<0.000000e+00> : vector<14x112xf32>
    %47 = tpu.matmul %46, %44, %cst_32 {dimension_numbers = #tpu.dot_dimension_numbers<[1], [0], [0], [1], [0, 0, 1, 1], [], []>} : vector<14x28xf32>, vector<28x112xf32>, vector<14x112xf32> -> vector<14x112xf32>
    %c1_33 = arith.constant 1 : index
    %c0_34 = arith.constant 0 : index
    %c0_35 = arith.constant 0 : index
    %48 = vector.load %arg5[%c1_33, %c0_34, %c0_35] : memref<2x14x28xf32, #tpu.memory_space<vmem>>, vector<1x14x28xf32>
    %49 = vector.shape_cast %48 : vector<1x14x28xf32> to vector<14x28xf32>
    %cst_36 = arith.constant dense<0.000000e+00> : vector<14x112xf32>
    %50 = tpu.matmul %49, %44, %cst_36 {dimension_numbers = #tpu.dot_dimension_numbers<[1], [0], [0], [1], [0, 0, 1, 1], [], []>} : vector<14x28xf32>, vector<28x112xf32>, vector<14x112xf32> -> vector<14x112xf32>
    %51 = arith.maximumf %47, %50 : vector<14x112xf32>
    %cst_37 = arith.constant 0.000000e+00 : f32
    %52 = vector.broadcast %cst_37 : f32 to vector<10x160xf32>
    %53 = vector.extract_strided_slice %51 {offsets = [0, 0], sizes = [10, 112], strides = [1, 1]} : vector<14x112xf32> to vector<10x112xf32>
    %54 = arith.truncf %53 : vector<10x112xf32> to vector<10x112xbf16>
    %c0_38 = arith.constant 0 : index
    %c0_39 = arith.constant 0 : index
    %c0_40 = arith.constant 0 : index
    %55 = vector.load %arg6[%c0_38, %c0_39, %c0_40] : memref<5x112x160xbf16, #tpu.memory_space<vmem>>, vector<1x112x160xbf16>
    %56 = vector.shape_cast %55 : vector<1x112x160xbf16> to vector<112x160xbf16>
    %cst_41 = arith.constant dense<0.000000e+00> : vector<10x160xf32>
    %57 = tpu.matmul %54, %56, %cst_41 {dimension_numbers = #tpu.dot_dimension_numbers<[1], [0], [0], [1], [0, 0, 1, 1], [], []>} : vector<10x112xbf16>, vector<112x160xbf16>, vector<10x160xf32> -> vector<10x160xf32>
    %58 = arith.addf %52, %57 : vector<10x160xf32>
    %59 = vector.extract_strided_slice %51 {offsets = [1, 0], sizes = [10, 112], strides = [1, 1]} : vector<14x112xf32> to vector<10x112xf32>
    %60 = arith.truncf %59 : vector<10x112xf32> to vector<10x112xbf16>
    %c1_42 = arith.constant 1 : index
    %c0_43 = arith.constant 0 : index
    %c0_44 = arith.constant 0 : index
    %61 = vector.load %arg6[%c1_42, %c0_43, %c0_44] : memref<5x112x160xbf16, #tpu.memory_space<vmem>>, vector<1x112x160xbf16>
    %62 = vector.shape_cast %61 : vector<1x112x160xbf16> to vector<112x160xbf16>
    %cst_45 = arith.constant dense<0.000000e+00> : vector<10x160xf32>
    %63 = tpu.matmul %60, %62, %cst_45 {dimension_numbers = #tpu.dot_dimension_numbers<[1], [0], [0], [1], [0, 0, 1, 1], [], []>} : vector<10x112xbf16>, vector<112x160xbf16>, vector<10x160xf32> -> vector<10x160xf32>
    %64 = arith.addf %58, %63 : vector<10x160xf32>
    %65 = vector.extract_strided_slice %51 {offsets = [2, 0], sizes = [10, 112], strides = [1, 1]} : vector<14x112xf32> to vector<10x112xf32>
    %66 = arith.truncf %65 : vector<10x112xf32> to vector<10x112xbf16>
    %c2_46 = arith.constant 2 : index
    %c0_47 = arith.constant 0 : index
    %c0_48 = arith.constant 0 : index
    %67 = vector.load %arg6[%c2_46, %c0_47, %c0_48] : memref<5x112x160xbf16, #tpu.memory_space<vmem>>, vector<1x112x160xbf16>
    %68 = vector.shape_cast %67 : vector<1x112x160xbf16> to vector<112x160xbf16>
    %cst_49 = arith.constant dense<0.000000e+00> : vector<10x160xf32>
    %69 = tpu.matmul %66, %68, %cst_49 {dimension_numbers = #tpu.dot_dimension_numbers<[1], [0], [0], [1], [0, 0, 1, 1], [], []>} : vector<10x112xbf16>, vector<112x160xbf16>, vector<10x160xf32> -> vector<10x160xf32>
    %70 = arith.addf %64, %69 : vector<10x160xf32>
    %71 = vector.extract_strided_slice %51 {offsets = [3, 0], sizes = [10, 112], strides = [1, 1]} : vector<14x112xf32> to vector<10x112xf32>
    %72 = arith.truncf %71 : vector<10x112xf32> to vector<10x112xbf16>
    %c3_50 = arith.constant 3 : index
    %c0_51 = arith.constant 0 : index
    %c0_52 = arith.constant 0 : index
    %73 = vector.load %arg6[%c3_50, %c0_51, %c0_52] : memref<5x112x160xbf16, #tpu.memory_space<vmem>>, vector<1x112x160xbf16>
    %74 = vector.shape_cast %73 : vector<1x112x160xbf16> to vector<112x160xbf16>
    %cst_53 = arith.constant dense<0.000000e+00> : vector<10x160xf32>
    %75 = tpu.matmul %72, %74, %cst_53 {dimension_numbers = #tpu.dot_dimension_numbers<[1], [0], [0], [1], [0, 0, 1, 1], [], []>} : vector<10x112xbf16>, vector<112x160xbf16>, vector<10x160xf32> -> vector<10x160xf32>
    %76 = arith.addf %70, %75 : vector<10x160xf32>
    %77 = vector.extract_strided_slice %51 {offsets = [4, 0], sizes = [10, 112], strides = [1, 1]} : vector<14x112xf32> to vector<10x112xf32>
    %78 = arith.truncf %77 : vector<10x112xf32> to vector<10x112xbf16>
    %c4_54 = arith.constant 4 : index
    %c0_55 = arith.constant 0 : index
    %c0_56 = arith.constant 0 : index
    %79 = vector.load %arg6[%c4_54, %c0_55, %c0_56] : memref<5x112x160xbf16, #tpu.memory_space<vmem>>, vector<1x112x160xbf16>
    %80 = vector.shape_cast %79 : vector<1x112x160xbf16> to vector<112x160xbf16>
    %cst_57 = arith.constant dense<0.000000e+00> : vector<10x160xf32>
    %81 = tpu.matmul %78, %80, %cst_57 {dimension_numbers = #tpu.dot_dimension_numbers<[1], [0], [0], [1], [0, 0, 1, 1], [], []>} : vector<10x112xbf16>, vector<112x160xbf16>, vector<10x160xf32> -> vector<10x160xf32>
    %82 = arith.addf %76, %81 : vector<10x160xf32>
    %c0_58 = arith.constant 0 : index
    %c0_59 = arith.constant 0 : index
    %83 = vector.load %arg7[%c0_58, %c0_59] : memref<1x160xf32, #tpu.memory_space<vmem>>, vector<1x160xf32>
    %84 = vector.broadcast %83 : vector<1x160xf32> to vector<10x160xf32>
    %85 = arith.addf %82, %84 : vector<10x160xf32>
    %cst_60 = arith.constant 0.000000e+00 : f32
    %86 = vector.broadcast %cst_60 : f32 to vector<10x160xf32>
    %87 = arith.maximumf %85, %86 : vector<10x160xf32>
    %c0_61 = arith.constant 0 : index
    %c0_62 = arith.constant 0 : index
    %c0_63 = arith.constant 0 : index
    %88 = vector.load %arg8[%c0_61, %c0_62, %c0_63] : memref<2x160x80xf32, #tpu.memory_space<vmem>>, vector<1x160x80xf32>
    %89 = vector.shape_cast %88 : vector<1x160x80xf32> to vector<160x80xf32>
    %cst_64 = arith.constant dense<0.000000e+00> : vector<10x80xf32>
    %90 = tpu.matmul %87, %89, %cst_64 {dimension_numbers = #tpu.dot_dimension_numbers<[1], [0], [0], [1], [0, 0, 1, 1], [], []>} : vector<10x160xf32>, vector<160x80xf32>, vector<10x80xf32> -> vector<10x80xf32>
    %c1_65 = arith.constant 1 : index
    %c0_66 = arith.constant 0 : index
    %c0_67 = arith.constant 0 : index
    %91 = vector.load %arg8[%c1_65, %c0_66, %c0_67] : memref<2x160x80xf32, #tpu.memory_space<vmem>>, vector<1x160x80xf32>
    %92 = vector.shape_cast %91 : vector<1x160x80xf32> to vector<160x80xf32>
    %cst_68 = arith.constant dense<0.000000e+00> : vector<10x80xf32>
    %93 = tpu.matmul %87, %92, %cst_68 {dimension_numbers = #tpu.dot_dimension_numbers<[1], [0], [0], [1], [0, 0, 1, 1], [], []>} : vector<10x160xf32>, vector<160x80xf32>, vector<10x80xf32> -> vector<10x80xf32>
    %94 = arith.maximumf %90, %93 : vector<10x80xf32>
    %c0_69 = arith.constant 0 : index
    %c0_70 = arith.constant 0 : index
    %c0_71 = arith.constant 0 : index
    %95 = vector.load %arg9[%c0_69, %c0_70, %c0_71] : memref<2x5x10xf32, #tpu.memory_space<vmem>>, vector<1x5x10xf32>
    %96 = vector.shape_cast %95 : vector<1x5x10xf32> to vector<5x10xf32>
    %cst_72 = arith.constant dense<0.000000e+00> : vector<5x80xf32>
    %97 = tpu.matmul %96, %94, %cst_72 {dimension_numbers = #tpu.dot_dimension_numbers<[1], [0], [0], [1], [0, 0, 1, 1], [], []>} : vector<5x10xf32>, vector<10x80xf32>, vector<5x80xf32> -> vector<5x80xf32>
    %c1_73 = arith.constant 1 : index
    %c0_74 = arith.constant 0 : index
    %c0_75 = arith.constant 0 : index
    %98 = vector.load %arg9[%c1_73, %c0_74, %c0_75] : memref<2x5x10xf32, #tpu.memory_space<vmem>>, vector<1x5x10xf32>
    %99 = vector.shape_cast %98 : vector<1x5x10xf32> to vector<5x10xf32>
    %cst_76 = arith.constant dense<0.000000e+00> : vector<5x80xf32>
    %100 = tpu.matmul %99, %94, %cst_76 {dimension_numbers = #tpu.dot_dimension_numbers<[1], [0], [0], [1], [0, 0, 1, 1], [], []>} : vector<5x10xf32>, vector<10x80xf32>, vector<5x80xf32> -> vector<5x80xf32>
    %101 = arith.maximumf %97, %100 : vector<5x80xf32>
    %cst_77 = arith.constant 0.000000e+00 : f32
    %102 = vector.broadcast %cst_77 : f32 to vector<1x128xf32>
    %103 = vector.extract_strided_slice %101 {offsets = [0, 0], sizes = [1, 80], strides = [1, 1]} : vector<5x80xf32> to vector<1x80xf32>
    %104 = arith.truncf %103 : vector<1x80xf32> to vector<1x80xbf16>
    %c0_78 = arith.constant 0 : index
    %c0_79 = arith.constant 0 : index
    %c0_80 = arith.constant 0 : index
    %105 = vector.load %arg10[%c0_78, %c0_79, %c0_80] : memref<5x80x128xbf16, #tpu.memory_space<vmem>>, vector<1x80x128xbf16>
    %106 = vector.shape_cast %105 : vector<1x80x128xbf16> to vector<80x128xbf16>
    %cst_81 = arith.constant dense<0.000000e+00> : vector<1x128xf32>
    %107 = tpu.matmul %104, %106, %cst_81 {dimension_numbers = #tpu.dot_dimension_numbers<[1], [0], [0], [1], [0, 0, 1, 1], [], []>} : vector<1x80xbf16>, vector<80x128xbf16>, vector<1x128xf32> -> vector<1x128xf32>
    %108 = arith.addf %102, %107 : vector<1x128xf32>
    %109 = vector.extract_strided_slice %101 {offsets = [1, 0], sizes = [1, 80], strides = [1, 1]} : vector<5x80xf32> to vector<1x80xf32>
    %110 = arith.truncf %109 : vector<1x80xf32> to vector<1x80xbf16>
    %c1_82 = arith.constant 1 : index
    %c0_83 = arith.constant 0 : index
    %c0_84 = arith.constant 0 : index
    %111 = vector.load %arg10[%c1_82, %c0_83, %c0_84] : memref<5x80x128xbf16, #tpu.memory_space<vmem>>, vector<1x80x128xbf16>
    %112 = vector.shape_cast %111 : vector<1x80x128xbf16> to vector<80x128xbf16>
    %cst_85 = arith.constant dense<0.000000e+00> : vector<1x128xf32>
    %113 = tpu.matmul %110, %112, %cst_85 {dimension_numbers = #tpu.dot_dimension_numbers<[1], [0], [0], [1], [0, 0, 1, 1], [], []>} : vector<1x80xbf16>, vector<80x128xbf16>, vector<1x128xf32> -> vector<1x128xf32>
    %114 = arith.addf %108, %113 : vector<1x128xf32>
    %115 = vector.extract_strided_slice %101 {offsets = [2, 0], sizes = [1, 80], strides = [1, 1]} : vector<5x80xf32> to vector<1x80xf32>
    %116 = arith.truncf %115 : vector<1x80xf32> to vector<1x80xbf16>
    %c2_86 = arith.constant 2 : index
    %c0_87 = arith.constant 0 : index
    %c0_88 = arith.constant 0 : index
    %117 = vector.load %arg10[%c2_86, %c0_87, %c0_88] : memref<5x80x128xbf16, #tpu.memory_space<vmem>>, vector<1x80x128xbf16>
    %118 = vector.shape_cast %117 : vector<1x80x128xbf16> to vector<80x128xbf16>
    %cst_89 = arith.constant dense<0.000000e+00> : vector<1x128xf32>
    %119 = tpu.matmul %116, %118, %cst_89 {dimension_numbers = #tpu.dot_dimension_numbers<[1], [0], [0], [1], [0, 0, 1, 1], [], []>} : vector<1x80xbf16>, vector<80x128xbf16>, vector<1x128xf32> -> vector<1x128xf32>
    %120 = arith.addf %114, %119 : vector<1x128xf32>
    %121 = vector.extract_strided_slice %101 {offsets = [3, 0], sizes = [1, 80], strides = [1, 1]} : vector<5x80xf32> to vector<1x80xf32>
    %122 = arith.truncf %121 : vector<1x80xf32> to vector<1x80xbf16>
    %c3_90 = arith.constant 3 : index
    %c0_91 = arith.constant 0 : index
    %c0_92 = arith.constant 0 : index
    %123 = vector.load %arg10[%c3_90, %c0_91, %c0_92] : memref<5x80x128xbf16, #tpu.memory_space<vmem>>, vector<1x80x128xbf16>
    %124 = vector.shape_cast %123 : vector<1x80x128xbf16> to vector<80x128xbf16>
    %cst_93 = arith.constant dense<0.000000e+00> : vector<1x128xf32>
    %125 = tpu.matmul %122, %124, %cst_93 {dimension_numbers = #tpu.dot_dimension_numbers<[1], [0], [0], [1], [0, 0, 1, 1], [], []>} : vector<1x80xbf16>, vector<80x128xbf16>, vector<1x128xf32> -> vector<1x128xf32>
    %126 = arith.addf %120, %125 : vector<1x128xf32>
    %127 = vector.extract_strided_slice %101 {offsets = [4, 0], sizes = [1, 80], strides = [1, 1]} : vector<5x80xf32> to vector<1x80xf32>
    %128 = arith.truncf %127 : vector<1x80xf32> to vector<1x80xbf16>
    %c4_94 = arith.constant 4 : index
    %c0_95 = arith.constant 0 : index
    %c0_96 = arith.constant 0 : index
    %129 = vector.load %arg10[%c4_94, %c0_95, %c0_96] : memref<5x80x128xbf16, #tpu.memory_space<vmem>>, vector<1x80x128xbf16>
    %130 = vector.shape_cast %129 : vector<1x80x128xbf16> to vector<80x128xbf16>
    %cst_97 = arith.constant dense<0.000000e+00> : vector<1x128xf32>
    %131 = tpu.matmul %128, %130, %cst_97 {dimension_numbers = #tpu.dot_dimension_numbers<[1], [0], [0], [1], [0, 0, 1, 1], [], []>} : vector<1x80xbf16>, vector<80x128xbf16>, vector<1x128xf32> -> vector<1x128xf32>
    %132 = arith.addf %126, %131 : vector<1x128xf32>
    %c0_98 = arith.constant 0 : index
    %c0_99 = arith.constant 0 : index
    %133 = vector.load %arg11[%c0_98, %c0_99] : memref<1x128xf32, #tpu.memory_space<vmem>>, vector<1x128xf32>
    %134 = arith.addf %132, %133 : vector<1x128xf32>
    %cst_100 = arith.constant 0.000000e+00 : f32
    %135 = vector.broadcast %cst_100 : f32 to vector<1x128xf32>
    %136 = arith.maximumf %134, %135 : vector<1x128xf32>
    %137 = arith.truncf %136 : vector<1x128xf32> to vector<1x128xbf16>
    %c0_101 = arith.constant 0 : index
    %c0_102 = arith.constant 0 : index
    %138 = vector.load %arg12[%c0_101, %c0_102] : memref<128x128xbf16, #tpu.memory_space<vmem>>, vector<128x128xbf16>
    %cst_103 = arith.constant dense<0.000000e+00> : vector<1x128xf32>
    %139 = tpu.matmul %137, %138, %cst_103 {dimension_numbers = #tpu.dot_dimension_numbers<[1], [0], [0], [1], [0, 0, 1, 1], [], []>} : vector<1x128xbf16>, vector<128x128xbf16>, vector<1x128xf32> -> vector<1x128xf32>
    %c0_104 = arith.constant 0 : index
    %c0_105 = arith.constant 0 : index
    %140 = vector.load %arg13[%c0_104, %c0_105] : memref<1x128xf32, #tpu.memory_space<vmem>>, vector<1x128xf32>
    %141 = arith.addf %139, %140 : vector<1x128xf32>
    %cst_106 = arith.constant 0.000000e+00 : f32
    %142 = vector.broadcast %cst_106 : f32 to vector<1x128xf32>
    %143 = arith.maximumf %141, %142 : vector<1x128xf32>
    %144 = arith.truncf %143 : vector<1x128xf32> to vector<1x128xbf16>
    %c0_107 = arith.constant 0 : index
    %c0_108 = arith.constant 0 : index
    %145 = vector.load %arg14[%c0_107, %c0_108] : memref<128x128xbf16, #tpu.memory_space<vmem>>, vector<128x128xbf16>
    %cst_109 = arith.constant dense<0.000000e+00> : vector<1x128xf32>
    %146 = tpu.matmul %144, %145, %cst_109 {dimension_numbers = #tpu.dot_dimension_numbers<[1], [0], [0], [1], [0, 0, 1, 1], [], []>} : vector<1x128xbf16>, vector<128x128xbf16>, vector<1x128xf32> -> vector<1x128xf32>
    %c0_110 = arith.constant 0 : index
    %c0_111 = arith.constant 0 : index
    %147 = vector.load %arg15[%c0_110, %c0_111] : memref<1x128xf32, #tpu.memory_space<vmem>>, vector<1x128xf32>
    %148 = arith.addf %146, %147 : vector<1x128xf32>
    %c0_112 = arith.constant 0 : index
    %c0_113 = arith.constant 0 : index
    %c0_114 = arith.constant 0 : index
    %149 = vector.load %arg16[%c0_112, %c0_113, %c0_114] : memref<1x1x128xf32, #tpu.memory_space<vmem>>, vector<1x1x128xf32>
    %150 = vector.shape_cast %149 : vector<1x1x128xf32> to vector<1x128xf32>
    %151 = vector.shape_cast %148 : vector<1x128xf32> to vector<1x1x128xf32>
    tpu.vector_store %arg16[%c0_112, %c0_113, %c0_114], %151 {strides = array<i32>} : memref<1x1x128xf32, #tpu.memory_space<vmem>>, vector<1x1x128xf32>,
    return
  }
  func.func @transform_0(%arg0: i32) -> (i32, i32, i32) {
    %c0_i32 = arith.constant 0 : i32
    %c0_i32_0 = arith.constant 0 : i32
    %c0_i32_1 = arith.constant 0 : i32
    return %arg0, %c0_i32, %c0_i32_0 : i32, i32, i32
  }
  func.func @transform_1(%arg0: i32) -> (i32, i32, i32) {
    %c0_i32 = arith.constant 0 : i32
    %c0_i32_0 = arith.constant 0 : i32
    %c0_i32_1 = arith.constant 0 : i32
    %c0_i32_2 = arith.constant 0 : i32
    return %c0_i32, %c0_i32_0, %c0_i32_1 : i32, i32, i32
  }
  func.func @transform_2(%arg0: i32) -> (i32, i32) {
    %c0_i32 = arith.constant 0 : i32
    %c0_i32_0 = arith.constant 0 : i32
    %c0_i32_1 = arith.constant 0 : i32
    return %c0_i32, %c0_i32_0 : i32, i32
  }
  func.func @transform_3(%arg0: i32) -> (i32, i32, i32) {
    %c0_i32 = arith.constant 0 : i32
    %c0_i32_0 = arith.constant 0 : i32
    %c0_i32_1 = arith.constant 0 : i32
    %c0_i32_2 = arith.constant 0 : i32
    return %c0_i32, %c0_i32_0, %c0_i32_1 : i32, i32, i32
  }
  func.func @transform_4(%arg0: i32) -> (i32, i32, i32) {
    %c0_i32 = arith.constant 0 : i32
    %c0_i32_0 = arith.constant 0 : i32
    %c0_i32_1 = arith.constant 0 : i32
    %c0_i32_2 = arith.constant 0 : i32
    return %c0_i32, %c0_i32_0, %c0_i32_1 : i32, i32, i32
  }
  func.func @transform_5(%arg0: i32) -> (i32, i32, i32) {
    %c0_i32 = arith.constant 0 : i32
    %c0_i32_0 = arith.constant 0 : i32
    %c0_i32_1 = arith.constant 0 : i32
    %c0_i32_2 = arith.constant 0 : i32
    return %c0_i32, %c0_i32_0, %c0_i32_1 : i32, i32, i32
  }
  func.func @transform_6(%arg0: i32) -> (i32, i32) {
    %c0_i32 = arith.constant 0 : i32
    %c0_i32_0 = arith.constant 0 : i32
    %c0_i32_1 = arith.constant 0 : i32
    return %c0_i32, %c0_i32_0 : i32, i32
  }
  func.func @transform_7(%arg0: i32) -> (i32, i32, i32) {
    %c0_i32 = arith.constant 0 : i32
    %c0_i32_0 = arith.constant 0 : i32
    %c0_i32_1 = arith.constant 0 : i32
    %c0_i32_2 = arith.constant 0 : i32
    return %c0_i32, %c0_i32_0, %c0_i32_1 : i32, i32, i32
  }
  func.func @transform_8(%arg0: i32) -> (i32, i32, i32) {
    %c0_i32 = arith.constant 0 : i32
    %c0_i32_0 = arith.constant 0 : i32
    %c0_i32_1 = arith.constant 0 : i32
    %c0_i32_2 = arith.constant 0 : i32
    return %c0_i32, %c0_i32_0, %c0_i32_1 : i32, i32, i32
  }
  func.func @transform_9(%arg0: i32) -> (i32, i32, i32) {
    %c0_i32 = arith.constant 0 : i32
    %c0_i32_0 = arith.constant 0 : i32
    %c0_i32_1 = arith.constant 0 : i32
    %c0_i32_2 = arith.constant 0 : i32
    return %c0_i32, %c0_i32_0, %c0_i32_1 : i32, i32, i32
  }
  func.func @transform_10(%arg0: i32) -> (i32, i32) {
    %c0_i32 = arith.constant 0 : i32
    %c0_i32_0 = arith.constant 0 : i32
    %c0_i32_1 = arith.constant 0 : i32
    return %c0_i32, %c0_i32_0 : i32, i32
  }
  func.func @transform_11(%arg0: i32) -> (i32, i32) {
    %c0_i32 = arith.constant 0 : i32
    %c0_i32_0 = arith.constant 0 : i32
    %c0_i32_1 = arith.constant 0 : i32
    return %c0_i32, %c0_i32_0 : i32, i32
  }
  func.func @transform_12(%arg0: i32) -> (i32, i32) {
    %c0_i32 = arith.constant 0 : i32
    %c0_i32_0 = arith.constant 0 : i32
    %c0_i32_1 = arith.constant 0 : i32
    return %c0_i32, %c0_i32_0 : i32, i32
  }
  func.func @transform_13(%arg0: i32) -> (i32, i32) {
    %c0_i32 = arith.constant 0 : i32
    %c0_i32_0 = arith.constant 0 : i32
    %c0_i32_1 = arith.constant 0 : i32
    return %c0_i32, %c0_i32_0 : i32, i32
  }
  func.func @transform_14(%arg0: i32) -> (i32, i32) {
    %c0_i32 = arith.constant 0 : i32
    %c0_i32_0 = arith.constant 0 : i32
    %c0_i32_1 = arith.constant 0 : i32
    return %c0_i32, %c0_i32_0 : i32, i32
  }
  func.func @transform_15(%arg0: i32) -> (i32, i32, i32) {
    %c0_i32 = arith.constant 0 : i32
    %c0_i32_0 = arith.constant 0 : i32
    %c0_i32_1 = arith.constant 0 : i32
    return %arg0, %c0_i32, %c0_i32_0 : i32, i32, i32
  }
}

</mosaic_0001>

<llo_original>
// kernel: lenet_forward.1
$region0: #{lenet_forward.1}
  #allocation0 [shape = 'u32[]', space=smem, size = 0x4, offset = 0x4, fixed_abs, tag = 'smem constant byte address 0x4 - core index']
  #allocation1 [shape = 'u32[144,128]{1,0:T(1,128)}', space=vmem, size = 0x12000, scoped, tag = 'internal scratch']
  %s0 = inlined_call_operand.vmem [shape: f32[2,32,96], index: 0, kind: input, shape index: {}]
  %s1 = inlined_call_operand.vmem [shape: bf16[5,96,224], index: 1, kind: input, shape index: {}]
  %s2 = inlined_call_operand.vmem [shape: f32[1,224], index: 2, kind: input, shape index: {}]
  %s3 = inlined_call_operand.vmem [shape: f32[2,224,112], index: 3, kind: input, shape index: {}]
  %s4 = inlined_call_operand.vmem [shape: f32[2,14,28], index: 4, kind: input, shape index: {}]
  %s5 = inlined_call_operand.vmem [shape: bf16[5,112,160], index: 5, kind: input, shape index: {}]
  %s6 = inlined_call_operand.vmem [shape: f32[1,160], index: 6, kind: input, shape index: {}]
  %s7 = inlined_call_operand.vmem [shape: f32[2,160,80], index: 7, kind: input, shape index: {}]
  %s8 = inlined_call_operand.vmem [shape: f32[2,5,10], index: 8, kind: input, shape index: {}]
  %s9 = inlined_call_operand.hbm [shape: bf16[5,80,128], index: 9, kind: input, shape index: {}]
  %s10 = inlined_call_operand.vmem [shape: f32[1,128], index: 10, kind: input, shape index: {}]
  %s11 = inlined_call_operand.hbm [shape: bf16[128,128], index: 11, kind: input, shape index: {}]
  %s12 = inlined_call_operand.vmem [shape: f32[1,128], index: 12, kind: input, shape index: {}]
  %s13 = inlined_call_operand.hbm [shape: bf16[128,128], index: 13, kind: input, shape index: {}]
  %s14 = inlined_call_operand.vmem [shape: f32[1,128], index: 14, kind: input, shape index: {}]
  %s15 = inlined_call_operand.hbm [shape: f32[2,1,128], index: 15, kind: output, shape index: {}]
  %s16 = sld [smem:[#allocation0]]
  $region105: #{lenet_forward.1} parent=0
    _
  %s18 = ssub.s32 1, %s16
  %s19 = scalar_select 0, %s18, %s16
  $region1: #{lenet_forward.1} parent=0
    #allocation2 [shape = 'u8[102400]{0}', space=vmem, size = 0x19000, scoped, tag = 'input window, operand 9, single buffered']
    #allocation3 [shape = 's32[2]{0}', space=sflag, size = 0x8, scoped, tag = 'scoped memory for lenet_forward.1']
    #allocation4 [shape = 's32[2]{0}', space=sflag, size = 0x8, scoped, tag = 'scoped memory for lenet_forward.1']
    #allocation5 [shape = 'u8[32768]{0}', space=vmem, size = 0x8000, scoped, tag = 'input window, operand 11, single buffered']
    #allocation6 [shape = 's32[1]{0}', space=sflag, size = 0x4, scoped, tag = 'scoped memory for lenet_forward.1']
    #allocation7 [shape = 'u8[32768]{0}', space=vmem, size = 0x8000, scoped, tag = 'input window, operand 13, single buffered']
    #allocation8 [shape = 'u8[1024]{0}', space=vmem, size = 0x400, scoped, tag = 'output window, operand 0']
    %20 = vsyncpa [#allocation3], 0
    %21 = vsyncpa [#allocation6], 0
    %22 = vsyncpa [#allocation4], 0
    %s23 = scalar_lea.sflag [#allocation4], 1
    %24 = vsyncpa %s23, 0
    loop: start=0, step=1, limit=4
    $region2: #{lenet_forward.1} parent=1 // loop_pre_header
      _
    $region3: #{lenet_forward.1} parent=1 // loop_header
      %s26 = sphi 0, %s30
      %p27 = scmp.ge.s32.totalorder %s26, 4
      %s36 = sphi 0, %s38
      %s39 = sphi 0, %s36
      %s40 = sphi 0, %s39
      %s56 = sphi 0, %s40
      %s60 = sphi 0, %s60
      %s62 = sphi 0, %s60
      %s63 = sphi 0, %s62
      %s77 = sphi 0, %s63
      %s81 = sphi 0, %s81
      %s83 = sphi 0, %s81
      %s84 = sphi 0, %s83
      %s98 = sphi 0, %s84
      %s102 = sphi 0, %s102
      %s104 = sphi 0, %s102
      %s105 = sphi 0, %s104
      %s119 = sphi 0, %s105
      %s123 = sphi 0, %s123
      %s125 = sphi 0, %s123
      %s126 = sphi 0, %s125
      %s140 = sphi 0, %s126
      %s144 = sphi 0, %s144
      %s146 = sphi 0, %s144
      %s147 = sphi 0, %s146
      %s161 = sphi 0, %s147
      %s165 = sphi 0, %s165
      %s167 = sphi 0, %s165
      %s168 = sphi 0, %s167
      %s182 = sphi 0, %s168
      %s186 = sphi 0, %s186
      %s188 = sphi 0, %s186
      %s189 = sphi 0, %s188
      %s203 = sphi 0, %s189
      %s207 = sphi 0, %s207
      %s209 = sphi 0, %s207
      %s210 = sphi 0, %s209
      %s224 = sphi 0, %s210
      %s228 = sphi 0, %s228
      %s230 = sphi 0, %s228
      %s231 = sphi 0, %s230
      %s245 = sphi 0, %s231
      %s249 = sphi 0, %s249
      %s251 = sphi 0, %s249
      %s252 = sphi 0, %s251
      %s266 = sphi 0, %s252
      %s270 = sphi 0, %s270
      %s272 = sphi 0, %s270
      %s273 = sphi 0, %s272
      %s287 = sphi 0, %s273
      %s291 = sphi 0, %s291
      %s293 = sphi 0, %s291
      %s294 = sphi 0, %s293
      %s308 = sphi 0, %s294
      %s312 = sphi 0, %s312
      %s314 = sphi 0, %s312
      %s315 = sphi 0, %s314
      %s329 = sphi 0, %s315
      %s333 = sphi 0, %s333
      %s335 = sphi 0, %s333
      %s336 = sphi 0, %s335
      %s350 = sphi 0, %s336
      %s356 = sphi 0, %s358
      %s359 = sphi 0, %s356
      %s360 = sphi 0, %s359
      %s376 = sphi 0, %s360
    $region4: #{lenet_forward.1} parent=1 // loop_header_branch
      %29 = sbr.rel (%p27) target = $region8
    $region5: #{lenet_forward.1} parent=1 // loop_body
      %s31 = ssub.s32 %s26, 1
      %s32 = ssub.s32 %s26, 2
      %s33 = sadd.s32 %s26, 1
      %s34 = ssub.s32 %s26, %s33
      %p35 = scmp.eq.s32.totalorder %s34, 0
      %s37 = sadd.s32 %s36, 1
      %s38 = scalar_select %p35, %s36, %s37
      %p41 = pneg %p35
      %p42 = scmp.eq.s32.totalorder %s26, 1
      %p43 = por %p41, %p42
      %p44 = scmp.ne.s32.totalorder %s36, %s39
      %p45 = scmp.eq.s32.totalorder %s26, 0
      %p46 = por %p44, %p45
      %p47 = scmp.ne.s32.totalorder %s36, %s39
      %p48 = scmp.eq.s32.totalorder %s31, 1
      %p49 = por %p47, %p48
      %p50 = scmp.ne.s32.totalorder %s39, %s40
      %p51 = scmp.eq.s32.totalorder %s31, 0
      %p52 = por %p50, %p51
      %p53 = scmp.ne.s32.totalorder %s39, %s40
      %p54 = scmp.eq.s32.totalorder %s32, 1
      %p55 = por %p53, %p54
      %p57 = scmp.ne.s32.totalorder %s40, %s56
      %p58 = scmp.eq.s32.totalorder %s32, 0
      %p59 = por %p57, %p58
      %s61 = sadd.s32 %s60, 1
      %p64 = scmp.eq.s32.totalorder %s26, 1
      %p65 = scmp.ne.s32.totalorder %s60, %s62
      %p66 = scmp.eq.s32.totalorder %s26, 0
      %p67 = por %p65, %p66
      %p68 = scmp.ne.s32.totalorder %s60, %s62
      %p69 = scmp.eq.s32.totalorder %s31, 1
      %p70 = por %p68, %p69
      %p71 = scmp.ne.s32.totalorder %s62, %s63
      %p72 = scmp.eq.s32.totalorder %s31, 0
      %p73 = por %p71, %p72
      %p74 = scmp.ne.s32.totalorder %s62, %s63
      %p75 = scmp.eq.s32.totalorder %s32, 1
      %p76 = por %p74, %p75
      %p78 = scmp.ne.s32.totalorder %s63, %s77
      %p79 = scmp.eq.s32.totalorder %s32, 0
      %p80 = por %p78, %p79
      %s82 = sadd.s32 %s81, 1
      %p85 = scmp.eq.s32.totalorder %s26, 1
      %p86 = scmp.ne.s32.totalorder %s81, %s83
      %p87 = scmp.eq.s32.totalorder %s26, 0
      %p88 = por %p86, %p87
      %p89 = scmp.ne.s32.totalorder %s81, %s83
      %p90 = scmp.eq.s32.totalorder %s31, 1
      %p91 = por %p89, %p90
      %p92 = scmp.ne.s32.totalorder %s83, %s84
      %p93 = scmp.eq.s32.totalorder %s31, 0
      %p94 = por %p92, %p93
      %p95 = scmp.ne.s32.totalorder %s83, %s84
      %p96 = scmp.eq.s32.totalorder %s32, 1
      %p97 = por %p95, %p96
      %p99 = scmp.ne.s32.totalorder %s84, %s98
      %p100 = scmp.eq.s32.totalorder %s32, 0
      %p101 = por %p99, %p100
      %s103 = sadd.s32 %s102, 1
      %p106 = scmp.eq.s32.totalorder %s26, 1
      %p107 = scmp.ne.s32.totalorder %s102, %s104
      %p108 = scmp.eq.s32.totalorder %s26, 0
      %p109 = por %p107, %p108
      %p110 = scmp.ne.s32.totalorder %s102, %s104
      %p111 = scmp.eq.s32.totalorder %s31, 1
      %p112 = por %p110, %p111
      %p113 = scmp.ne.s32.totalorder %s104, %s105
      %p114 = scmp.eq.s32.totalorder %s31, 0
      %p115 = por %p113, %p114
      %p116 = scmp.ne.s32.totalorder %s104, %s105
      %p117 = scmp.eq.s32.totalorder %s32, 1
      %p118 = por %p116, %p117
      %p120 = scmp.ne.s32.totalorder %s105, %s119
      %p121 = scmp.eq.s32.totalorder %s32, 0
      %p122 = por %p120, %p121
      %s124 = sadd.s32 %s123, 1
      %p127 = scmp.eq.s32.totalorder %s26, 1
      %p128 = scmp.ne.s32.totalorder %s123, %s125
      %p129 = scmp.eq.s32.totalorder %s26, 0
      %p130 = por %p128, %p129
      %p131 = scmp.ne.s32.totalorder %s123, %s125
      %p132 = scmp.eq.s32.totalorder %s31, 1
      %p133 = por %p131, %p132
      %p134 = scmp.ne.s32.totalorder %s125, %s126
      %p135 = scmp.eq.s32.totalorder %s31, 0
      %p136 = por %p134, %p135
      %p137 = scmp.ne.s32.totalorder %s125, %s126
      %p138 = scmp.eq.s32.totalorder %s32, 1
      %p139 = por %p137, %p138
      %p141 = scmp.ne.s32.totalorder %s126, %s140
      %p142 = scmp.eq.s32.totalorder %s32, 0
      %p143 = por %p141, %p142
      %s145 = sadd.s32 %s144, 1
      %p148 = scmp.eq.s32.totalorder %s26, 1
      %p149 = scmp.ne.s32.totalorder %s144, %s146
      %p150 = scmp.eq.s32.totalorder %s26, 0
      %p151 = por %p149, %p150
      %p152 = scmp.ne.s32.totalorder %s144, %s146
      %p153 = scmp.eq.s32.totalorder %s31, 1
      %p154 = por %p152, %p153
      %p155 = scmp.ne.s32.totalorder %s146, %s147
      %p156 = scmp.eq.s32.totalorder %s31, 0
      %p157 = por %p155, %p156
      %p158 = scmp.ne.s32.totalorder %s146, %s147
      %p159 = scmp.eq.s32.totalorder %s32, 1
      %p160 = por %p158, %p159
      %p162 = scmp.ne.s32.totalorder %s147, %s161
      %p163 = scmp.eq.s32.totalorder %s32, 0
      %p164 = por %p162, %p163
      %s166 = sadd.s32 %s165, 1
      %p169 = scmp.eq.s32.totalorder %s26, 1
      %p170 = scmp.ne.s32.totalorder %s165, %s167
      %p171 = scmp.eq.s32.totalorder %s26, 0
      %p172 = por %p170, %p171
      %p173 = scmp.ne.s32.totalorder %s165, %s167
      %p174 = scmp.eq.s32.totalorder %s31, 1
      %p175 = por %p173, %p174
      %p176 = scmp.ne.s32.totalorder %s167, %s168
      %p177 = scmp.eq.s32.totalorder %s31, 0
      %p178 = por %p176, %p177
      %p179 = scmp.ne.s32.totalorder %s167, %s168
      %p180 = scmp.eq.s32.totalorder %s32, 1
      %p181 = por %p179, %p180
      %p183 = scmp.ne.s32.totalorder %s168, %s182
      %p184 = scmp.eq.s32.totalorder %s32, 0
      %p185 = por %p183, %p184
      %s187 = sadd.s32 %s186, 1
      %p190 = scmp.eq.s32.totalorder %s26, 1
      %p191 = scmp.ne.s32.totalorder %s186, %s188
      %p192 = scmp.eq.s32.totalorder %s26, 0
      %p193 = por %p191, %p192
      %p194 = scmp.ne.s32.totalorder %s186, %s188
      %p195 = scmp.eq.s32.totalorder %s31, 1
      %p196 = por %p194, %p195
      %p197 = scmp.ne.s32.totalorder %s188, %s189
      %p198 = scmp.eq.s32.totalorder %s31, 0
      %p199 = por %p197, %p198
      %p200 = scmp.ne.s32.totalorder %s188, %s189
      %p201 = scmp.eq.s32.totalorder %s32, 1
      %p202 = por %p200, %p201
      %p204 = scmp.ne.s32.totalorder %s189, %s203
      %p205 = scmp.eq.s32.totalorder %s32, 0
      %p206 = por %p204, %p205
      %s208 = sadd.s32 %s207, 1
      %p211 = scmp.eq.s32.totalorder %s26, 1
      %p212 = scmp.ne.s32.totalorder %s207, %s209
      %p213 = scmp.eq.s32.totalorder %s26, 0
      %p214 = por %p212, %p213
      %p215 = scmp.ne.s32.totalorder %s207, %s209
      %p216 = scmp.eq.s32.totalorder %s31, 1
      %p217 = por %p215, %p216
      %p218 = scmp.ne.s32.totalorder %s209, %s210
      %p219 = scmp.eq.s32.totalorder %s31, 0
      %p220 = por %p218, %p219
      %p221 = scmp.ne.s32.totalorder %s209, %s210
      %p222 = scmp.eq.s32.totalorder %s32, 1
      %p223 = por %p221, %p222
      %p225 = scmp.ne.s32.totalorder %s210, %s224
      %p226 = scmp.eq.s32.totalorder %s32, 0
      %p227 = por %p225, %p226
      %s229 = sadd.s32 %s228, 1
      %p232 = scmp.eq.s32.totalorder %s26, 1
      %p233 = scmp.ne.s32.totalorder %s228, %s230
      %p234 = scmp.eq.s32.totalorder %s26, 0
      %p235 = por %p233, %p234
      %p236 = scmp.ne.s32.totalorder %s228, %s230
      %p237 = scmp.eq.s32.totalorder %s31, 1
      %p238 = por %p236, %p237
      %p239 = scmp.ne.s32.totalorder %s230, %s231
      %p240 = scmp.eq.s32.totalorder %s31, 0
      %p241 = por %p239, %p240
      %p242 = scmp.ne.s32.totalorder %s230, %s231
      %p243 = scmp.eq.s32.totalorder %s32, 1
      %p244 = por %p242, %p243
      %p246 = scmp.ne.s32.totalorder %s231, %s245
      %p247 = scmp.eq.s32.totalorder %s32, 0
      %p248 = por %p246, %p247
      %s250 = sadd.s32 %s249, 1
      %p253 = scmp.eq.s32.totalorder %s26, 1
      %p254 = scmp.ne.s32.totalorder %s249, %s251
      %p255 = scmp.eq.s32.totalorder %s26, 0
      %p256 = por %p254, %p255
      %p257 = scmp.ne.s32.totalorder %s249, %s251
      %p258 = scmp.eq.s32.totalorder %s31, 1
      %p259 = por %p257, %p258
      %p260 = scmp.ne.s32.totalorder %s251, %s252
      %p261 = scmp.eq.s32.totalorder %s31, 0
      %p262 = por %p260, %p261
      %p263 = scmp.ne.s32.totalorder %s251, %s252
      %p264 = scmp.eq.s32.totalorder %s32, 1
      %p265 = por %p263, %p264
      %p267 = scmp.ne.s32.totalorder %s252, %s266
      %p268 = scmp.eq.s32.totalorder %s32, 0
      %p269 = por %p267, %p268
      %s271 = sadd.s32 %s270, 1
      %p274 = scmp.eq.s32.totalorder %s26, 1
      %p275 = scmp.ne.s32.totalorder %s270, %s272
      %p276 = scmp.eq.s32.totalorder %s26, 0
      %p277 = por %p275, %p276
      %p278 = scmp.ne.s32.totalorder %s270, %s272
      %p279 = scmp.eq.s32.totalorder %s31, 1
      %p280 = por %p278, %p279
      %p281 = scmp.ne.s32.totalorder %s272, %s273
      %p282 = scmp.eq.s32.totalorder %s31, 0
      %p283 = por %p281, %p282
      %p284 = scmp.ne.s32.totalorder %s272, %s273
      %p285 = scmp.eq.s32.totalorder %s32, 1
      %p286 = por %p284, %p285
      %p288 = scmp.ne.s32.totalorder %s273, %s287
      %p289 = scmp.eq.s32.totalorder %s32, 0
      %p290 = por %p288, %p289
      %s292 = sadd.s32 %s291, 1
      %p295 = scmp.eq.s32.totalorder %s26, 1
      %p296 = scmp.ne.s32.totalorder %s291, %s293
      %p297 = scmp.eq.s32.totalorder %s26, 0
      %p298 = por %p296, %p297
      %p299 = scmp.ne.s32.totalorder %s291, %s293
      %p300 = scmp.eq.s32.totalorder %s31, 1
      %p301 = por %p299, %p300
      %p302 = scmp.ne.s32.totalorder %s293, %s294
      %p303 = scmp.eq.s32.totalorder %s31, 0
      %p304 = por %p302, %p303
      %p305 = scmp.ne.s32.totalorder %s293, %s294
      %p306 = scmp.eq.s32.totalorder %s32, 1
      %p307 = por %p305, %p306
      %p309 = scmp.ne.s32.totalorder %s294, %s308
      %p310 = scmp.eq.s32.totalorder %s32, 0
      %p311 = por %p309, %p310
      %s313 = sadd.s32 %s312, 1
      %p316 = scmp.eq.s32.totalorder %s26, 1
      %p317 = scmp.ne.s32.totalorder %s312, %s314
      %p318 = scmp.eq.s32.totalorder %s26, 0
      %p319 = por %p317, %p318
      %p320 = scmp.ne.s32.totalorder %s312, %s314
      %p321 = scmp.eq.s32.totalorder %s31, 1
      %p322 = por %p320, %p321
      %p323 = scmp.ne.s32.totalorder %s314, %s315
      %p324 = scmp.eq.s32.totalorder %s31, 0
      %p325 = por %p323, %p324
      %p326 = scmp.ne.s32.totalorder %s314, %s315
      %p327 = scmp.eq.s32.totalorder %s32, 1
      %p328 = por %p326, %p327
      %p330 = scmp.ne.s32.totalorder %s315, %s329
      %p331 = scmp.eq.s32.totalorder %s32, 0
      %p332 = por %p330, %p331
      %s334 = sadd.s32 %s333, 1
      %p337 = scmp.eq.s32.totalorder %s26, 1
      %p338 = scmp.ne.s32.totalorder %s333, %s335
      %p339 = scmp.eq.s32.totalorder %s26, 0
      %p340 = por %p338, %p339
      %p341 = scmp.ne.s32.totalorder %s333, %s335
      %p342 = scmp.eq.s32.totalorder %s31, 1
      %p343 = por %p341, %p342
      %p344 = scmp.ne.s32.totalorder %s335, %s336
      %p345 = scmp.eq.s32.totalorder %s31, 0
      %p346 = por %p344, %p345
      %p347 = scmp.ne.s32.totalorder %s335, %s336
      %p348 = scmp.eq.s32.totalorder %s32, 1
      %p349 = por %p347, %p348
      %p351 = scmp.ne.s32.totalorder %s336, %s350
      %p352 = scmp.eq.s32.totalorder %s32, 0
      %p353 = por %p351, %p352
      %s354 = ssub.s32 %s26, %s33
      %p355 = scmp.eq.s32.totalorder %s354, 0
      %s357 = sadd.s32 %s356, 1
      %s358 = scalar_select %p355, %s356, %s357
      %p361 = pneg %p355
      %p362 = scmp.eq.s32.totalorder %s26, 1
      %p363 = por %p361, %p362
      %p364 = scmp.ne.s32.totalorder %s356, %s359
      %p365 = scmp.eq.s32.totalorder %s26, 0
      %p366 = por %p364, %p365
      %p367 = scmp.ne.s32.totalorder %s356, %s359
      %p368 = scmp.eq.s32.totalorder %s31, 1
      %p369 = por %p367, %p368
      %p370 = scmp.ne.s32.totalorder %s359, %s360
      %p371 = scmp.eq.s32.totalorder %s31, 0
      %p372 = por %p370, %p371
      %p373 = scmp.ne.s32.totalorder %s359, %s360
      %p374 = scmp.eq.s32.totalorder %s32, 1
      %p375 = por %p373, %p374
      %p377 = scmp.ne.s32.totalorder %s360, %s376
      %p378 = scmp.eq.s32.totalorder %s32, 0
      %p379 = por %p377, %p378
      %p380 = scmp.le.s32.totalorder 1, %s26
      %p381 = scmp.lt.s32.totalorder %s26, 3
      %p382 = pnand %p380, %p381
      %p383 = pneg %p382
      // Predicated region
      $region9: #{lenet_forward.1} parent=5 // pred_check
        _
      $region10: #{lenet_forward.1} parent=5 // pred_check_branch
        %385 = sbr.rel (%p382) target = $region12
      $region11: #{lenet_forward.1} parent=5 // pred_region
        %s386 = ssub.s32 %s26, 1
        // Predicated region
        $region13: #{lenet_forward.1} parent=11 // pred_check
          %p387 = pneg %p73
        $region14: #{lenet_forward.1} parent=11 // pred_check_branch
          %389 = sbr.rel (%p387) target = $region16
        $region15: #{lenet_forward.1} parent=11 // pred_region
          _
        $region16: #{lenet_forward.1} parent=11 // pred_fallthru
          _
        // Predicated region
        $region17: #{lenet_forward.1} parent=11 // pred_check
          %p390 = pneg %p94
        $region18: #{lenet_forward.1} parent=11 // pred_check_branch
          %392 = sbr.rel (%p390) target = $region20
        $region19: #{lenet_forward.1} parent=11 // pred_region
          _
        $region20: #{lenet_forward.1} parent=11 // pred_fallthru
          _
        // Predicated region
        $region21: #{lenet_forward.1} parent=11 // pred_check
          %p393 = pneg %p115
        $region22: #{lenet_forward.1} parent=11 // pred_check_branch
          %395 = sbr.rel (%p393) target = $region24
        $region23: #{lenet_forward.1} parent=11 // pred_region
          _
        $region24: #{lenet_forward.1} parent=11 // pred_fallthru
          _
        // Predicated region
        $region25: #{lenet_forward.1} parent=11 // pred_check
          %p396 = pneg %p136
        $region26: #{lenet_forward.1} parent=11 // pred_check_branch
          %398 = sbr.rel (%p396) target = $region28
        $region27: #{lenet_forward.1} parent=11 // pred_region
          _
        $region28: #{lenet_forward.1} parent=11 // pred_fallthru
          _
        // Predicated region
        $region29: #{lenet_forward.1} parent=11 // pred_check
          %p399 = pneg %p157
        $region30: #{lenet_forward.1} parent=11 // pred_check_branch
          %401 = sbr.rel (%p399) target = $region32
        $region31: #{lenet_forward.1} parent=11 // pred_region
          _
        $region32: #{lenet_forward.1} parent=11 // pred_fallthru
          _
        // Predicated region
        $region33: #{lenet_forward.1} parent=11 // pred_check
          %p402 = pneg %p178
        $region34: #{lenet_forward.1} parent=11 // pred_check_branch
          %404 = sbr.rel (%p402) target = $region36
        $region35: #{lenet_forward.1} parent=11 // pred_region
          _
        $region36: #{lenet_forward.1} parent=11 // pred_fallthru
          _
        // Predicated region
        $region37: #{lenet_forward.1} parent=11 // pred_check
          %p405 = pneg %p199
        $region38: #{lenet_forward.1} parent=11 // pred_check_branch
          %407 = sbr.rel (%p405) target = $region40
        $region39: #{lenet_forward.1} parent=11 // pred_region
          _
        $region40: #{lenet_forward.1} parent=11 // pred_fallthru
          _
        // Predicated region
        $region41: #{lenet_forward.1} parent=11 // pred_check
          %p408 = pneg %p220
        $region42: #{lenet_forward.1} parent=11 // pred_check_branch
          %410 = sbr.rel (%p408) target = $region44
        $region43: #{lenet_forward.1} parent=11 // pred_region
          _
        $region44: #{lenet_forward.1} parent=11 // pred_fallthru
          _
        // Predicated region
        $region45: #{lenet_forward.1} parent=11 // pred_check
          %p411 = pneg %p241
        $region46: #{lenet_forward.1} parent=11 // pred_check_branch
          %413 = sbr.rel (%p411) target = $region48
        $region47: #{lenet_forward.1} parent=11 // pred_region
          %s415 = ssub.s32 3200, 3200
          %416 = vsyncadd [#allocation3], %s415
          %s417 = sshll.u32 [#allocation2], 4
          %s418 = int_to_ptr.vmem [resolvable:$true] %s417
          %423 = dma.hbm_to_vmem [thread:$0]  %s9, 3200, %s418, [#allocation3], 64, 64, 4
        $region48: #{lenet_forward.1} parent=11 // pred_fallthru
          _
        // Predicated region
        $region49: #{lenet_forward.1} parent=11 // pred_check
          %p424 = pneg %p262
        $region50: #{lenet_forward.1} parent=11 // pred_check_branch
          %426 = sbr.rel (%p424) target = $region52
        $region51: #{lenet_forward.1} parent=11 // pred_region
          _
        $region52: #{lenet_forward.1} parent=11 // pred_fallthru
          _
        // Predicated region
        $region53: #{lenet_forward.1} parent=11 // pred_check
          %p427 = pneg %p283
        $region54: #{lenet_forward.1} parent=11 // pred_check_branch
          %429 = sbr.rel (%p427) target = $region56
        $region55: #{lenet_forward.1} parent=11 // pred_region
          %s431 = ssub.s32 1024, 1024
          %432 = vsyncadd [#allocation6], %s431
          %s433 = sshll.u32 [#allocation5], 4
          %s434 = int_to_ptr.vmem [resolvable:$true] %s433
          %439 = dma.hbm_to_vmem [thread:$0]  %s11, 1024, %s434, [#allocation6], 64, 64, 4
        $region56: #{lenet_forward.1} parent=11 // pred_fallthru
          _
        // Predicated region
        $region57: #{lenet_forward.1} parent=11 // pred_check
          %p440 = pneg %p304
        $region58: #{lenet_forward.1} parent=11 // pred_check_branch
          %442 = sbr.rel (%p440) target = $region60
        $region59: #{lenet_forward.1} parent=11 // pred_region
          _
        $region60: #{lenet_forward.1} parent=11 // pred_fallthru
          _
        // Predicated region
        $region61: #{lenet_forward.1} parent=11 // pred_check
          %p443 = pneg %p325
        $region62: #{lenet_forward.1} parent=11 // pred_check_branch
          %445 = sbr.rel (%p443) target = $region64
        $region63: #{lenet_forward.1} parent=11 // pred_region
          %s447 = ssub.s32 1024, 1024
          %448 = vsyncadd [#allocation6], %s447
          %s449 = sshll.u32 [#allocation7], 4
          %s450 = int_to_ptr.vmem [resolvable:$true] %s449
          %455 = dma.hbm_to_vmem [thread:$0]  %s13, 1024, %s450, [#allocation6], 64, 64, 4
        $region64: #{lenet_forward.1} parent=11 // pred_fallthru
          _
        // Predicated region
        $region65: #{lenet_forward.1} parent=11 // pred_check
          %p456 = pneg %p346
        $region66: #{lenet_forward.1} parent=11 // pred_check_branch
          %458 = sbr.rel (%p456) target = $region68
        $region67: #{lenet_forward.1} parent=11 // pred_region
          _
        $region68: #{lenet_forward.1} parent=11 // pred_fallthru
          _
      $region12: #{lenet_forward.1} parent=5 // pred_fallthru
        _
      %p459 = scmp.lt.s32.totalorder %s26, 2
      // Predicated region
      $region69: #{lenet_forward.1} parent=5 // pred_check
        %p460 = pneg %p459
      $region70: #{lenet_forward.1} parent=5 // pred_check_branch
        %462 = sbr.rel (%p460) target = $region72
      $region71: #{lenet_forward.1} parent=5 // pred_region
        // Predicated region
        $region73: #{lenet_forward.1} parent=71 // pred_check
          %p463 = pneg %p46
        $region74: #{lenet_forward.1} parent=71 // pred_check_branch
          %465 = sbr.rel (%p463) target = $region76
        $region75: #{lenet_forward.1} parent=71 // pred_region
          %p466 = scmp.lt.s32.totalorder %s26, 1
          %s467 = scalar_select %p466, %s26, 1
          %s468 = smul.addr %s467, 4
          %s469 = smul.addr %s468, 8
          %s470 = scalar_lea.vmem %s0, %s469
        $region76: #{lenet_forward.1} parent=71 // pred_fallthru
          _
      $region72: #{lenet_forward.1} parent=5 // pred_fallthru
        _
      %p471 = scmp.le.s32.totalorder 1, %s26
      %p472 = scmp.lt.s32.totalorder %s26, 3
      %p473 = pnand %p471, %p472
      %p474 = pneg %p473
      // Predicated region
      $region77: #{lenet_forward.1} parent=5 // pred_check
        _
      $region78: #{lenet_forward.1} parent=5 // pred_check_branch
        %476 = sbr.rel (%p473) target = $region80
      $region79: #{lenet_forward.1} parent=5 // pred_region
        %s477 = ssub.s32 %s26, 1
        // Predicated region
        $region81: #{lenet_forward.1} parent=79 // pred_check
          %p478 = pneg %p241
        $region82: #{lenet_forward.1} parent=79 // pred_check_branch
          %480 = sbr.rel (%p478) target = $region84
        $region83: #{lenet_forward.1} parent=79 // pred_region
          %481 = dma.done [#allocation3], 3200
        $region84: #{lenet_forward.1} parent=79 // pred_fallthru
          _
        // Predicated region
        $region85: #{lenet_forward.1} parent=79 // pred_check
          %p482 = pneg %p283
        $region86: #{lenet_forward.1} parent=79 // pred_check_branch
          %484 = sbr.rel (%p482) target = $region88
        $region87: #{lenet_forward.1} parent=79 // pred_region
          %485 = dma.done [#allocation6], 1024
        $region88: #{lenet_forward.1} parent=79 // pred_fallthru
          _
        // Predicated region
        $region89: #{lenet_forward.1} parent=79 // pred_check
          %p486 = pneg %p325
        $region90: #{lenet_forward.1} parent=79 // pred_check_branch
          %488 = sbr.rel (%p486) target = $region92
        $region91: #{lenet_forward.1} parent=79 // pred_region
          %489 = dma.done [#allocation6], 1024
        $region92: #{lenet_forward.1} parent=79 // pred_fallthru
          _
        %p490 = scmp.lt.s32.totalorder %s31, 1
        %s491 = scalar_select %p490, %s31, 1
        %s492 = smul.addr %s491, 4
        %s493 = smul.addr %s492, 8
        %s494 = scalar_lea.vmem %s0, %s493
        %p495 = pneg %p52
        %p496 = pneg %p49
        %p497 = pneg %p73
        %p498 = pneg %p70
        %p499 = pneg %p94
        %p500 = pneg %p91
        %p501 = pneg %p115
        %p502 = pneg %p112
        %p503 = pneg %p136
        %p504 = pneg %p133
        %p505 = pneg %p157
        %p506 = pneg %p154
        %p507 = pneg %p178
        %p508 = pneg %p175
        %p509 = pneg %p199
        %p510 = pneg %p196
        %p511 = pneg %p220
        %p512 = pneg %p217
        %p513 = pneg %p241
        %p514 = pneg %p238
        %p515 = pneg %p262
        %p516 = pneg %p259
        %p517 = pneg %p283
        %p518 = pneg %p280
        %p519 = pneg %p304
        %p520 = pneg %p301
        %p521 = pneg %p325
        %p522 = pneg %p322
        %p523 = pneg %p346
        %p524 = pneg %p343
        %p525 = pneg %p372
        %p526 = pneg %p369
        %s527 = sand.u32 %s359, 1
        %s528 = scalar_lea.sflag [#allocation4], %s527
        %s529 = sand.u32 %s359, 1
        %s530 = scalar_lea.vmem [#allocation8], %s529
        %p531 = scmp.lt.s32.totalorder %s31, 1
        %s532 = scalar_select %p531, %s31, 1
        %s533 = smul.addr %s532, 4
        %s534 = smul.addr %s533, 8
        %s535 = scalar_lea.vmem %s0, %s534
        %v537 = vld [vmem:[%s535] sm:$0xff]
        %v538 = vld [vmem:[%s535 + $0x8] sm:$0xff]
        %v539 = vld [vmem:[%s535 + $0x10] sm:$0xff]
        %v540 = vld [vmem:[%s535 + $0x18] sm:$0xff]
        %v541 = vpack.c.bf16 %v538, %v537
        %v542 = vpack.c.bf16 %v540, %v539
        %v543 = vld [vmem:[%s1] sm:$0xff]
        %v544 = vld [vmem:[%s1 + $0x8] sm:$0xff]
        %v545 = vld [vmem:[%s1 + $0x10] sm:$0xff]
        %v546 = vld [vmem:[%s1 + $0x18] sm:$0xff]
        %v547 = vld [vmem:[%s1 + $0x20] sm:$0xff]
        %v548 = vld [vmem:[%s1 + $0x28] sm:$0xff]
        %v549 = vld [vmem:[%s1 + $0x30] sm:$0xff]
        %v550 = vld [vmem:[%s1 + $0x38] sm:$0xff]
        %v551 = vld [vmem:[%s1 + $0x40] sm:$0xff]
        %v552 = vld [vmem:[%s1 + $0x48] sm:$0xff]
        %v553 = vld [vmem:[%s1 + $0x50] sm:$0xff]
        %v554 = vld [vmem:[%s1 + $0x58] sm:$0xff]
        %s555 = scalar_lea.vmem %s1, 96
        %v556 = vld [vmem:[%s555] sm:$0xff]
        %v557 = vld [vmem:[%s555 + $0x8] sm:$0xff]
        %v558 = vld [vmem:[%s555 + $0x10] sm:$0xff]
        %v559 = vld [vmem:[%s555 + $0x18] sm:$0xff]
        %v560 = vld [vmem:[%s555 + $0x20] sm:$0xff]
        %v561 = vld [vmem:[%s555 + $0x28] sm:$0xff]
        %v562 = vld [vmem:[%s555 + $0x30] sm:$0xff]
        %v563 = vld [vmem:[%s555 + $0x38] sm:$0xff]
        %v564 = vld [vmem:[%s555 + $0x40] sm:$0xff]
        %v565 = vld [vmem:[%s555 + $0x48] sm:$0xff]
        %v566 = vld [vmem:[%s555 + $0x50] sm:$0xff]
        %v567 = vld [vmem:[%s555 + $0x58] sm:$0xff]
        %vm568 = vsmask.f32 7424
        %v570 = vshrl.u32 %v541, 16
        %v572 = vshll.u32 %v541, 16
        %v574 = vrot.slane %v572, 1
        %v575 = vor.u32 %v570, %v574
        %v577 = vshll.u32 %v542, 16
        %v579 = vrot.slane %v577, 1
        %v580 = vsel %vm568, %v575, %v579
        %v581 = vshrl.u32 %v542, 16
        %v583 = vor.u32 %v581, %v579
        %v596 = vunpack.c.l.b16 %v556
        %v597 = vunpack.c.h.b16 %v556
        %v598 = vunpack.c.l.b16 %v557
        %v599 = vunpack.c.h.b16 %v557
        %v600 = vunpack.c.l.b16 %v558
        %v601 = vunpack.c.h.b16 %v558
        %v602 = vunpack.c.l.b16 %v559
        %v603 = vunpack.c.h.b16 %v559
        %v604 = vunpack.c.l.b16 %v560
        %v605 = vunpack.c.h.b16 %v560
        %v606 = vunpack.c.l.b16 %v561
        %v607 = vunpack.c.h.b16 %v561
        %v608 = vunpack.c.l.b16 %v562
        %v609 = vunpack.c.h.b16 %v562
        %v610 = vunpack.c.l.b16 %v563
        %v611 = vunpack.c.h.b16 %v563
        %v612 = vunpack.c.l.b16 %v564
        %v613 = vunpack.c.h.b16 %v564
        %v614 = vunpack.c.l.b16 %v565
        %v615 = vunpack.c.h.b16 %v565
        %v616 = vunpack.c.l.b16 %v566
        %v617 = vunpack.c.h.b16 %v566
        %v618 = vunpack.c.l.b16 %v567
        %v619 = vunpack.c.h.b16 %v567
        %v620 = vpack.c.b16 %v598, %v596
        %v621 = vpack.c.b16 %v599, %v597
        %v622 = vpack.c.b16 %v602, %v600
        %v623 = vpack.c.b16 %v603, %v601
        %v624 = vpack.c.b16 %v606, %v604
        %v625 = vpack.c.b16 %v607, %v605
        %v626 = vpack.c.b16 %v610, %v608
        %v627 = vpack.c.b16 %v611, %v609
        %v628 = vpack.c.b16 %v614, %v612
        %v629 = vpack.c.b16 %v615, %v613
        %v630 = vpack.c.b16 %v618, %v616
        %v631 = vpack.c.b16 %v619, %v617
        %vm644 = vcmask 785408
        %v646 = vsel %vm644, %v580, 0
        %v649 = vsel %vm644, %v583, 0
        %651 = vmatprep.subr.bf16.mxu0 0
        %652 = vmatpush1.bf16.msra.mxu0 0
        %653 = vmatprep.subr.bf16.mxu0 0
        %654 = vmatpush1.bf16.msra.mxu0 0
        %655 = vmatprep.subr.bf16.mxu0 %v631
        %656 = vmatpush1.bf16.msra.mxu0 %v630
        %657 = vmatprep.subr.bf16.mxu0 %v629
        %658 = vmatpush1.bf16.msra.mxu0 %v628
        %659 = vmatprep.subr.bf16.mxu0 %v627
        %660 = vmatpush1.bf16.msra.mxu0 %v626
        %661 = vmatprep.subr.bf16.mxu0 %v625
        %662 = vmatpush1.bf16.msra.mxu0 %v624
        %663 = vmatprep.subr.bf16.mxu0 %v623
        %664 = vmatpush1.bf16.msra.mxu0 %v622
        %665 = vmatprep.subr.bf16.mxu0 %v621
        %666 = vmatpush1.bf16.msra.mxu0 %v620
        %667 = vmatprep.subr.bf16.mxu0 0
        %668 = vmatpush2.bf16.msra.mxu0 0
        %669 = vmatprep.subr.bf16.mxu0 0
        %670 = vmatpush2.bf16.msra.mxu0 0
        %671 = vmatprep.subr.bf16.mxu0 0
        %672 = vmatpush2.bf16.msra.mxu0 0
        %673 = vmatprep.subr.bf16.mxu0 0
        %674 = vmatpush2.bf16.msra.mxu0 0
        %675 = vmatprep.subr.bf16.mxu0 0
        %676 = vmatpush2.bf16.msra.mxu0 0
        %677 = vmatprep.subr.bf16.mxu0 0
        %678 = vmatpush2.bf16.msra.mxu0 0
        %679 = vmatprep.subr.bf16.mxu0 0
        %680 = vmatpush2.bf16.msra.mxu0 0
        %681 = vmatprep.subr.bf16.mxu0 0
        %682 = vmatpush2.bf16.msra.mxu0 0
        %683 = vmatprep.mubr.bf16.mxu0 0
        %684 = vmatmul.mubr.bf16.gmra.mxu0 %v646
        %v685 = vpop.f32.mrf.mxu0
        %v686 = vadd.f32 0.0, %v685
        %v687 = vpop.f32.mrf.mxu0
        %v688 = vadd.f32 0.0, %v687
        %v689 = vpop.f32.mrf.mxu0
        %v690 = vadd.f32 0.0, %v689
        %v691 = vpop.f32.mrf.mxu0
        %v692 = vadd.f32 0.0, %v691
        %693 = vmatprep.mubr.bf16.mxu0 0
        %694 = vmatmul.mubr.bf16.gmra.mxu0 %v649
        %v695 = vpop.f32.mrf.mxu0
        %v696 = vadd.f32 0.0, %v695
        %v697 = vpop.f32.mrf.mxu0
        %v698 = vadd.f32 0.0, %v697
        %v699 = vpop.f32.mrf.mxu0
        %v700 = vadd.f32 0.0, %v699
        %v701 = vpop.f32.mrf.mxu0
        %v702 = vadd.f32 0.0, %v701
        %703 = vdwg.mxu0
        %v716 = vunpack.c.l.b16 %v543
        %v717 = vunpack.c.h.b16 %v543
        %v718 = vunpack.c.l.b16 %v544
        %v719 = vunpack.c.h.b16 %v544
        %v720 = vunpack.c.l.b16 %v545
        %v721 = vunpack.c.h.b16 %v545
        %v722 = vunpack.c.l.b16 %v546
        %v723 = vunpack.c.h.b16 %v546
        %v724 = vunpack.c.l.b16 %v547
        %v725 = vunpack.c.h.b16 %v547
        %v726 = vunpack.c.l.b16 %v548
        %v727 = vunpack.c.h.b16 %v548
        %v728 = vunpack.c.l.b16 %v549
        %v729 = vunpack.c.h.b16 %v549
        %v730 = vunpack.c.l.b16 %v550
        %v731 = vunpack.c.h.b16 %v550
        %v732 = vunpack.c.l.b16 %v551
        %v733 = vunpack.c.h.b16 %v551
        %v734 = vunpack.c.l.b16 %v552
        %v735 = vunpack.c.h.b16 %v552
        %v736 = vunpack.c.l.b16 %v553
        %v737 = vunpack.c.h.b16 %v553
        %v738 = vunpack.c.l.b16 %v554
        %v739 = vunpack.c.h.b16 %v554
        %v740 = vpack.c.b16 %v718, %v716
        %v741 = vpack.c.b16 %v719, %v717
        %v742 = vpack.c.b16 %v722, %v720
        %v743 = vpack.c.b16 %v723, %v721
        %v744 = vpack.c.b16 %v726, %v724
        %v745 = vpack.c.b16 %v727, %v725
        %v746 = vpack.c.b16 %v730, %v728
        %v747 = vpack.c.b16 %v731, %v729
        %v748 = vpack.c.b16 %v734, %v732
        %v749 = vpack.c.b16 %v735, %v733
        %v750 = vpack.c.b16 %v738, %v736
        %v751 = vpack.c.b16 %v739, %v737
        %v764 = vsel %vm644, %v541, 0
        %v766 = vsel %vm644, %v542, 0
        %768 = vmatprep.subr.bf16.mxu0 0
        %769 = vmatpush1.bf16.msra.mxu0 0
        %770 = vmatprep.subr.bf16.mxu0 0
        %771 = vmatpush1.bf16.msra.mxu0 0
        %772 = vmatprep.subr.bf16.mxu0 %v751
        %773 = vmatpush1.bf16.msra.mxu0 %v750
        %774 = vmatprep.subr.bf16.mxu0 %v749
        %775 = vmatpush1.bf16.msra.mxu0 %v748
        %776 = vmatprep.subr.bf16.mxu0 %v747
        %777 = vmatpush1.bf16.msra.mxu0 %v746
        %778 = vmatprep.subr.bf16.mxu0 %v745
        %779 = vmatpush1.bf16.msra.mxu0 %v744
        %780 = vmatprep.subr.bf16.mxu0 %v743
        %781 = vmatpush1.bf16.msra.mxu0 %v742
        %782 = vmatprep.subr.bf16.mxu0 %v741
        %783 = vmatpush1.bf16.msra.mxu0 %v740
        %784 = vmatprep.subr.bf16.mxu0 0
        %785 = vmatpush2.bf16.msra.mxu0 0
        %786 = vmatprep.subr.bf16.mxu0 0
        %787 = vmatpush2.bf16.msra.mxu0 0
        %788 = vmatprep.subr.bf16.mxu0 0
        %789 = vmatpush2.bf16.msra.mxu0 0
        %790 = vmatprep.subr.bf16.mxu0 0
        %791 = vmatpush2.bf16.msra.mxu0 0
        %792 = vmatprep.subr.bf16.mxu0 0
        %793 = vmatpush2.bf16.msra.mxu0 0
        %794 = vmatprep.subr.bf16.mxu0 0
        %795 = vmatpush2.bf16.msra.mxu0 0
        %796 = vmatprep.subr.bf16.mxu0 0
        %797 = vmatpush2.bf16.msra.mxu0 0
        %798 = vmatprep.subr.bf16.mxu0 0
        %799 = vmatpush2.bf16.msra.mxu0 0
        %800 = vmatprep.mubr.bf16.mxu0 0
        %801 = vmatmul.mubr.bf16.gmra.mxu0 %v764
        %v802 = vpop.f32.mrf.mxu0
        %v803 = vadd.f32 %v686, %v802
        %v804 = vpop.f32.mrf.mxu0
        %v805 = vadd.f32 %v688, %v804
        %v806 = vpop.f32.mrf.mxu0
        %v807 = vadd.f32 %v690, %v806
        %v808 = vpop.f32.mrf.mxu0
        %v809 = vadd.f32 %v692, %v808
        %810 = vmatprep.mubr.bf16.mxu0 0
        %811 = vmatmul.mubr.bf16.gmra.mxu0 %v766
        %v812 = vpop.f32.mrf.mxu0
        %v813 = vadd.f32 %v696, %v812
        %v814 = vpop.f32.mrf.mxu0
        %v815 = vadd.f32 %v698, %v814
        %v816 = vpop.f32.mrf.mxu0
        %v817 = vadd.f32 %v700, %v816
        %v818 = vpop.f32.mrf.mxu0
        %v819 = vadd.f32 %v702, %v818
        %820 = vdwg.mxu0
        %s821 = scalar_lea.vmem %s1, 192
        %v822 = vld [vmem:[%s821] sm:$0xff]
        %v823 = vld [vmem:[%s821 + $0x8] sm:$0xff]
        %v824 = vld [vmem:[%s821 + $0x10] sm:$0xff]
        %v825 = vld [vmem:[%s821 + $0x18] sm:$0xff]
        %v826 = vld [vmem:[%s821 + $0x20] sm:$0xff]
        %v827 = vld [vmem:[%s821 + $0x28] sm:$0xff]
        %v828 = vld [vmem:[%s821 + $0x30] sm:$0xff]
        %v829 = vld [vmem:[%s821 + $0x38] sm:$0xff]
        %v830 = vld [vmem:[%s821 + $0x40] sm:$0xff]
        %v831 = vld [vmem:[%s821 + $0x48] sm:$0xff]
        %v832 = vld [vmem:[%s821 + $0x50] sm:$0xff]
        %v833 = vld [vmem:[%s821 + $0x58] sm:$0xff]
        %vm836 = vcmask 1046528
        %v837 = vrot.slane %v541, 1
        %v838 = vrot.slane %v542, 1
        %v839 = vsel %vm836, %v837, %v838
        %v852 = vunpack.c.l.b16 %v822
        %v853 = vunpack.c.h.b16 %v822
        %v854 = vunpack.c.l.b16 %v823
        %v855 = vunpack.c.h.b16 %v823
        %v856 = vunpack.c.l.b16 %v824
        %v857 = vunpack.c.h.b16 %v824
        %v858 = vunpack.c.l.b16 %v825
        %v859 = vunpack.c.h.b16 %v825
        %v860 = vunpack.c.l.b16 %v826
        %v861 = vunpack.c.h.b16 %v826
        %v862 = vunpack.c.l.b16 %v827
        %v863 = vunpack.c.h.b16 %v827
        %v864 = vunpack.c.l.b16 %v828
        %v865 = vunpack.c.h.b16 %v828
        %v866 = vunpack.c.l.b16 %v829
        %v867 = vunpack.c.h.b16 %v829
        %v868 = vunpack.c.l.b16 %v830
        %v869 = vunpack.c.h.b16 %v830
        %v870 = vunpack.c.l.b16 %v831
        %v871 = vunpack.c.h.b16 %v831
        %v872 = vunpack.c.l.b16 %v832
        %v873 = vunpack.c.h.b16 %v832
        %v874 = vunpack.c.l.b16 %v833
        %v875 = vunpack.c.h.b16 %v833
        %v876 = vpack.c.b16 %v854, %v852
        %v877 = vpack.c.b16 %v855, %v853
        %v878 = vpack.c.b16 %v858, %v856
        %v879 = vpack.c.b16 %v859, %v857
        %v880 = vpack.c.b16 %v862, %v860
        %v881 = vpack.c.b16 %v863, %v861
        %v882 = vpack.c.b16 %v866, %v864
        %v883 = vpack.c.b16 %v867, %v865
        %v884 = vpack.c.b16 %v870, %v868
        %v885 = vpack.c.b16 %v871, %v869
        %v886 = vpack.c.b16 %v874, %v872
        %v887 = vpack.c.b16 %v875, %v873
        %v901 = vsel %vm644, %v839, 0
        %v904 = vsel %vm644, %v838, 0
        %906 = vmatprep.subr.bf16.mxu0 0
        %907 = vmatpush1.bf16.msra.mxu0 0
        %908 = vmatprep.subr.bf16.mxu0 0
        %909 = vmatpush1.bf16.msra.mxu0 0
        %910 = vmatprep.subr.bf16.mxu0 %v887
        %911 = vmatpush1.bf16.msra.mxu0 %v886
        %912 = vmatprep.subr.bf16.mxu0 %v885
        %913 = vmatpush1.bf16.msra.mxu0 %v884
        %914 = vmatprep.subr.bf16.mxu0 %v883
        %915 = vmatpush1.bf16.msra.mxu0 %v882
        %916 = vmatprep.subr.bf16.mxu0 %v881
        %917 = vmatpush1.bf16.msra.mxu0 %v880
        %918 = vmatprep.subr.bf16.mxu0 %v879
        %919 = vmatpush1.bf16.msra.mxu0 %v878
        %920 = vmatprep.subr.bf16.mxu0 %v877
        %921 = vmatpush1.bf16.msra.mxu0 %v876
        %922 = vmatprep.subr.bf16.mxu0 0
        %923 = vmatpush2.bf16.msra.mxu0 0
        %924 = vmatprep.subr.bf16.mxu0 0
        %925 = vmatpush2.bf16.msra.mxu0 0
        %926 = vmatprep.subr.bf16.mxu0 0
        %927 = vmatpush2.bf16.msra.mxu0 0
        %928 = vmatprep.subr.bf16.mxu0 0
        %929 = vmatpush2.bf16.msra.mxu0 0
        %930 = vmatprep.subr.bf16.mxu0 0
        %931 = vmatpush2.bf16.msra.mxu0 0
        %932 = vmatprep.subr.bf16.mxu0 0
        %933 = vmatpush2.bf16.msra.mxu0 0
        %934 = vmatprep.subr.bf16.mxu0 0
        %935 = vmatpush2.bf16.msra.mxu0 0
        %936 = vmatprep.subr.bf16.mxu0 0
        %937 = vmatpush2.bf16.msra.mxu0 0
        %938 = vmatprep.mubr.bf16.mxu0 0
        %939 = vmatmul.mubr.bf16.gmra.mxu0 %v901
        %v940 = vpop.f32.mrf.mxu0
        %v941 = vadd.f32 0.0, %v940
        %v942 = vpop.f32.mrf.mxu0
        %v943 = vadd.f32 0.0, %v942
        %v944 = vpop.f32.mrf.mxu0
        %v945 = vadd.f32 0.0, %v944
        %v946 = vpop.f32.mrf.mxu0
        %v947 = vadd.f32 0.0, %v946
        %948 = vmatprep.mubr.bf16.mxu0 0
        %949 = vmatmul.mubr.bf16.gmra.mxu0 %v904
        %v950 = vpop.f32.mrf.mxu0
        %v951 = vadd.f32 0.0, %v950
        %v952 = vpop.f32.mrf.mxu0
        %v953 = vadd.f32 0.0, %v952
        %v954 = vpop.f32.mrf.mxu0
        %v955 = vadd.f32 0.0, %v954
        %v956 = vpop.f32.mrf.mxu0
        %v957 = vadd.f32 0.0, %v956
        %958 = vdwg.mxu0
        %v959 = vadd.f32 %v803, %v941
        %v960 = vadd.f32 %v805, %v943
        %v961 = vadd.f32 %v807, %v945
        %v962 = vadd.f32 %v809, %v947
        %v963 = vadd.f32 %v813, %v951
        %v964 = vadd.f32 %v815, %v953
        %v965 = vadd.f32 %v817, %v955
        %v966 = vadd.f32 %v819, %v957
        %s967 = scalar_lea.vmem %s1, 288
        %v968 = vld [vmem:[%s967] sm:$0xff]
        %v969 = vld [vmem:[%s967 + $0x8] sm:$0xff]
        %v970 = vld [vmem:[%s967 + $0x10] sm:$0xff]
        %v971 = vld [vmem:[%s967 + $0x18] sm:$0xff]
        %v972 = vld [vmem:[%s967 + $0x20] sm:$0xff]
        %v973 = vld [vmem:[%s967 + $0x28] sm:$0xff]
        %v974 = vld [vmem:[%s967 + $0x30] sm:$0xff]
        %v975 = vld [vmem:[%s967 + $0x38] sm:$0xff]
        %v976 = vld [vmem:[%s967 + $0x40] sm:$0xff]
        %v977 = vld [vmem:[%s967 + $0x48] sm:$0xff]
        %v978 = vld [vmem:[%s967 + $0x50] sm:$0xff]
        %v979 = vld [vmem:[%s967 + $0x58] sm:$0xff]
        %vm980 = vsmask.f32 6400
        %v981 = vrot.slane %v570, 1
        %v982 = vrot.slane %v572, 2
        %v983 = vor.u32 %v981, %v982
        %v984 = vrot.slane %v581, 1
        %v985 = vrot.slane %v577, 2
        %v986 = vor.u32 %v984, %v985
        %v987 = vsel %vm980, %v983, %v986
        %v1000 = vunpack.c.l.b16 %v968
        %v1001 = vunpack.c.h.b16 %v968
        %v1002 = vunpack.c.l.b16 %v969
        %v1003 = vunpack.c.h.b16 %v969
        %v1004 = vunpack.c.l.b16 %v970
        %v1005 = vunpack.c.h.b16 %v970
        %v1006 = vunpack.c.l.b16 %v971
        %v1007 = vunpack.c.h.b16 %v971
        %v1008 = vunpack.c.l.b16 %v972
        %v1009 = vunpack.c.h.b16 %v972
        %v1010 = vunpack.c.l.b16 %v973
        %v1011 = vunpack.c.h.b16 %v973
        %v1012 = vunpack.c.l.b16 %v974
        %v1013 = vunpack.c.h.b16 %v974
        %v1014 = vunpack.c.l.b16 %v975
        %v1015 = vunpack.c.h.b16 %v975
        %v1016 = vunpack.c.l.b16 %v976
        %v1017 = vunpack.c.h.b16 %v976
        %v1018 = vunpack.c.l.b16 %v977
        %v1019 = vunpack.c.h.b16 %v977
        %v1020 = vunpack.c.l.b16 %v978
        %v1021 = vunpack.c.h.b16 %v978
        %v1022 = vunpack.c.l.b16 %v979
        %v1023 = vunpack.c.h.b16 %v979
        %v1024 = vpack.c.b16 %v1002, %v1000
        %v1025 = vpack.c.b16 %v1003, %v1001
        %v1026 = vpack.c.b16 %v1006, %v1004
        %v1027 = vpack.c.b16 %v1007, %v1005
        %v1028 = vpack.c.b16 %v1010, %v1008
        %v1029 = vpack.c.b16 %v1011, %v1009
        %v1030 = vpack.c.b16 %v1014, %v1012
        %v1031 = vpack.c.b16 %v1015, %v1013
        %v1032 = vpack.c.b16 %v1018, %v1016
        %v1033 = vpack.c.b16 %v1019, %v1017
        %v1034 = vpack.c.b16 %v1022, %v1020
        %v1035 = vpack.c.b16 %v1023, %v1021
        %v1049 = vsel %vm644, %v987, 0
        %v1052 = vsel %vm644, %v986, 0
        %1054 = vmatprep.subr.bf16.mxu0 0
        %1055 = vmatpush1.bf16.msra.mxu0 0
        %1056 = vmatprep.subr.bf16.mxu0 0
        %1057 = vmatpush1.bf16.msra.mxu0 0
        %1058 = vmatprep.subr.bf16.mxu0 %v1035
        %1059 = vmatpush1.bf16.msra.mxu0 %v1034
        %1060 = vmatprep.subr.bf16.mxu0 %v1033
        %1061 = vmatpush1.bf16.msra.mxu0 %v1032
        %1062 = vmatprep.subr.bf16.mxu0 %v1031
        %1063 = vmatpush1.bf16.msra.mxu0 %v1030
        %1064 = vmatprep.subr.bf16.mxu0 %v1029
        %1065 = vmatpush1.bf16.msra.mxu0 %v1028
        %1066 = vmatprep.subr.bf16.mxu0 %v1027
        %1067 = vmatpush1.bf16.msra.mxu0 %v1026
        %1068 = vmatprep.subr.bf16.mxu0 %v1025
        %1069 = vmatpush1.bf16.msra.mxu0 %v1024
        %1070 = vmatprep.subr.bf16.mxu0 0
        %1071 = vmatpush2.bf16.msra.mxu0 0
        %1072 = vmatprep.subr.bf16.mxu0 0
        %1073 = vmatpush2.bf16.msra.mxu0 0
        %1074 = vmatprep.subr.bf16.mxu0 0
        %1075 = vmatpush2.bf16.msra.mxu0 0
        %1076 = vmatprep.subr.bf16.mxu0 0
        %1077 = vmatpush2.bf16.msra.mxu0 0
        %1078 = vmatprep.subr.bf16.mxu0 0
        %1079 = vmatpush2.bf16.msra.mxu0 0
        %1080 = vmatprep.subr.bf16.mxu0 0
        %1081 = vmatpush2.bf16.msra.mxu0 0
        %1082 = vmatprep.subr.bf16.mxu0 0
        %1083 = vmatpush2.bf16.msra.mxu0 0
        %1084 = vmatprep.subr.bf16.mxu0 0
        %1085 = vmatpush2.bf16.msra.mxu0 0
        %1086 = vmatprep.mubr.bf16.mxu0 0
        %1087 = vmatmul.mubr.bf16.gmra.mxu0 %v1049
        %v1088 = vpop.f32.mrf.mxu0
        %v1089 = vadd.f32 0.0, %v1088
        %v1090 = vpop.f32.mrf.mxu0
        %v1091 = vadd.f32 0.0, %v1090
        %v1092 = vpop.f32.mrf.mxu0
        %v1093 = vadd.f32 0.0, %v1092
        %v1094 = vpop.f32.mrf.mxu0
        %v1095 = vadd.f32 0.0, %v1094
        %1096 = vmatprep.mubr.bf16.mxu0 0
        %1097 = vmatmul.mubr.bf16.gmra.mxu0 %v1052
        %v1098 = vpop.f32.mrf.mxu0
        %v1099 = vadd.f32 0.0, %v1098
        %v1100 = vpop.f32.mrf.mxu0
        %v1101 = vadd.f32 0.0, %v1100
        %v1102 = vpop.f32.mrf.mxu0
        %v1103 = vadd.f32 0.0, %v1102
        %v1104 = vpop.f32.mrf.mxu0
        %v1105 = vadd.f32 0.0, %v1104
        %1106 = vdwg.mxu0
        %v1107 = vadd.f32 %v959, %v1089
        %v1108 = vadd.f32 %v960, %v1091
        %v1109 = vadd.f32 %v961, %v1093
        %v1110 = vadd.f32 %v962, %v1095
        %v1111 = vadd.f32 %v963, %v1099
        %v1112 = vadd.f32 %v964, %v1101
        %v1113 = vadd.f32 %v965, %v1103
        %v1114 = vadd.f32 %v966, %v1105
        %s1115 = scalar_lea.vmem %s1, 384
        %v1116 = vld [vmem:[%s1115] sm:$0xff]
        %v1117 = vld [vmem:[%s1115 + $0x8] sm:$0xff]
        %v1118 = vld [vmem:[%s1115 + $0x10] sm:$0xff]
        %v1119 = vld [vmem:[%s1115 + $0x18] sm:$0xff]
        %v1120 = vld [vmem:[%s1115 + $0x20] sm:$0xff]
        %v1121 = vld [vmem:[%s1115 + $0x28] sm:$0xff]
        %v1122 = vld [vmem:[%s1115 + $0x30] sm:$0xff]
        %v1123 = vld [vmem:[%s1115 + $0x38] sm:$0xff]
        %v1124 = vld [vmem:[%s1115 + $0x40] sm:$0xff]
        %v1125 = vld [vmem:[%s1115 + $0x48] sm:$0xff]
        %v1126 = vld [vmem:[%s1115 + $0x50] sm:$0xff]
        %v1127 = vld [vmem:[%s1115 + $0x58] sm:$0xff]
        %vm1128 = vcmask 1045504
        %v1129 = vrot.slane %v541, 2
        %v1130 = vrot.slane %v542, 2
        %v1131 = vsel %vm1128, %v1129, %v1130
        %v1144 = vunpack.c.l.b16 %v1116
        %v1145 = vunpack.c.h.b16 %v1116
        %v1146 = vunpack.c.l.b16 %v1117
        %v1147 = vunpack.c.h.b16 %v1117
        %v1148 = vunpack.c.l.b16 %v1118
        %v1149 = vunpack.c.h.b16 %v1118
        %v1150 = vunpack.c.l.b16 %v1119
        %v1151 = vunpack.c.h.b16 %v1119
        %v1152 = vunpack.c.l.b16 %v1120
        %v1153 = vunpack.c.h.b16 %v1120
        %v1154 = vunpack.c.l.b16 %v1121
        %v1155 = vunpack.c.h.b16 %v1121
        %v1156 = vunpack.c.l.b16 %v1122
        %v1157 = vunpack.c.h.b16 %v1122
        %v1158 = vunpack.c.l.b16 %v1123
        %v1159 = vunpack.c.h.b16 %v1123
        %v1160 = vunpack.c.l.b16 %v1124
        %v1161 = vunpack.c.h.b16 %v1124
        %v1162 = vunpack.c.l.b16 %v1125
        %v1163 = vunpack.c.h.b16 %v1125
        %v1164 = vunpack.c.l.b16 %v1126
        %v1165 = vunpack.c.h.b16 %v1126
        %v1166 = vunpack.c.l.b16 %v1127
        %v1167 = vunpack.c.h.b16 %v1127
        %v1168 = vpack.c.b16 %v1146, %v1144
        %v1169 = vpack.c.b16 %v1147, %v1145
        %v1170 = vpack.c.b16 %v1150, %v1148
        %v1171 = vpack.c.b16 %v1151, %v1149
        %v1172 = vpack.c.b16 %v1154, %v1152
        %v1173 = vpack.c.b16 %v1155, %v1153
        %v1174 = vpack.c.b16 %v1158, %v1156
        %v1175 = vpack.c.b16 %v1159, %v1157
        %v1176 = vpack.c.b16 %v1162, %v1160
        %v1177 = vpack.c.b16 %v1163, %v1161
        %v1178 = vpack.c.b16 %v1166, %v1164
        %v1179 = vpack.c.b16 %v1167, %v1165
        %v1193 = vsel %vm644, %v1131, 0
        %v1196 = vsel %vm644, %v1130, 0
        %1198 = vmatprep.subr.bf16.mxu0 0
        %1199 = vmatpush1.bf16.msra.mxu0 0
        %1200 = vmatprep.subr.bf16.mxu0 0
        %1201 = vmatpush1.bf16.msra.mxu0 0
        %1202 = vmatprep.subr.bf16.mxu0 %v1179
        %1203 = vmatpush1.bf16.msra.mxu0 %v1178
        %1204 = vmatprep.subr.bf16.mxu0 %v1177
        %1205 = vmatpush1.bf16.msra.mxu0 %v1176
        %1206 = vmatprep.subr.bf16.mxu0 %v1175
        %1207 = vmatpush1.bf16.msra.mxu0 %v1174
        %1208 = vmatprep.subr.bf16.mxu0 %v1173
        %1209 = vmatpush1.bf16.msra.mxu0 %v1172
        %1210 = vmatprep.subr.bf16.mxu0 %v1171
        %1211 = vmatpush1.bf16.msra.mxu0 %v1170
        %1212 = vmatprep.subr.bf16.mxu0 %v1169
        %1213 = vmatpush1.bf16.msra.mxu0 %v1168
        %1214 = vmatprep.subr.bf16.mxu0 0
        %1215 = vmatpush2.bf16.msra.mxu0 0
        %1216 = vmatprep.subr.bf16.mxu0 0
        %1217 = vmatpush2.bf16.msra.mxu0 0
        %1218 = vmatprep.subr.bf16.mxu0 0
        %1219 = vmatpush2.bf16.msra.mxu0 0
        %1220 = vmatprep.subr.bf16.mxu0 0
        %1221 = vmatpush2.bf16.msra.mxu0 0
        %1222 = vmatprep.subr.bf16.mxu0 0
        %1223 = vmatpush2.bf16.msra.mxu0 0
        %1224 = vmatprep.subr.bf16.mxu0 0
        %1225 = vmatpush2.bf16.msra.mxu0 0
        %1226 = vmatprep.subr.bf16.mxu0 0
        %1227 = vmatpush2.bf16.msra.mxu0 0
        %1228 = vmatprep.subr.bf16.mxu0 0
        %1229 = vmatpush2.bf16.msra.mxu0 0
        %1230 = vmatprep.mubr.bf16.mxu0 0
        %1231 = vmatmul.mubr.bf16.gmra.mxu0 %v1193
        %v1232 = vpop.f32.mrf.mxu0
        %v1233 = vadd.f32 0.0, %v1232
        %v1234 = vpop.f32.mrf.mxu0
        %v1235 = vadd.f32 0.0, %v1234
        %v1236 = vpop.f32.mrf.mxu0
        %v1237 = vadd.f32 0.0, %v1236
        %v1238 = vpop.f32.mrf.mxu0
        %v1239 = vadd.f32 0.0, %v1238
        %1240 = vmatprep.mubr.bf16.mxu0 0
        %1241 = vmatmul.mubr.bf16.gmra.mxu0 %v1196
        %v1242 = vpop.f32.mrf.mxu0
        %v1243 = vadd.f32 0.0, %v1242
        %v1244 = vpop.f32.mrf.mxu0
        %v1245 = vadd.f32 0.0, %v1244
        %v1246 = vpop.f32.mrf.mxu0
        %v1247 = vadd.f32 0.0, %v1246
        %v1248 = vpop.f32.mrf.mxu0
        %v1249 = vadd.f32 0.0, %v1248
        %1250 = vdwg.mxu0
        %v1251 = vadd.f32 %v1107, %v1233
        %v1252 = vadd.f32 %v1108, %v1235
        %v1253 = vadd.f32 %v1109, %v1237
        %v1254 = vadd.f32 %v1110, %v1239
        %v1255 = vadd.f32 %v1111, %v1243
        %v1256 = vadd.f32 %v1112, %v1245
        %v1257 = vadd.f32 %v1113, %v1247
        %v1258 = vadd.f32 %v1114, %v1249
        %v1259 = vld [vmem:[%s2] sm:$0x3]
        %v1261 = vlaneseq
        %v1262 = vshrl.u32 %v1261, 7
        %v1263 = vsub.s32 0, %v1262
        %v1264 = vrot.slane %v1259, %v1263
        %v1265 = vlaneseq
        %v1266 = vshrl.u32 %v1265, 7
        %v1267 = vsub.s32 1, %v1266
        %v1268 = vrot.slane %v1259, %v1267
        %v1271 = vadd.f32 %v1251, %v1264
        %v1272 = vadd.f32 %v1252, %v1268
        %v1273 = vadd.f32 %v1253, %v1264
        %v1274 = vadd.f32 %v1254, %v1268
        %v1275 = vadd.f32 %v1255, %v1264
        %v1276 = vadd.f32 %v1256, %v1268
        %v1277 = vadd.f32 %v1257, %v1264
        %v1278 = vadd.f32 %v1258, %v1268
        %v1279 = vmax.f32 %v1271, 0.0
        %v1280 = vmax.f32 %v1272, 0.0
        %v1281 = vmax.f32 %v1273, 0.0
        %v1282 = vmax.f32 %v1274, 0.0
        %v1283 = vmax.f32 %v1275, 0.0
        %v1284 = vmax.f32 %v1276, 0.0
        %v1285 = vmax.f32 %v1277, 0.0
        %v1286 = vmax.f32 %v1278, 0.0
        %v1287 = vld [vmem:[%s3] sm:$0xff]
        %v1288 = vld [vmem:[%s3 + $0x8] sm:$0xff]
        %v1289 = vld [vmem:[%s3 + $0x10] sm:$0xff]
        %v1290 = vld [vmem:[%s3 + $0x18] sm:$0xff]
        %v1291 = vld [vmem:[%s3 + $0x20] sm:$0xff]
        %v1292 = vld [vmem:[%s3 + $0x28] sm:$0xff]
        %v1293 = vld [vmem:[%s3 + $0x30] sm:$0xff]
        %v1294 = vld [vmem:[%s3 + $0x38] sm:$0xff]
        %v1295 = vld [vmem:[%s3 + $0x40] sm:$0xff]
        %v1296 = vld [vmem:[%s3 + $0x48] sm:$0xff]
        %v1297 = vld [vmem:[%s3 + $0x50] sm:$0xff]
        %v1298 = vld [vmem:[%s3 + $0x58] sm:$0xff]
        %v1299 = vld [vmem:[%s3 + $0x60] sm:$0xff]
        %v1300 = vld [vmem:[%s3 + $0x68] sm:$0xff]
        %v1301 = vld [vmem:[%s3 + $0x70] sm:$0xff]
        %v1302 = vld [vmem:[%s3 + $0x78] sm:$0xff]
        %v1303 = vld [vmem:[%s3 + $0x80] sm:$0xff]
        %v1304 = vld [vmem:[%s3 + $0x88] sm:$0xff]
        %v1305 = vld [vmem:[%s3 + $0x90] sm:$0xff]
        %v1306 = vld [vmem:[%s3 + $0x98] sm:$0xff]
        %v1307 = vld [vmem:[%s3 + $0xa0] sm:$0xff]
        %v1308 = vld [vmem:[%s3 + $0xa8] sm:$0xff]
        %v1309 = vld [vmem:[%s3 + $0xb0] sm:$0xff]
        %v1310 = vld [vmem:[%s3 + $0xb8] sm:$0xff]
        %v1311 = vld [vmem:[%s3 + $0xc0] sm:$0xff]
        %v1312 = vld [vmem:[%s3 + $0xc8] sm:$0xff]
        %v1313 = vld [vmem:[%s3 + $0xd0] sm:$0xff]
        %v1314 = vld [vmem:[%s3 + $0xd8] sm:$0xff]
        %v1316 = vsel %vm644, %v1280, 0
        %v1319 = vsel %vm644, %v1282, 0
        %v1322 = vsel %vm644, %v1284, 0
        %v1325 = vsel %vm644, %v1286, 0
        %1327 = vmatprep.subr.mxu0 0.0
        %1328 = vmatpush1.msra.mxu0 %v1302
        %1329 = vmatprep.subr.mxu0 0.0
        %1330 = vmatpush1.msra.mxu0 %v1301
        %1331 = vmatprep.subr.mxu0 0.0
        %1332 = vmatpush1.msra.mxu0 %v1300
        %1333 = vmatprep.subr.mxu0 0.0
        %1334 = vmatpush1.msra.mxu0 %v1299
        %1335 = vmatprep.subr.mxu0 0.0
        %1336 = vmatpush1.msra.mxu0 %v1298
        %1337 = vmatprep.subr.mxu0 0.0
        %1338 = vmatpush1.msra.mxu0 %v1297
        %1339 = vmatprep.subr.mxu0 0.0
        %1340 = vmatpush1.msra.mxu0 %v1296
        %1341 = vmatprep.subr.mxu0 0.0
        %1342 = vmatpush1.msra.mxu0 %v1295
        %1343 = vmatprep.subr.mxu0 0.0
        %1344 = vmatpush1.msra.mxu0 %v1294
        %1345 = vmatprep.subr.mxu0 0.0
        %1346 = vmatpush1.msra.mxu0 %v1293
        %1347 = vmatprep.subr.mxu0 0.0
        %1348 = vmatpush1.msra.mxu0 %v1292
        %1349 = vmatprep.subr.mxu0 0.0
        %1350 = vmatpush1.msra.mxu0 %v1291
        %1351 = vmatprep.subr.mxu0 0.0
        %1352 = vmatpush1.msra.mxu0 %v1290
        %1353 = vmatprep.subr.mxu0 0.0
        %1354 = vmatpush1.msra.mxu0 %v1289
        %1355 = vmatprep.subr.mxu0 0.0
        %1356 = vmatpush1.msra.mxu0 %v1288
        %1357 = vmatprep.subr.mxu0 0.0
        %1358 = vmatpush1.msra.mxu0 %v1287
        %1359 = vmatprep.subr.mxu0 0.0
        %1360 = vmatpush2.msra.mxu0 0.0
        %1361 = vmatprep.subr.mxu0 0.0
        %1362 = vmatpush2.msra.mxu0 0.0
        %1363 = vmatprep.subr.mxu0 0.0
        %1364 = vmatpush2.msra.mxu0 0.0
        %1365 = vmatprep.subr.mxu0 0.0
        %1366 = vmatpush2.msra.mxu0 0.0
        %1367 = vmatprep.subr.mxu0 0.0
        %1368 = vmatpush2.msra.mxu0 %v1314
        %1369 = vmatprep.subr.mxu0 0.0
        %1370 = vmatpush2.msra.mxu0 %v1313
        %1371 = vmatprep.subr.mxu0 0.0
        %1372 = vmatpush2.msra.mxu0 %v1312
        %1373 = vmatprep.subr.mxu0 0.0
        %1374 = vmatpush2.msra.mxu0 %v1311
        %1375 = vmatprep.subr.mxu0 0.0
        %1376 = vmatpush2.msra.mxu0 %v1310
        %1377 = vmatprep.subr.mxu0 0.0
        %1378 = vmatpush2.msra.mxu0 %v1309
        %1379 = vmatprep.subr.mxu0 0.0
        %1380 = vmatpush2.msra.mxu0 %v1308
        %1381 = vmatprep.subr.mxu0 0.0
        %1382 = vmatpush2.msra.mxu0 %v1307
        %1383 = vmatprep.subr.mxu0 0.0
        %1384 = vmatpush2.msra.mxu0 %v1306
        %1385 = vmatprep.subr.mxu0 0.0
        %1386 = vmatpush2.msra.mxu0 %v1305
        %1387 = vmatprep.subr.mxu0 0.0
        %1388 = vmatpush2.msra.mxu0 %v1304
        %1389 = vmatprep.subr.mxu0 0.0
        %1390 = vmatpush2.msra.mxu0 %v1303
        %1391 = vmatprep.mubr.f32.mxu0 %v1316
        %1392 = vmatmul.mubr.f32.gmra.mxu0 %v1279
        %v1393 = vpop.f32.mrf.mxu0
        %v1394 = vadd.f32 0.0, %v1393
        %v1395 = vpop.f32.mrf.mxu0
        %1396 = vmatprep.mubr.f32.mxu0 %v1319
        %1397 = vmatmul.mubr.f32.gmra.mxu0 %v1281
        %v1398 = vpop.f32.mrf.mxu0
        %v1399 = vadd.f32 0.0, %v1398
        %v1400 = vpop.f32.mrf.mxu0
        %1401 = vmatprep.mubr.f32.mxu0 %v1322
        %1402 = vmatmul.mubr.f32.gmra.mxu0 %v1283
        %v1403 = vpop.f32.mrf.mxu0
        %v1404 = vadd.f32 0.0, %v1403
        %v1405 = vpop.f32.mrf.mxu0
        %1406 = vmatprep.mubr.f32.mxu0 %v1325
        %1407 = vmatmul.mubr.f32.gmra.mxu0 %v1285
        %v1408 = vpop.f32.mrf.mxu0
        %v1409 = vadd.f32 0.0, %v1408
        %v1410 = vpop.f32.mrf.mxu0
        %1411 = vdwg.mxu0
        %s1412 = scalar_lea.vmem %s3, 224
        %v1413 = vld [vmem:[%s1412] sm:$0xff]
        %v1414 = vld [vmem:[%s1412 + $0x8] sm:$0xff]
        %v1415 = vld [vmem:[%s1412 + $0x10] sm:$0xff]
        %v1416 = vld [vmem:[%s1412 + $0x18] sm:$0xff]
        %v1417 = vld [vmem:[%s1412 + $0x20] sm:$0xff]
        %v1418 = vld [vmem:[%s1412 + $0x28] sm:$0xff]
        %v1419 = vld [vmem:[%s1412 + $0x30] sm:$0xff]
        %v1420 = vld [vmem:[%s1412 + $0x38] sm:$0xff]
        %v1421 = vld [vmem:[%s1412 + $0x40] sm:$0xff]
        %v1422 = vld [vmem:[%s1412 + $0x48] sm:$0xff]
        %v1423 = vld [vmem:[%s1412 + $0x50] sm:$0xff]
        %v1424 = vld [vmem:[%s1412 + $0x58] sm:$0xff]
        %v1425 = vld [vmem:[%s1412 + $0x60] sm:$0xff]
        %v1426 = vld [vmem:[%s1412 + $0x68] sm:$0xff]
        %v1427 = vld [vmem:[%s1412 + $0x70] sm:$0xff]
        %v1428 = vld [vmem:[%s1412 + $0x78] sm:$0xff]
        %v1429 = vld [vmem:[%s1412 + $0x80] sm:$0xff]
        %v1430 = vld [vmem:[%s1412 + $0x88] sm:$0xff]
        %v1431 = vld [vmem:[%s1412 + $0x90] sm:$0xff]
        %v1432 = vld [vmem:[%s1412 + $0x98] sm:$0xff]
        %v1433 = vld [vmem:[%s1412 + $0xa0] sm:$0xff]
        %v1434 = vld [vmem:[%s1412 + $0xa8] sm:$0xff]
        %v1435 = vld [vmem:[%s1412 + $0xb0] sm:$0xff]
        %v1436 = vld [vmem:[%s1412 + $0xb8] sm:$0xff]
        %v1437 = vld [vmem:[%s1412 + $0xc0] sm:$0xff]
        %v1438 = vld [vmem:[%s1412 + $0xc8] sm:$0xff]
        %v1439 = vld [vmem:[%s1412 + $0xd0] sm:$0xff]
        %v1440 = vld [vmem:[%s1412 + $0xd8] sm:$0xff]
        %1441 = vmatprep.subr.mxu0 0.0
        %1442 = vmatpush1.msra.mxu0 %v1428
        %1443 = vmatprep.subr.mxu0 0.0
        %1444 = vmatpush1.msra.mxu0 %v1427
        %1445 = vmatprep.subr.mxu0 0.0
        %1446 = vmatpush1.msra.mxu0 %v1426
        %1447 = vmatprep.subr.mxu0 0.0
        %1448 = vmatpush1.msra.mxu0 %v1425
        %1449 = vmatprep.subr.mxu0 0.0
        %1450 = vmatpush1.msra.mxu0 %v1424
        %1451 = vmatprep.subr.mxu0 0.0
        %1452 = vmatpush1.msra.mxu0 %v1423
        %1453 = vmatprep.subr.mxu0 0.0
        %1454 = vmatpush1.msra.mxu0 %v1422
        %1455 = vmatprep.subr.mxu0 0.0
        %1456 = vmatpush1.msra.mxu0 %v1421
        %1457 = vmatprep.subr.mxu0 0.0
        %1458 = vmatpush1.msra.mxu0 %v1420
        %1459 = vmatprep.subr.mxu0 0.0
        %1460 = vmatpush1.msra.mxu0 %v1419
        %1461 = vmatprep.subr.mxu0 0.0
        %1462 = vmatpush1.msra.mxu0 %v1418
        %1463 = vmatprep.subr.mxu0 0.0
        %1464 = vmatpush1.msra.mxu0 %v1417
        %1465 = vmatprep.subr.mxu0 0.0
        %1466 = vmatpush1.msra.mxu0 %v1416
        %1467 = vmatprep.subr.mxu0 0.0
        %1468 = vmatpush1.msra.mxu0 %v1415
        %1469 = vmatprep.subr.mxu0 0.0
        %1470 = vmatpush1.msra.mxu0 %v1414
        %1471 = vmatprep.subr.mxu0 0.0
        %1472 = vmatpush1.msra.mxu0 %v1413
        %1473 = vmatprep.subr.mxu0 0.0
        %1474 = vmatpush2.msra.mxu0 0.0
        %1475 = vmatprep.subr.mxu0 0.0
        %1476 = vmatpush2.msra.mxu0 0.0
        %1477 = vmatprep.subr.mxu0 0.0
        %1478 = vmatpush2.msra.mxu0 0.0
        %1479 = vmatprep.subr.mxu0 0.0
        %1480 = vmatpush2.msra.mxu0 0.0
        %1481 = vmatprep.subr.mxu0 0.0
        %1482 = vmatpush2.msra.mxu0 %v1440
        %1483 = vmatprep.subr.mxu0 0.0
        %1484 = vmatpush2.msra.mxu0 %v1439
        %1485 = vmatprep.subr.mxu0 0.0
        %1486 = vmatpush2.msra.mxu0 %v1438
        %1487 = vmatprep.subr.mxu0 0.0
        %1488 = vmatpush2.msra.mxu0 %v1437
        %1489 = vmatprep.subr.mxu0 0.0
        %1490 = vmatpush2.msra.mxu0 %v1436
        %1491 = vmatprep.subr.mxu0 0.0
        %1492 = vmatpush2.msra.mxu0 %v1435
        %1493 = vmatprep.subr.mxu0 0.0
        %1494 = vmatpush2.msra.mxu0 %v1434
        %1495 = vmatprep.subr.mxu0 0.0
        %1496 = vmatpush2.msra.mxu0 %v1433
        %1497 = vmatprep.subr.mxu0 0.0
        %1498 = vmatpush2.msra.mxu0 %v1432
        %1499 = vmatprep.subr.mxu0 0.0
        %1500 = vmatpush2.msra.mxu0 %v1431
        %1501 = vmatprep.subr.mxu0 0.0
        %1502 = vmatpush2.msra.mxu0 %v1430
        %1503 = vmatprep.subr.mxu0 0.0
        %1504 = vmatpush2.msra.mxu0 %v1429
        %1505 = vmatprep.mubr.f32.mxu0 %v1316
        %1506 = vmatmul.mubr.f32.gmra.mxu0 %v1279
        %v1507 = vpop.f32.mrf.mxu0
        %v1508 = vadd.f32 0.0, %v1507
        %v1509 = vpop.f32.mrf.mxu0
        %1510 = vmatprep.mubr.f32.mxu0 %v1319
        %1511 = vmatmul.mubr.f32.gmra.mxu0 %v1281
        %v1512 = vpop.f32.mrf.mxu0
        %v1513 = vadd.f32 0.0, %v1512
        %v1514 = vpop.f32.mrf.mxu0
        %1515 = vmatprep.mubr.f32.mxu0 %v1322
        %1516 = vmatmul.mubr.f32.gmra.mxu0 %v1283
        %v1517 = vpop.f32.mrf.mxu0
        %v1518 = vadd.f32 0.0, %v1517
        %v1519 = vpop.f32.mrf.mxu0
        %1520 = vmatprep.mubr.f32.mxu0 %v1325
        %1521 = vmatmul.mubr.f32.gmra.mxu0 %v1285
        %v1522 = vpop.f32.mrf.mxu0
        %v1523 = vadd.f32 0.0, %v1522
        %v1524 = vpop.f32.mrf.mxu0
        %1525 = vdwg.mxu0
        %v1526 = vmax.f32 %v1394, %v1508
        %v1527 = vmax.f32 %v1399, %v1513
        %v1528 = vmax.f32 %v1404, %v1518
        %v1529 = vmax.f32 %v1409, %v1523
        %v1530 = vld [vmem:[%s4] sm:$0xff]
        %v1531 = vld [vmem:[%s4 + $0x8] sm:$0x3f]
        %vm1532 = vcmask 228352
        %v1534 = vsel %vm1532, %v1530, 0
        %v1537 = vsel %vm1532, %v1531, 0
        %vm1539 = vcmask 1043456
        %v1541 = vsel %vm1539, %v1529, 0
        %1543 = vmatprep.subr.mxu0 0.0
        %1544 = vmatpush1.msra.mxu0 0.0
        %1545 = vmatprep.subr.mxu0 0.0
        %1546 = vmatpush1.msra.mxu0 0.0
        %1547 = vmatprep.subr.mxu0 0.0
        %1548 = vmatpush1.msra.mxu0 0.0
        %1549 = vmatprep.subr.mxu0 0.0
        %1550 = vmatpush1.msra.mxu0 0.0
        %1551 = vmatprep.subr.mxu0 0.0
        %1552 = vmatpush1.msra.mxu0 0.0
        %1553 = vmatprep.subr.mxu0 0.0
        %1554 = vmatpush1.msra.mxu0 0.0
        %1555 = vmatprep.subr.mxu0 0.0
        %1556 = vmatpush1.msra.mxu0 0.0
        %1557 = vmatprep.subr.mxu0 0.0
        %1558 = vmatpush1.msra.mxu0 0.0
        %1559 = vmatprep.subr.mxu0 0.0
        %1560 = vmatpush1.msra.mxu0 0.0
        %1561 = vmatprep.subr.mxu0 0.0
        %1562 = vmatpush1.msra.mxu0 0.0
        %1563 = vmatprep.subr.mxu0 0.0
        %1564 = vmatpush1.msra.mxu0 0.0
        %1565 = vmatprep.subr.mxu0 0.0
        %1566 = vmatpush1.msra.mxu0 0.0
        %1567 = vmatprep.subr.mxu0 0.0
        %1568 = vmatpush1.msra.mxu0 %v1541
        %1569 = vmatprep.subr.mxu0 0.0
        %1570 = vmatpush1.msra.mxu0 %v1528
        %1571 = vmatprep.subr.mxu0 0.0
        %1572 = vmatpush1.msra.mxu0 %v1527
        %1573 = vmatprep.subr.mxu0 0.0
        %1574 = vmatpush1.msra.mxu0 %v1526
        %1575 = vmatprep.subr.mxu0 0.0
        %1576 = vmatpush2.msra.mxu0 0.0
        %1577 = vmatprep.subr.mxu0 0.0
        %1578 = vmatpush2.msra.mxu0 0.0
        %1579 = vmatprep.subr.mxu0 0.0
        %1580 = vmatpush2.msra.mxu0 0.0
        %1581 = vmatprep.subr.mxu0 0.0
        %1582 = vmatpush2.msra.mxu0 0.0
        %1583 = vmatprep.subr.mxu0 0.0
        %1584 = vmatpush2.msra.mxu0 0.0
        %1585 = vmatprep.subr.mxu0 0.0
        %1586 = vmatpush2.msra.mxu0 0.0
        %1587 = vmatprep.subr.mxu0 0.0
        %1588 = vmatpush2.msra.mxu0 0.0
        %1589 = vmatprep.subr.mxu0 0.0
        %1590 = vmatpush2.msra.mxu0 0.0
        %1591 = vmatprep.subr.mxu0 0.0
        %1592 = vmatpush2.msra.mxu0 0.0
        %1593 = vmatprep.subr.mxu0 0.0
        %1594 = vmatpush2.msra.mxu0 0.0
        %1595 = vmatprep.subr.mxu0 0.0
        %1596 = vmatpush2.msra.mxu0 0.0
        %1597 = vmatprep.subr.mxu0 0.0
        %1598 = vmatpush2.msra.mxu0 0.0
        %1599 = vmatprep.subr.mxu0 0.0
        %1600 = vmatpush2.msra.mxu0 0.0
        %1601 = vmatprep.subr.mxu0 0.0
        %1602 = vmatpush2.msra.mxu0 0.0
        %1603 = vmatprep.subr.mxu0 0.0
        %1604 = vmatpush2.msra.mxu0 0.0
        %1605 = vmatprep.subr.mxu0 0.0
        %1606 = vmatpush2.msra.mxu0 0.0
        %1607 = vmatprep.mubr.f32.mxu0 0.0
        %1608 = vmatmul.mubr.f32.gmra.mxu0 %v1534
        %v1609 = vpop.f32.mrf.mxu0
        %v1610 = vadd.f32 0.0, %v1609
        %v1611 = vpop.f32.mrf.mxu0
        %1612 = vmatprep.mubr.f32.mxu0 0.0
        %1613 = vmatmul.mubr.f32.gmra.mxu0 %v1537
        %v1614 = vpop.f32.mrf.mxu0
        %v1615 = vadd.f32 0.0, %v1614
        %v1616 = vpop.f32.mrf.mxu0
        %1617 = vdwg.mxu0
        %s1618 = scalar_lea.vmem %s4, 16
        %v1619 = vld [vmem:[%s1618] sm:$0xff]
        %v1620 = vld [vmem:[%s1618 + $0x8] sm:$0x3f]
        %v1622 = vsel %vm1532, %v1619, 0
        %v1625 = vsel %vm1532, %v1620, 0
        %1627 = vmatprep.subr.mxu0 0.0
        %1628 = vmatpush1.msra.mxu0 0.0
        %1629 = vmatprep.subr.mxu0 0.0
        %1630 = vmatpush1.msra.mxu0 0.0
        %1631 = vmatprep.subr.mxu0 0.0
        %1632 = vmatpush1.msra.mxu0 0.0
        %1633 = vmatprep.subr.mxu0 0.0
        %1634 = vmatpush1.msra.mxu0 0.0
        %1635 = vmatprep.subr.mxu0 0.0
        %1636 = vmatpush1.msra.mxu0 0.0
        %1637 = vmatprep.subr.mxu0 0.0
        %1638 = vmatpush1.msra.mxu0 0.0
        %1639 = vmatprep.subr.mxu0 0.0
        %1640 = vmatpush1.msra.mxu0 0.0
        %1641 = vmatprep.subr.mxu0 0.0
        %1642 = vmatpush1.msra.mxu0 0.0
        %1643 = vmatprep.subr.mxu0 0.0
        %1644 = vmatpush1.msra.mxu0 0.0
        %1645 = vmatprep.subr.mxu0 0.0
        %1646 = vmatpush1.msra.mxu0 0.0
        %1647 = vmatprep.subr.mxu0 0.0
        %1648 = vmatpush1.msra.mxu0 0.0
        %1649 = vmatprep.subr.mxu0 0.0
        %1650 = vmatpush1.msra.mxu0 0.0
        %1651 = vmatprep.subr.mxu0 0.0
        %1652 = vmatpush1.msra.mxu0 %v1541
        %1653 = vmatprep.subr.mxu0 0.0
        %1654 = vmatpush1.msra.mxu0 %v1528
        %1655 = vmatprep.subr.mxu0 0.0
        %1656 = vmatpush1.msra.mxu0 %v1527
        %1657 = vmatprep.subr.mxu0 0.0
        %1658 = vmatpush1.msra.mxu0 %v1526
        %1659 = vmatprep.subr.mxu0 0.0
        %1660 = vmatpush2.msra.mxu0 0.0
        %1661 = vmatprep.subr.mxu0 0.0
        %1662 = vmatpush2.msra.mxu0 0.0
        %1663 = vmatprep.subr.mxu0 0.0
        %1664 = vmatpush2.msra.mxu0 0.0
        %1665 = vmatprep.subr.mxu0 0.0
        %1666 = vmatpush2.msra.mxu0 0.0
        %1667 = vmatprep.subr.mxu0 0.0
        %1668 = vmatpush2.msra.mxu0 0.0
        %1669 = vmatprep.subr.mxu0 0.0
        %1670 = vmatpush2.msra.mxu0 0.0
        %1671 = vmatprep.subr.mxu0 0.0
        %1672 = vmatpush2.msra.mxu0 0.0
        %1673 = vmatprep.subr.mxu0 0.0
        %1674 = vmatpush2.msra.mxu0 0.0
        %1675 = vmatprep.subr.mxu0 0.0
        %1676 = vmatpush2.msra.mxu0 0.0
        %1677 = vmatprep.subr.mxu0 0.0
        %1678 = vmatpush2.msra.mxu0 0.0
        %1679 = vmatprep.subr.mxu0 0.0
        %1680 = vmatpush2.msra.mxu0 0.0
        %1681 = vmatprep.subr.mxu0 0.0
        %1682 = vmatpush2.msra.mxu0 0.0
        %1683 = vmatprep.subr.mxu0 0.0
        %1684 = vmatpush2.msra.mxu0 0.0
        %1685 = vmatprep.subr.mxu0 0.0
        %1686 = vmatpush2.msra.mxu0 0.0
        %1687 = vmatprep.subr.mxu0 0.0
        %1688 = vmatpush2.msra.mxu0 0.0
        %1689 = vmatprep.subr.mxu0 0.0
        %1690 = vmatpush2.msra.mxu0 0.0
        %1691 = vmatprep.mubr.f32.mxu0 0.0
        %1692 = vmatmul.mubr.f32.gmra.mxu0 %v1622
        %v1693 = vpop.f32.mrf.mxu0
        %v1694 = vadd.f32 0.0, %v1693
        %v1695 = vpop.f32.mrf.mxu0
        %1696 = vmatprep.mubr.f32.mxu0 0.0
        %1697 = vmatmul.mubr.f32.gmra.mxu0 %v1625
        %v1698 = vpop.f32.mrf.mxu0
        %v1699 = vadd.f32 0.0, %v1698
        %v1700 = vpop.f32.mrf.mxu0
        %1701 = vdwg.mxu0
        %v1702 = vmax.f32 %v1610, %v1694
        %v1703 = vmax.f32 %v1615, %v1699
        %v1704 = vpack.c.bf16 %v1703, %v1702
        %v1705 = vld [vmem:[%s5] sm:$0xff]
        %v1706 = vld [vmem:[%s5 + $0x8] sm:$0xff]
        %v1707 = vld [vmem:[%s5 + $0x10] sm:$0xff]
        %v1708 = vld [vmem:[%s5 + $0x18] sm:$0xff]
        %v1709 = vld [vmem:[%s5 + $0x20] sm:$0xff]
        %v1710 = vld [vmem:[%s5 + $0x28] sm:$0xff]
        %v1711 = vld [vmem:[%s5 + $0x30] sm:$0xff]
        %v1712 = vld [vmem:[%s5 + $0x38] sm:$0xff]
        %v1713 = vld [vmem:[%s5 + $0x40] sm:$0xff]
        %v1714 = vld [vmem:[%s5 + $0x48] sm:$0xff]
        %v1715 = vld [vmem:[%s5 + $0x50] sm:$0xff]
        %v1716 = vld [vmem:[%s5 + $0x58] sm:$0xff]
        %v1717 = vld [vmem:[%s5 + $0x60] sm:$0xff]
        %v1718 = vld [vmem:[%s5 + $0x68] sm:$0xff]
        %s1719 = scalar_lea.vmem %s5, 112
        %v1720 = vld [vmem:[%s1719] sm:$0xff]
        %v1721 = vld [vmem:[%s1719 + $0x8] sm:$0xff]
        %v1722 = vld [vmem:[%s1719 + $0x10] sm:$0xff]
        %v1723 = vld [vmem:[%s1719 + $0x18] sm:$0xff]
        %v1724 = vld [vmem:[%s1719 + $0x20] sm:$0xff]
        %v1725 = vld [vmem:[%s1719 + $0x28] sm:$0xff]
        %v1726 = vld [vmem:[%s1719 + $0x30] sm:$0xff]
        %v1727 = vld [vmem:[%s1719 + $0x38] sm:$0xff]
        %v1728 = vld [vmem:[%s1719 + $0x40] sm:$0xff]
        %v1729 = vld [vmem:[%s1719 + $0x48] sm:$0xff]
        %v1730 = vld [vmem:[%s1719 + $0x50] sm:$0xff]
        %v1731 = vld [vmem:[%s1719 + $0x58] sm:$0xff]
        %v1732 = vld [vmem:[%s1719 + $0x60] sm:$0xff]
        %v1733 = vld [vmem:[%s1719 + $0x68] sm:$0xff]
        %v1735 = vshrl.u32 %v1704, 16
        %v1737 = vshll.u32 %v1704, 16
        %v1739 = vrot.slane %v1737, 1
        %v1740 = vor.u32 %v1735, %v1739
        %v1755 = vunpack.c.l.b16 %v1720
        %v1756 = vunpack.c.h.b16 %v1720
        %v1757 = vunpack.c.l.b16 %v1721
        %v1758 = vunpack.c.h.b16 %v1721
        %v1759 = vunpack.c.l.b16 %v1722
        %v1760 = vunpack.c.h.b16 %v1722
        %v1761 = vunpack.c.l.b16 %v1723
        %v1762 = vunpack.c.h.b16 %v1723
        %v1763 = vunpack.c.l.b16 %v1724
        %v1764 = vunpack.c.h.b16 %v1724
        %v1765 = vunpack.c.l.b16 %v1725
        %v1766 = vunpack.c.h.b16 %v1725
        %v1767 = vunpack.c.l.b16 %v1726
        %v1768 = vunpack.c.h.b16 %v1726
        %v1769 = vunpack.c.l.b16 %v1727
        %v1770 = vunpack.c.h.b16 %v1727
        %v1771 = vunpack.c.l.b16 %v1728
        %v1772 = vunpack.c.h.b16 %v1728
        %v1773 = vunpack.c.l.b16 %v1729
        %v1774 = vunpack.c.h.b16 %v1729
        %v1775 = vunpack.c.l.b16 %v1730
        %v1776 = vunpack.c.h.b16 %v1730
        %v1777 = vunpack.c.l.b16 %v1731
        %v1778 = vunpack.c.h.b16 %v1731
        %v1779 = vunpack.c.l.b16 %v1732
        %v1780 = vunpack.c.h.b16 %v1732
        %v1781 = vunpack.c.l.b16 %v1733
        %v1782 = vunpack.c.h.b16 %v1733
        %v1783 = vpack.c.b16 %v1757, %v1755
        %v1784 = vpack.c.b16 %v1758, %v1756
        %v1785 = vpack.c.b16 %v1761, %v1759
        %v1786 = vpack.c.b16 %v1762, %v1760
        %v1787 = vpack.c.b16 %v1765, %v1763
        %v1788 = vpack.c.b16 %v1766, %v1764
        %v1789 = vpack.c.b16 %v1769, %v1767
        %v1790 = vpack.c.b16 %v1770, %v1768
        %v1791 = vpack.c.b16 %v1773, %v1771
        %v1792 = vpack.c.b16 %v1774, %v1772
        %v1793 = vpack.c.b16 %v1777, %v1775
        %v1794 = vpack.c.b16 %v1778, %v1776
        %v1795 = vpack.c.b16 %v1781, %v1779
        %v1796 = vpack.c.b16 %v1782, %v1780
        %vm1811 = vcmask 916480
        %v1813 = vsel %vm1811, %v1740, 0
        %1815 = vmatprep.subr.bf16.mxu0 0
        %1816 = vmatpush1.bf16.msra.mxu0 0
        %1817 = vmatprep.subr.bf16.mxu0 %v1796
        %1818 = vmatpush1.bf16.msra.mxu0 %v1795
        %1819 = vmatprep.subr.bf16.mxu0 %v1794
        %1820 = vmatpush1.bf16.msra.mxu0 %v1793
        %1821 = vmatprep.subr.bf16.mxu0 %v1792
        %1822 = vmatpush1.bf16.msra.mxu0 %v1791
        %1823 = vmatprep.subr.bf16.mxu0 %v1790
        %1824 = vmatpush1.bf16.msra.mxu0 %v1789
        %1825 = vmatprep.subr.bf16.mxu0 %v1788
        %1826 = vmatpush1.bf16.msra.mxu0 %v1787
        %1827 = vmatprep.subr.bf16.mxu0 %v1786
        %1828 = vmatpush1.bf16.msra.mxu0 %v1785
        %1829 = vmatprep.subr.bf16.mxu0 %v1784
        %1830 = vmatpush1.bf16.msra.mxu0 %v1783
        %1831 = vmatprep.subr.bf16.mxu0 0
        %1832 = vmatpush2.bf16.msra.mxu0 0
        %1833 = vmatprep.subr.bf16.mxu0 0
        %1834 = vmatpush2.bf16.msra.mxu0 0
        %1835 = vmatprep.subr.bf16.mxu0 0
        %1836 = vmatpush2.bf16.msra.mxu0 0
        %1837 = vmatprep.subr.bf16.mxu0 0
        %1838 = vmatpush2.bf16.msra.mxu0 0
        %1839 = vmatprep.subr.bf16.mxu0 0
        %1840 = vmatpush2.bf16.msra.mxu0 0
        %1841 = vmatprep.subr.bf16.mxu0 0
        %1842 = vmatpush2.bf16.msra.mxu0 0
        %1843 = vmatprep.subr.bf16.mxu0 0
        %1844 = vmatpush2.bf16.msra.mxu0 0
        %1845 = vmatprep.subr.bf16.mxu0 0
        %1846 = vmatpush2.bf16.msra.mxu0 0
        %1847 = vmatprep.mubr.bf16.mxu0 0
        %1848 = vmatmul.mubr.bf16.gmra.mxu0 %v1813
        %v1849 = vpop.f32.mrf.mxu0
        %v1850 = vadd.f32 0.0, %v1849
        %v1851 = vpop.f32.mrf.mxu0
        %v1852 = vadd.f32 0.0, %v1851
        %v1853 = vpop.f32.mrf.mxu0
        %v1854 = vadd.f32 0.0, %v1853
        %v1855 = vpop.f32.mrf.mxu0
        %v1856 = vadd.f32 0.0, %v1855
        %1857 = vdwg.mxu0
        %v1872 = vunpack.c.l.b16 %v1705
        %v1873 = vunpack.c.h.b16 %v1705
        %v1874 = vunpack.c.l.b16 %v1706
        %v1875 = vunpack.c.h.b16 %v1706
        %v1876 = vunpack.c.l.b16 %v1707
        %v1877 = vunpack.c.h.b16 %v1707
        %v1878 = vunpack.c.l.b16 %v1708
        %v1879 = vunpack.c.h.b16 %v1708
        %v1880 = vunpack.c.l.b16 %v1709
        %v1881 = vunpack.c.h.b16 %v1709
        %v1882 = vunpack.c.l.b16 %v1710
        %v1883 = vunpack.c.h.b16 %v1710
        %v1884 = vunpack.c.l.b16 %v1711
        %v1885 = vunpack.c.h.b16 %v1711
        %v1886 = vunpack.c.l.b16 %v1712
        %v1887 = vunpack.c.h.b16 %v1712
        %v1888 = vunpack.c.l.b16 %v1713
        %v1889 = vunpack.c.h.b16 %v1713
        %v1890 = vunpack.c.l.b16 %v1714
        %v1891 = vunpack.c.h.b16 %v1714
        %v1892 = vunpack.c.l.b16 %v1715
        %v1893 = vunpack.c.h.b16 %v1715
        %v1894 = vunpack.c.l.b16 %v1716
        %v1895 = vunpack.c.h.b16 %v1716
        %v1896 = vunpack.c.l.b16 %v1717
        %v1897 = vunpack.c.h.b16 %v1717
        %v1898 = vunpack.c.l.b16 %v1718
        %v1899 = vunpack.c.h.b16 %v1718
        %v1900 = vpack.c.b16 %v1874, %v1872
        %v1901 = vpack.c.b16 %v1875, %v1873
        %v1902 = vpack.c.b16 %v1878, %v1876
        %v1903 = vpack.c.b16 %v1879, %v1877
        %v1904 = vpack.c.b16 %v1882, %v1880
        %v1905 = vpack.c.b16 %v1883, %v1881
        %v1906 = vpack.c.b16 %v1886, %v1884
        %v1907 = vpack.c.b16 %v1887, %v1885
        %v1908 = vpack.c.b16 %v1890, %v1888
        %v1909 = vpack.c.b16 %v1891, %v1889
        %v1910 = vpack.c.b16 %v1894, %v1892
        %v1911 = vpack.c.b16 %v1895, %v1893
        %v1912 = vpack.c.b16 %v1898, %v1896
        %v1913 = vpack.c.b16 %v1899, %v1897
        %v1928 = vsel %vm1811, %v1704, 0
        %1930 = vmatprep.subr.bf16.mxu0 0
        %1931 = vmatpush1.bf16.msra.mxu0 0
        %1932 = vmatprep.subr.bf16.mxu0 %v1913
        %1933 = vmatpush1.bf16.msra.mxu0 %v1912
        %1934 = vmatprep.subr.bf16.mxu0 %v1911
        %1935 = vmatpush1.bf16.msra.mxu0 %v1910
        %1936 = vmatprep.subr.bf16.mxu0 %v1909
        %1937 = vmatpush1.bf16.msra.mxu0 %v1908
        %1938 = vmatprep.subr.bf16.mxu0 %v1907
        %1939 = vmatpush1.bf16.msra.mxu0 %v1906
        %1940 = vmatprep.subr.bf16.mxu0 %v1905
        %1941 = vmatpush1.bf16.msra.mxu0 %v1904
        %1942 = vmatprep.subr.bf16.mxu0 %v1903
        %1943 = vmatpush1.bf16.msra.mxu0 %v1902
        %1944 = vmatprep.subr.bf16.mxu0 %v1901
        %1945 = vmatpush1.bf16.msra.mxu0 %v1900
        %1946 = vmatprep.subr.bf16.mxu0 0
        %1947 = vmatpush2.bf16.msra.mxu0 0
        %1948 = vmatprep.subr.bf16.mxu0 0
        %1949 = vmatpush2.bf16.msra.mxu0 0
        %1950 = vmatprep.subr.bf16.mxu0 0
        %1951 = vmatpush2.bf16.msra.mxu0 0
        %1952 = vmatprep.subr.bf16.mxu0 0
        %1953 = vmatpush2.bf16.msra.mxu0 0
        %1954 = vmatprep.subr.bf16.mxu0 0
        %1955 = vmatpush2.bf16.msra.mxu0 0
        %1956 = vmatprep.subr.bf16.mxu0 0
        %1957 = vmatpush2.bf16.msra.mxu0 0
        %1958 = vmatprep.subr.bf16.mxu0 0
        %1959 = vmatpush2.bf16.msra.mxu0 0
        %1960 = vmatprep.subr.bf16.mxu0 0
        %1961 = vmatpush2.bf16.msra.mxu0 0
        %1962 = vmatprep.mubr.bf16.mxu0 0
        %1963 = vmatmul.mubr.bf16.gmra.mxu0 %v1928
        %v1964 = vpop.f32.mrf.mxu0
        %v1965 = vadd.f32 %v1850, %v1964
        %v1966 = vpop.f32.mrf.mxu0
        %v1967 = vadd.f32 %v1852, %v1966
        %v1968 = vpop.f32.mrf.mxu0
        %v1969 = vadd.f32 %v1854, %v1968
        %v1970 = vpop.f32.mrf.mxu0
        %v1971 = vadd.f32 %v1856, %v1970
        %1972 = vdwg.mxu0
        %s1973 = scalar_lea.vmem %s5, 224
        %v1974 = vld [vmem:[%s1973] sm:$0xff]
        %v1975 = vld [vmem:[%s1973 + $0x8] sm:$0xff]
        %v1976 = vld [vmem:[%s1973 + $0x10] sm:$0xff]
        %v1977 = vld [vmem:[%s1973 + $0x18] sm:$0xff]
        %v1978 = vld [vmem:[%s1973 + $0x20] sm:$0xff]
        %v1979 = vld [vmem:[%s1973 + $0x28] sm:$0xff]
        %v1980 = vld [vmem:[%s1973 + $0x30] sm:$0xff]
        %v1981 = vld [vmem:[%s1973 + $0x38] sm:$0xff]
        %v1982 = vld [vmem:[%s1973 + $0x40] sm:$0xff]
        %v1983 = vld [vmem:[%s1973 + $0x48] sm:$0xff]
        %v1984 = vld [vmem:[%s1973 + $0x50] sm:$0xff]
        %v1985 = vld [vmem:[%s1973 + $0x58] sm:$0xff]
        %v1986 = vld [vmem:[%s1973 + $0x60] sm:$0xff]
        %v1987 = vld [vmem:[%s1973 + $0x68] sm:$0xff]
        %v1989 = vrot.slane %v1704, 1
        %v2004 = vunpack.c.l.b16 %v1974
        %v2005 = vunpack.c.h.b16 %v1974
        %v2006 = vunpack.c.l.b16 %v1975
        %v2007 = vunpack.c.h.b16 %v1975
        %v2008 = vunpack.c.l.b16 %v1976
        %v2009 = vunpack.c.h.b16 %v1976
        %v2010 = vunpack.c.l.b16 %v1977
        %v2011 = vunpack.c.h.b16 %v1977
        %v2012 = vunpack.c.l.b16 %v1978
        %v2013 = vunpack.c.h.b16 %v1978
        %v2014 = vunpack.c.l.b16 %v1979
        %v2015 = vunpack.c.h.b16 %v1979
        %v2016 = vunpack.c.l.b16 %v1980
        %v2017 = vunpack.c.h.b16 %v1980
        %v2018 = vunpack.c.l.b16 %v1981
        %v2019 = vunpack.c.h.b16 %v1981
        %v2020 = vunpack.c.l.b16 %v1982
        %v2021 = vunpack.c.h.b16 %v1982
        %v2022 = vunpack.c.l.b16 %v1983
        %v2023 = vunpack.c.h.b16 %v1983
        %v2024 = vunpack.c.l.b16 %v1984
        %v2025 = vunpack.c.h.b16 %v1984
        %v2026 = vunpack.c.l.b16 %v1985
        %v2027 = vunpack.c.h.b16 %v1985
        %v2028 = vunpack.c.l.b16 %v1986
        %v2029 = vunpack.c.h.b16 %v1986
        %v2030 = vunpack.c.l.b16 %v1987
        %v2031 = vunpack.c.h.b16 %v1987
        %v2032 = vpack.c.b16 %v2006, %v2004
        %v2033 = vpack.c.b16 %v2007, %v2005
        %v2034 = vpack.c.b16 %v2010, %v2008
        %v2035 = vpack.c.b16 %v2011, %v2009
        %v2036 = vpack.c.b16 %v2014, %v2012
        %v2037 = vpack.c.b16 %v2015, %v2013
        %v2038 = vpack.c.b16 %v2018, %v2016
        %v2039 = vpack.c.b16 %v2019, %v2017
        %v2040 = vpack.c.b16 %v2022, %v2020
        %v2041 = vpack.c.b16 %v2023, %v2021
        %v2042 = vpack.c.b16 %v2026, %v2024
        %v2043 = vpack.c.b16 %v2027, %v2025
        %v2044 = vpack.c.b16 %v2030, %v2028
        %v2045 = vpack.c.b16 %v2031, %v2029
        %v2061 = vsel %vm1811, %v1989, 0
        %2063 = vmatprep.subr.bf16.mxu0 0
        %2064 = vmatpush1.bf16.msra.mxu0 0
        %2065 = vmatprep.subr.bf16.mxu0 %v2045
        %2066 = vmatpush1.bf16.msra.mxu0 %v2044
        %2067 = vmatprep.subr.bf16.mxu0 %v2043
        %2068 = vmatpush1.bf16.msra.mxu0 %v2042
        %2069 = vmatprep.subr.bf16.mxu0 %v2041
        %2070 = vmatpush1.bf16.msra.mxu0 %v2040
        %2071 = vmatprep.subr.bf16.mxu0 %v2039
        %2072 = vmatpush1.bf16.msra.mxu0 %v2038
        %2073 = vmatprep.subr.bf16.mxu0 %v2037
        %2074 = vmatpush1.bf16.msra.mxu0 %v2036
        %2075 = vmatprep.subr.bf16.mxu0 %v2035
        %2076 = vmatpush1.bf16.msra.mxu0 %v2034
        %2077 = vmatprep.subr.bf16.mxu0 %v2033
        %2078 = vmatpush1.bf16.msra.mxu0 %v2032
        %2079 = vmatprep.subr.bf16.mxu0 0
        %2080 = vmatpush2.bf16.msra.mxu0 0
        %2081 = vmatprep.subr.bf16.mxu0 0
        %2082 = vmatpush2.bf16.msra.mxu0 0
        %2083 = vmatprep.subr.bf16.mxu0 0
        %2084 = vmatpush2.bf16.msra.mxu0 0
        %2085 = vmatprep.subr.bf16.mxu0 0
        %2086 = vmatpush2.bf16.msra.mxu0 0
        %2087 = vmatprep.subr.bf16.mxu0 0
        %2088 = vmatpush2.bf16.msra.mxu0 0
        %2089 = vmatprep.subr.bf16.mxu0 0
        %2090 = vmatpush2.bf16.msra.mxu0 0
        %2091 = vmatprep.subr.bf16.mxu0 0
        %2092 = vmatpush2.bf16.msra.mxu0 0
        %2093 = vmatprep.subr.bf16.mxu0 0
        %2094 = vmatpush2.bf16.msra.mxu0 0
        %2095 = vmatprep.mubr.bf16.mxu0 0
        %2096 = vmatmul.mubr.bf16.gmra.mxu0 %v2061
        %v2097 = vpop.f32.mrf.mxu0
        %v2098 = vadd.f32 0.0, %v2097
        %v2099 = vpop.f32.mrf.mxu0
        %v2100 = vadd.f32 0.0, %v2099
        %v2101 = vpop.f32.mrf.mxu0
        %v2102 = vadd.f32 0.0, %v2101
        %v2103 = vpop.f32.mrf.mxu0
        %v2104 = vadd.f32 0.0, %v2103
        %2105 = vdwg.mxu0
        %v2106 = vadd.f32 %v1965, %v2098
        %v2107 = vadd.f32 %v1967, %v2100
        %v2108 = vadd.f32 %v1969, %v2102
        %v2109 = vadd.f32 %v1971, %v2104
        %s2110 = scalar_lea.vmem %s5, 336
        %v2111 = vld [vmem:[%s2110] sm:$0xff]
        %v2112 = vld [vmem:[%s2110 + $0x8] sm:$0xff]
        %v2113 = vld [vmem:[%s2110 + $0x10] sm:$0xff]
        %v2114 = vld [vmem:[%s2110 + $0x18] sm:$0xff]
        %v2115 = vld [vmem:[%s2110 + $0x20] sm:$0xff]
        %v2116 = vld [vmem:[%s2110 + $0x28] sm:$0xff]
        %v2117 = vld [vmem:[%s2110 + $0x30] sm:$0xff]
        %v2118 = vld [vmem:[%s2110 + $0x38] sm:$0xff]
        %v2119 = vld [vmem:[%s2110 + $0x40] sm:$0xff]
        %v2120 = vld [vmem:[%s2110 + $0x48] sm:$0xff]
        %v2121 = vld [vmem:[%s2110 + $0x50] sm:$0xff]
        %v2122 = vld [vmem:[%s2110 + $0x58] sm:$0xff]
        %v2123 = vld [vmem:[%s2110 + $0x60] sm:$0xff]
        %v2124 = vld [vmem:[%s2110 + $0x68] sm:$0xff]
        %v2125 = vrot.slane %v1735, 1
        %v2126 = vrot.slane %v1737, 2
        %v2127 = vor.u32 %v2125, %v2126
        %v2142 = vunpack.c.l.b16 %v2111
        %v2143 = vunpack.c.h.b16 %v2111
        %v2144 = vunpack.c.l.b16 %v2112
        %v2145 = vunpack.c.h.b16 %v2112
        %v2146 = vunpack.c.l.b16 %v2113
        %v2147 = vunpack.c.h.b16 %v2113
        %v2148 = vunpack.c.l.b16 %v2114
        %v2149 = vunpack.c.h.b16 %v2114
        %v2150 = vunpack.c.l.b16 %v2115
        %v2151 = vunpack.c.h.b16 %v2115
        %v2152 = vunpack.c.l.b16 %v2116
        %v2153 = vunpack.c.h.b16 %v2116
        %v2154 = vunpack.c.l.b16 %v2117
        %v2155 = vunpack.c.h.b16 %v2117
        %v2156 = vunpack.c.l.b16 %v2118
        %v2157 = vunpack.c.h.b16 %v2118
        %v2158 = vunpack.c.l.b16 %v2119
        %v2159 = vunpack.c.h.b16 %v2119
        %v2160 = vunpack.c.l.b16 %v2120
        %v2161 = vunpack.c.h.b16 %v2120
        %v2162 = vunpack.c.l.b16 %v2121
        %v2163 = vunpack.c.h.b16 %v2121
        %v2164 = vunpack.c.l.b16 %v2122
        %v2165 = vunpack.c.h.b16 %v2122
        %v2166 = vunpack.c.l.b16 %v2123
        %v2167 = vunpack.c.h.b16 %v2123
        %v2168 = vunpack.c.l.b16 %v2124
        %v2169 = vunpack.c.h.b16 %v2124
        %v2170 = vpack.c.b16 %v2144, %v2142
        %v2171 = vpack.c.b16 %v2145, %v2143
        %v2172 = vpack.c.b16 %v2148, %v2146
        %v2173 = vpack.c.b16 %v2149, %v2147
        %v2174 = vpack.c.b16 %v2152, %v2150
        %v2175 = vpack.c.b16 %v2153, %v2151
        %v2176 = vpack.c.b16 %v2156, %v2154
        %v2177 = vpack.c.b16 %v2157, %v2155
        %v2178 = vpack.c.b16 %v2160, %v2158
        %v2179 = vpack.c.b16 %v2161, %v2159
        %v2180 = vpack.c.b16 %v2164, %v2162
        %v2181 = vpack.c.b16 %v2165, %v2163
        %v2182 = vpack.c.b16 %v2168, %v2166
        %v2183 = vpack.c.b16 %v2169, %v2167
        %v2199 = vsel %vm1811, %v2127, 0
        %2201 = vmatprep.subr.bf16.mxu0 0
        %2202 = vmatpush1.bf16.msra.mxu0 0
        %2203 = vmatprep.subr.bf16.mxu0 %v2183
        %2204 = vmatpush1.bf16.msra.mxu0 %v2182
        %2205 = vmatprep.subr.bf16.mxu0 %v2181
        %2206 = vmatpush1.bf16.msra.mxu0 %v2180
        %2207 = vmatprep.subr.bf16.mxu0 %v2179
        %2208 = vmatpush1.bf16.msra.mxu0 %v2178
        %2209 = vmatprep.subr.bf16.mxu0 %v2177
        %2210 = vmatpush1.bf16.msra.mxu0 %v2176
        %2211 = vmatprep.subr.bf16.mxu0 %v2175
        %2212 = vmatpush1.bf16.msra.mxu0 %v2174
        %2213 = vmatprep.subr.bf16.mxu0 %v2173
        %2214 = vmatpush1.bf16.msra.mxu0 %v2172
        %2215 = vmatprep.subr.bf16.mxu0 %v2171
        %2216 = vmatpush1.bf16.msra.mxu0 %v2170
        %2217 = vmatprep.subr.bf16.mxu0 0
        %2218 = vmatpush2.bf16.msra.mxu0 0
        %2219 = vmatprep.subr.bf16.mxu0 0
        %2220 = vmatpush2.bf16.msra.mxu0 0
        %2221 = vmatprep.subr.bf16.mxu0 0
        %2222 = vmatpush2.bf16.msra.mxu0 0
        %2223 = vmatprep.subr.bf16.mxu0 0
        %2224 = vmatpush2.bf16.msra.mxu0 0
        %2225 = vmatprep.subr.bf16.mxu0 0
        %2226 = vmatpush2.bf16.msra.mxu0 0
        %2227 = vmatprep.subr.bf16.mxu0 0
        %2228 = vmatpush2.bf16.msra.mxu0 0
        %2229 = vmatprep.subr.bf16.mxu0 0
        %2230 = vmatpush2.bf16.msra.mxu0 0
        %2231 = vmatprep.subr.bf16.mxu0 0
        %2232 = vmatpush2.bf16.msra.mxu0 0
        %2233 = vmatprep.mubr.bf16.mxu0 0
        %2234 = vmatmul.mubr.bf16.gmra.mxu0 %v2199
        %v2235 = vpop.f32.mrf.mxu0
        %v2236 = vadd.f32 0.0, %v2235
        %v2237 = vpop.f32.mrf.mxu0
        %v2238 = vadd.f32 0.0, %v2237
        %v2239 = vpop.f32.mrf.mxu0
        %v2240 = vadd.f32 0.0, %v2239
        %v2241 = vpop.f32.mrf.mxu0
        %v2242 = vadd.f32 0.0, %v2241
        %2243 = vdwg.mxu0
        %v2244 = vadd.f32 %v2106, %v2236
        %v2245 = vadd.f32 %v2107, %v2238
        %v2246 = vadd.f32 %v2108, %v2240
        %v2247 = vadd.f32 %v2109, %v2242
        %s2248 = scalar_lea.vmem %s5, 448
        %v2249 = vld [vmem:[%s2248] sm:$0xff]
        %v2250 = vld [vmem:[%s2248 + $0x8] sm:$0xff]
        %v2251 = vld [vmem:[%s2248 + $0x10] sm:$0xff]
        %v2252 = vld [vmem:[%s2248 + $0x18] sm:$0xff]
        %v2253 = vld [vmem:[%s2248 + $0x20] sm:$0xff]
        %v2254 = vld [vmem:[%s2248 + $0x28] sm:$0xff]
        %v2255 = vld [vmem:[%s2248 + $0x30] sm:$0xff]
        %v2256 = vld [vmem:[%s2248 + $0x38] sm:$0xff]
        %v2257 = vld [vmem:[%s2248 + $0x40] sm:$0xff]
        %v2258 = vld [vmem:[%s2248 + $0x48] sm:$0xff]
        %v2259 = vld [vmem:[%s2248 + $0x50] sm:$0xff]
        %v2260 = vld [vmem:[%s2248 + $0x58] sm:$0xff]
        %v2261 = vld [vmem:[%s2248 + $0x60] sm:$0xff]
        %v2262 = vld [vmem:[%s2248 + $0x68] sm:$0xff]
        %v2263 = vrot.slane %v1704, 2
        %v2278 = vunpack.c.l.b16 %v2249
        %v2279 = vunpack.c.h.b16 %v2249
        %v2280 = vunpack.c.l.b16 %v2250
        %v2281 = vunpack.c.h.b16 %v2250
        %v2282 = vunpack.c.l.b16 %v2251
        %v2283 = vunpack.c.h.b16 %v2251
        %v2284 = vunpack.c.l.b16 %v2252
        %v2285 = vunpack.c.h.b16 %v2252
        %v2286 = vunpack.c.l.b16 %v2253
        %v2287 = vunpack.c.h.b16 %v2253
        %v2288 = vunpack.c.l.b16 %v2254
        %v2289 = vunpack.c.h.b16 %v2254
        %v2290 = vunpack.c.l.b16 %v2255
        %v2291 = vunpack.c.h.b16 %v2255
        %v2292 = vunpack.c.l.b16 %v2256
        %v2293 = vunpack.c.h.b16 %v2256
        %v2294 = vunpack.c.l.b16 %v2257
        %v2295 = vunpack.c.h.b16 %v2257
        %v2296 = vunpack.c.l.b16 %v2258
        %v2297 = vunpack.c.h.b16 %v2258
        %v2298 = vunpack.c.l.b16 %v2259
        %v2299 = vunpack.c.h.b16 %v2259
        %v2300 = vunpack.c.l.b16 %v2260
        %v2301 = vunpack.c.h.b16 %v2260
        %v2302 = vunpack.c.l.b16 %v2261
        %v2303 = vunpack.c.h.b16 %v2261
        %v2304 = vunpack.c.l.b16 %v2262
        %v2305 = vunpack.c.h.b16 %v2262
        %v2306 = vpack.c.b16 %v2280, %v2278
        %v2307 = vpack.c.b16 %v2281, %v2279
        %v2308 = vpack.c.b16 %v2284, %v2282
        %v2309 = vpack.c.b16 %v2285, %v2283
        %v2310 = vpack.c.b16 %v2288, %v2286
        %v2311 = vpack.c.b16 %v2289, %v2287
        %v2312 = vpack.c.b16 %v2292, %v2290
        %v2313 = vpack.c.b16 %v2293, %v2291
        %v2314 = vpack.c.b16 %v2296, %v2294
        %v2315 = vpack.c.b16 %v2297, %v2295
        %v2316 = vpack.c.b16 %v2300, %v2298
        %v2317 = vpack.c.b16 %v2301, %v2299
        %v2318 = vpack.c.b16 %v2304, %v2302
        %v2319 = vpack.c.b16 %v2305, %v2303
        %v2335 = vsel %vm1811, %v2263, 0
        %2337 = vmatprep.subr.bf16.mxu0 0
        %2338 = vmatpush1.bf16.msra.mxu0 0
        %2339 = vmatprep.subr.bf16.mxu0 %v2319
        %2340 = vmatpush1.bf16.msra.mxu0 %v2318
        %2341 = vmatprep.subr.bf16.mxu0 %v2317
        %2342 = vmatpush1.bf16.msra.mxu0 %v2316
        %2343 = vmatprep.subr.bf16.mxu0 %v2315
        %2344 = vmatpush1.bf16.msra.mxu0 %v2314
        %2345 = vmatprep.subr.bf16.mxu0 %v2313
        %2346 = vmatpush1.bf16.msra.mxu0 %v2312
        %2347 = vmatprep.subr.bf16.mxu0 %v2311
        %2348 = vmatpush1.bf16.msra.mxu0 %v2310
        %2349 = vmatprep.subr.bf16.mxu0 %v2309
        %2350 = vmatpush1.bf16.msra.mxu0 %v2308
        %2351 = vmatprep.subr.bf16.mxu0 %v2307
        %2352 = vmatpush1.bf16.msra.mxu0 %v2306
        %2353 = vmatprep.subr.bf16.mxu0 0
        %2354 = vmatpush2.bf16.msra.mxu0 0
        %2355 = vmatprep.subr.bf16.mxu0 0
        %2356 = vmatpush2.bf16.msra.mxu0 0
        %2357 = vmatprep.subr.bf16.mxu0 0
        %2358 = vmatpush2.bf16.msra.mxu0 0
        %2359 = vmatprep.subr.bf16.mxu0 0
        %2360 = vmatpush2.bf16.msra.mxu0 0
        %2361 = vmatprep.subr.bf16.mxu0 0
        %2362 = vmatpush2.bf16.msra.mxu0 0
        %2363 = vmatprep.subr.bf16.mxu0 0
        %2364 = vmatpush2.bf16.msra.mxu0 0
        %2365 = vmatprep.subr.bf16.mxu0 0
        %2366 = vmatpush2.bf16.msra.mxu0 0
        %2367 = vmatprep.subr.bf16.mxu0 0
        %2368 = vmatpush2.bf16.msra.mxu0 0
        %2369 = vmatprep.mubr.bf16.mxu0 0
        %2370 = vmatmul.mubr.bf16.gmra.mxu0 %v2335
        %v2371 = vpop.f32.mrf.mxu0
        %v2372 = vadd.f32 0.0, %v2371
        %v2373 = vpop.f32.mrf.mxu0
        %v2374 = vadd.f32 0.0, %v2373
        %v2375 = vpop.f32.mrf.mxu0
        %v2376 = vadd.f32 0.0, %v2375
        %v2377 = vpop.f32.mrf.mxu0
        %v2378 = vadd.f32 0.0, %v2377
        %2379 = vdwg.mxu0
        %v2380 = vadd.f32 %v2244, %v2372
        %v2381 = vadd.f32 %v2245, %v2374
        %v2382 = vadd.f32 %v2246, %v2376
        %v2383 = vadd.f32 %v2247, %v2378
        %v2384 = vld [vmem:[%s6] sm:$0x3]
        %v2386 = vlaneseq
        %v2387 = vshrl.u32 %v2386, 7
        %v2388 = vsub.s32 0, %v2387
        %v2389 = vrot.slane %v2384, %v2388
        %v2390 = vlaneseq
        %v2391 = vshrl.u32 %v2390, 7
        %v2392 = vsub.s32 1, %v2391
        %v2393 = vrot.slane %v2384, %v2392
        %v2396 = vadd.f32 %v2380, %v2389
        %v2397 = vadd.f32 %v2381, %v2393
        %v2398 = vadd.f32 %v2382, %v2389
        %v2399 = vadd.f32 %v2383, %v2393
        %v2400 = vmax.f32 %v2396, 0.0
        %v2401 = vmax.f32 %v2397, 0.0
        %v2402 = vmax.f32 %v2398, 0.0
        %v2403 = vmax.f32 %v2399, 0.0
        %v2404 = vld [vmem:[%s7] sm:$0xff]
        %v2405 = vld [vmem:[%s7 + $0x8] sm:$0xff]
        %v2406 = vld [vmem:[%s7 + $0x10] sm:$0xff]
        %v2407 = vld [vmem:[%s7 + $0x18] sm:$0xff]
        %v2408 = vld [vmem:[%s7 + $0x20] sm:$0xff]
        %v2409 = vld [vmem:[%s7 + $0x28] sm:$0xff]
        %v2410 = vld [vmem:[%s7 + $0x30] sm:$0xff]
        %v2411 = vld [vmem:[%s7 + $0x38] sm:$0xff]
        %v2412 = vld [vmem:[%s7 + $0x40] sm:$0xff]
        %v2413 = vld [vmem:[%s7 + $0x48] sm:$0xff]
        %v2414 = vld [vmem:[%s7 + $0x50] sm:$0xff]
        %v2415 = vld [vmem:[%s7 + $0x58] sm:$0xff]
        %v2416 = vld [vmem:[%s7 + $0x60] sm:$0xff]
        %v2417 = vld [vmem:[%s7 + $0x68] sm:$0xff]
        %v2418 = vld [vmem:[%s7 + $0x70] sm:$0xff]
        %v2419 = vld [vmem:[%s7 + $0x78] sm:$0xff]
        %v2420 = vld [vmem:[%s7 + $0x80] sm:$0xff]
        %v2421 = vld [vmem:[%s7 + $0x88] sm:$0xff]
        %v2422 = vld [vmem:[%s7 + $0x90] sm:$0xff]
        %v2423 = vld [vmem:[%s7 + $0x98] sm:$0xff]
        %vm2424 = vcmask 261120
        %v2426 = vsel %vm2424, %v2401, 0
        %v2429 = vsel %vm2424, %v2403, 0
        %2431 = vmatprep.subr.mxu0 0.0
        %2432 = vmatpush1.msra.mxu0 %v2419
        %2433 = vmatprep.subr.mxu0 0.0
        %2434 = vmatpush1.msra.mxu0 %v2418
        %2435 = vmatprep.subr.mxu0 0.0
        %2436 = vmatpush1.msra.mxu0 %v2417
        %2437 = vmatprep.subr.mxu0 0.0
        %2438 = vmatpush1.msra.mxu0 %v2416
        %2439 = vmatprep.subr.mxu0 0.0
        %2440 = vmatpush1.msra.mxu0 %v2415
        %2441 = vmatprep.subr.mxu0 0.0
        %2442 = vmatpush1.msra.mxu0 %v2414
        %2443 = vmatprep.subr.mxu0 0.0
        %2444 = vmatpush1.msra.mxu0 %v2413
        %2445 = vmatprep.subr.mxu0 0.0
        %2446 = vmatpush1.msra.mxu0 %v2412
        %2447 = vmatprep.subr.mxu0 0.0
        %2448 = vmatpush1.msra.mxu0 %v2411
        %2449 = vmatprep.subr.mxu0 0.0
        %2450 = vmatpush1.msra.mxu0 %v2410
        %2451 = vmatprep.subr.mxu0 0.0
        %2452 = vmatpush1.msra.mxu0 %v2409
        %2453 = vmatprep.subr.mxu0 0.0
        %2454 = vmatpush1.msra.mxu0 %v2408
        %2455 = vmatprep.subr.mxu0 0.0
        %2456 = vmatpush1.msra.mxu0 %v2407
        %2457 = vmatprep.subr.mxu0 0.0
        %2458 = vmatpush1.msra.mxu0 %v2406
        %2459 = vmatprep.subr.mxu0 0.0
        %2460 = vmatpush1.msra.mxu0 %v2405
        %2461 = vmatprep.subr.mxu0 0.0
        %2462 = vmatpush1.msra.mxu0 %v2404
        %2463 = vmatprep.subr.mxu0 0.0
        %2464 = vmatpush2.msra.mxu0 0.0
        %2465 = vmatprep.subr.mxu0 0.0
        %2466 = vmatpush2.msra.mxu0 0.0
        %2467 = vmatprep.subr.mxu0 0.0
        %2468 = vmatpush2.msra.mxu0 0.0
        %2469 = vmatprep.subr.mxu0 0.0
        %2470 = vmatpush2.msra.mxu0 0.0
        %2471 = vmatprep.subr.mxu0 0.0
        %2472 = vmatpush2.msra.mxu0 0.0
        %2473 = vmatprep.subr.mxu0 0.0
        %2474 = vmatpush2.msra.mxu0 0.0
        %2475 = vmatprep.subr.mxu0 0.0
        %2476 = vmatpush2.msra.mxu0 0.0
        %2477 = vmatprep.subr.mxu0 0.0
        %2478 = vmatpush2.msra.mxu0 0.0
        %2479 = vmatprep.subr.mxu0 0.0
        %2480 = vmatpush2.msra.mxu0 0.0
        %2481 = vmatprep.subr.mxu0 0.0
        %2482 = vmatpush2.msra.mxu0 0.0
        %2483 = vmatprep.subr.mxu0 0.0
        %2484 = vmatpush2.msra.mxu0 0.0
        %2485 = vmatprep.subr.mxu0 0.0
        %2486 = vmatpush2.msra.mxu0 0.0
        %2487 = vmatprep.subr.mxu0 0.0
        %2488 = vmatpush2.msra.mxu0 %v2423
        %2489 = vmatprep.subr.mxu0 0.0
        %2490 = vmatpush2.msra.mxu0 %v2422
        %2491 = vmatprep.subr.mxu0 0.0
        %2492 = vmatpush2.msra.mxu0 %v2421
        %2493 = vmatprep.subr.mxu0 0.0
        %2494 = vmatpush2.msra.mxu0 %v2420
        %2495 = vmatprep.mubr.f32.mxu0 %v2426
        %2496 = vmatmul.mubr.f32.gmra.mxu0 %v2400
        %v2497 = vpop.f32.mrf.mxu0
        %v2498 = vadd.f32 0.0, %v2497
        %v2499 = vpop.f32.mrf.mxu0
        %2500 = vmatprep.mubr.f32.mxu0 %v2429
        %2501 = vmatmul.mubr.f32.gmra.mxu0 %v2402
        %v2502 = vpop.f32.mrf.mxu0
        %v2503 = vadd.f32 0.0, %v2502
        %v2504 = vpop.f32.mrf.mxu0
        %2505 = vdwg.mxu0
        %s2506 = scalar_lea.vmem %s7, 160
        %v2507 = vld [vmem:[%s2506] sm:$0xff]
        %v2508 = vld [vmem:[%s2506 + $0x8] sm:$0xff]
        %v2509 = vld [vmem:[%s2506 + $0x10] sm:$0xff]
        %v2510 = vld [vmem:[%s2506 + $0x18] sm:$0xff]
        %v2511 = vld [vmem:[%s2506 + $0x20] sm:$0xff]
        %v2512 = vld [vmem:[%s2506 + $0x28] sm:$0xff]
        %v2513 = vld [vmem:[%s2506 + $0x30] sm:$0xff]
        %v2514 = vld [vmem:[%s2506 + $0x38] sm:$0xff]
        %v2515 = vld [vmem:[%s2506 + $0x40] sm:$0xff]
        %v2516 = vld [vmem:[%s2506 + $0x48] sm:$0xff]
        %v2517 = vld [vmem:[%s2506 + $0x50] sm:$0xff]
        %v2518 = vld [vmem:[%s2506 + $0x58] sm:$0xff]
        %v2519 = vld [vmem:[%s2506 + $0x60] sm:$0xff]
        %v2520 = vld [vmem:[%s2506 + $0x68] sm:$0xff]
        %v2521 = vld [vmem:[%s2506 + $0x70] sm:$0xff]
        %v2522 = vld [vmem:[%s2506 + $0x78] sm:$0xff]
        %v2523 = vld [vmem:[%s2506 + $0x80] sm:$0xff]
        %v2524 = vld [vmem:[%s2506 + $0x88] sm:$0xff]
        %v2525 = vld [vmem:[%s2506 + $0x90] sm:$0xff]
        %v2526 = vld [vmem:[%s2506 + $0x98] sm:$0xff]
        %2527 = vmatprep.subr.mxu0 0.0
        %2528 = vmatpush1.msra.mxu0 %v2522
        %2529 = vmatprep.subr.mxu0 0.0
        %2530 = vmatpush1.msra.mxu0 %v2521
        %2531 = vmatprep.subr.mxu0 0.0
        %2532 = vmatpush1.msra.mxu0 %v2520
        %2533 = vmatprep.subr.mxu0 0.0
        %2534 = vmatpush1.msra.mxu0 %v2519
        %2535 = vmatprep.subr.mxu0 0.0
        %2536 = vmatpush1.msra.mxu0 %v2518
        %2537 = vmatprep.subr.mxu0 0.0
        %2538 = vmatpush1.msra.mxu0 %v2517
        %2539 = vmatprep.subr.mxu0 0.0
        %2540 = vmatpush1.msra.mxu0 %v2516
        %2541 = vmatprep.subr.mxu0 0.0
        %2542 = vmatpush1.msra.mxu0 %v2515
        %2543 = vmatprep.subr.mxu0 0.0
        %2544 = vmatpush1.msra.mxu0 %v2514
        %2545 = vmatprep.subr.mxu0 0.0
        %2546 = vmatpush1.msra.mxu0 %v2513
        %2547 = vmatprep.subr.mxu0 0.0
        %2548 = vmatpush1.msra.mxu0 %v2512
        %2549 = vmatprep.subr.mxu0 0.0
        %2550 = vmatpush1.msra.mxu0 %v2511
        %2551 = vmatprep.subr.mxu0 0.0
        %2552 = vmatpush1.msra.mxu0 %v2510
        %2553 = vmatprep.subr.mxu0 0.0
        %2554 = vmatpush1.msra.mxu0 %v2509
        %2555 = vmatprep.subr.mxu0 0.0
        %2556 = vmatpush1.msra.mxu0 %v2508
        %2557 = vmatprep.subr.mxu0 0.0
        %2558 = vmatpush1.msra.mxu0 %v2507
        %2559 = vmatprep.subr.mxu0 0.0
        %2560 = vmatpush2.msra.mxu0 0.0
        %2561 = vmatprep.subr.mxu0 0.0
        %2562 = vmatpush2.msra.mxu0 0.0
        %2563 = vmatprep.subr.mxu0 0.0
        %2564 = vmatpush2.msra.mxu0 0.0
        %2565 = vmatprep.subr.mxu0 0.0
        %2566 = vmatpush2.msra.mxu0 0.0
        %2567 = vmatprep.subr.mxu0 0.0
        %2568 = vmatpush2.msra.mxu0 0.0
        %2569 = vmatprep.subr.mxu0 0.0
        %2570 = vmatpush2.msra.mxu0 0.0
        %2571 = vmatprep.subr.mxu0 0.0
        %2572 = vmatpush2.msra.mxu0 0.0
        %2573 = vmatprep.subr.mxu0 0.0
        %2574 = vmatpush2.msra.mxu0 0.0
        %2575 = vmatprep.subr.mxu0 0.0
        %2576 = vmatpush2.msra.mxu0 0.0
        %2577 = vmatprep.subr.mxu0 0.0
        %2578 = vmatpush2.msra.mxu0 0.0
        %2579 = vmatprep.subr.mxu0 0.0
        %2580 = vmatpush2.msra.mxu0 0.0
        %2581 = vmatprep.subr.mxu0 0.0
        %2582 = vmatpush2.msra.mxu0 0.0
        %2583 = vmatprep.subr.mxu0 0.0
        %2584 = vmatpush2.msra.mxu0 %v2526
        %2585 = vmatprep.subr.mxu0 0.0
        %2586 = vmatpush2.msra.mxu0 %v2525
        %2587 = vmatprep.subr.mxu0 0.0
        %2588 = vmatpush2.msra.mxu0 %v2524
        %2589 = vmatprep.subr.mxu0 0.0
        %2590 = vmatpush2.msra.mxu0 %v2523
        %2591 = vmatprep.mubr.f32.mxu0 %v2426
        %2592 = vmatmul.mubr.f32.gmra.mxu0 %v2400
        %v2593 = vpop.f32.mrf.mxu0
        %v2594 = vadd.f32 0.0, %v2593
        %v2595 = vpop.f32.mrf.mxu0
        %2596 = vmatprep.mubr.f32.mxu0 %v2429
        %2597 = vmatmul.mubr.f32.gmra.mxu0 %v2402
        %v2598 = vpop.f32.mrf.mxu0
        %v2599 = vadd.f32 0.0, %v2598
        %v2600 = vpop.f32.mrf.mxu0
        %2601 = vdwg.mxu0
        %v2602 = vmax.f32 %v2498, %v2594
        %v2603 = vmax.f32 %v2503, %v2599
        %v2604 = vld [vmem:[%s8] sm:$0x1f]
        %vm2605 = vcmask 80896
        %v2607 = vsel %vm2605, %v2604, 0
        %vm2609 = vcmask 1041408
        %v2611 = vsel %vm2609, %v2603, 0
        %2613 = vmatprep.subr.mxu0 0.0
        %2614 = vmatpush1.msra.mxu0 0.0
        %2615 = vmatprep.subr.mxu0 0.0
        %2616 = vmatpush1.msra.mxu0 0.0
        %2617 = vmatprep.subr.mxu0 0.0
        %2618 = vmatpush1.msra.mxu0 0.0
        %2619 = vmatprep.subr.mxu0 0.0
        %2620 = vmatpush1.msra.mxu0 0.0
        %2621 = vmatprep.subr.mxu0 0.0
        %2622 = vmatpush1.msra.mxu0 0.0
        %2623 = vmatprep.subr.mxu0 0.0
        %2624 = vmatpush1.msra.mxu0 0.0
        %2625 = vmatprep.subr.mxu0 0.0
        %2626 = vmatpush1.msra.mxu0 0.0
        %2627 = vmatprep.subr.mxu0 0.0
        %2628 = vmatpush1.msra.mxu0 0.0
        %2629 = vmatprep.subr.mxu0 0.0
        %2630 = vmatpush1.msra.mxu0 0.0
        %2631 = vmatprep.subr.mxu0 0.0
        %2632 = vmatpush1.msra.mxu0 0.0
        %2633 = vmatprep.subr.mxu0 0.0
        %2634 = vmatpush1.msra.mxu0 0.0
        %2635 = vmatprep.subr.mxu0 0.0
        %2636 = vmatpush1.msra.mxu0 0.0
        %2637 = vmatprep.subr.mxu0 0.0
        %2638 = vmatpush1.msra.mxu0 0.0
        %2639 = vmatprep.subr.mxu0 0.0
        %2640 = vmatpush1.msra.mxu0 0.0
        %2641 = vmatprep.subr.mxu0 0.0
        %2642 = vmatpush1.msra.mxu0 %v2611
        %2643 = vmatprep.subr.mxu0 0.0
        %2644 = vmatpush1.msra.mxu0 %v2602
        %2645 = vmatprep.subr.mxu0 0.0
        %2646 = vmatpush2.msra.mxu0 0.0
        %2647 = vmatprep.subr.mxu0 0.0
        %2648 = vmatpush2.msra.mxu0 0.0
        %2649 = vmatprep.subr.mxu0 0.0
        %2650 = vmatpush2.msra.mxu0 0.0
        %2651 = vmatprep.subr.mxu0 0.0
        %2652 = vmatpush2.msra.mxu0 0.0
        %2653 = vmatprep.subr.mxu0 0.0
        %2654 = vmatpush2.msra.mxu0 0.0
        %2655 = vmatprep.subr.mxu0 0.0
        %2656 = vmatpush2.msra.mxu0 0.0
        %2657 = vmatprep.subr.mxu0 0.0
        %2658 = vmatpush2.msra.mxu0 0.0
        %2659 = vmatprep.subr.mxu0 0.0
        %2660 = vmatpush2.msra.mxu0 0.0
        %2661 = vmatprep.subr.mxu0 0.0
        %2662 = vmatpush2.msra.mxu0 0.0
        %2663 = vmatprep.subr.mxu0 0.0
        %2664 = vmatpush2.msra.mxu0 0.0
        %2665 = vmatprep.subr.mxu0 0.0
        %2666 = vmatpush2.msra.mxu0 0.0
        %2667 = vmatprep.subr.mxu0 0.0
        %2668 = vmatpush2.msra.mxu0 0.0
        %2669 = vmatprep.subr.mxu0 0.0
        %2670 = vmatpush2.msra.mxu0 0.0
        %2671 = vmatprep.subr.mxu0 0.0
        %2672 = vmatpush2.msra.mxu0 0.0
        %2673 = vmatprep.subr.mxu0 0.0
        %2674 = vmatpush2.msra.mxu0 0.0
        %2675 = vmatprep.subr.mxu0 0.0
        %2676 = vmatpush2.msra.mxu0 0.0
        %2677 = vmatprep.mubr.f32.mxu0 0.0
        %2678 = vmatmul.mubr.f32.gmra.mxu0 %v2607
        %v2679 = vpop.f32.mrf.mxu0
        %v2680 = vadd.f32 0.0, %v2679
        %v2681 = vpop.f32.mrf.mxu0
        %2682 = vdwg.mxu0
        %s2683 = scalar_lea.vmem %s8, 8
        %v2684 = vld [vmem:[%s2683] sm:$0x1f]
        %v2686 = vsel %vm2605, %v2684, 0
        %2688 = vmatprep.subr.mxu0 0.0
        %2689 = vmatpush1.msra.mxu0 0.0
        %2690 = vmatprep.subr.mxu0 0.0
        %2691 = vmatpush1.msra.mxu0 0.0
        %2692 = vmatprep.subr.mxu0 0.0
        %2693 = vmatpush1.msra.mxu0 0.0
        %2694 = vmatprep.subr.mxu0 0.0
        %2695 = vmatpush1.msra.mxu0 0.0
        %2696 = vmatprep.subr.mxu0 0.0
        %2697 = vmatpush1.msra.mxu0 0.0
        %2698 = vmatprep.subr.mxu0 0.0
        %2699 = vmatpush1.msra.mxu0 0.0
        %2700 = vmatprep.subr.mxu0 0.0
        %2701 = vmatpush1.msra.mxu0 0.0
        %2702 = vmatprep.subr.mxu0 0.0
        %2703 = vmatpush1.msra.mxu0 0.0
        %2704 = vmatprep.subr.mxu0 0.0
        %2705 = vmatpush1.msra.mxu0 0.0
        %2706 = vmatprep.subr.mxu0 0.0
        %2707 = vmatpush1.msra.mxu0 0.0
        %2708 = vmatprep.subr.mxu0 0.0
        %2709 = vmatpush1.msra.mxu0 0.0
        %2710 = vmatprep.subr.mxu0 0.0
        %2711 = vmatpush1.msra.mxu0 0.0
        %2712 = vmatprep.subr.mxu0 0.0
        %2713 = vmatpush1.msra.mxu0 0.0
        %2714 = vmatprep.subr.mxu0 0.0
        %2715 = vmatpush1.msra.mxu0 0.0
        %2716 = vmatprep.subr.mxu0 0.0
        %2717 = vmatpush1.msra.mxu0 %v2611
        %2718 = vmatprep.subr.mxu0 0.0
        %2719 = vmatpush1.msra.mxu0 %v2602
        %2720 = vmatprep.subr.mxu0 0.0
        %2721 = vmatpush2.msra.mxu0 0.0
        %2722 = vmatprep.subr.mxu0 0.0
        %2723 = vmatpush2.msra.mxu0 0.0
        %2724 = vmatprep.subr.mxu0 0.0
        %2725 = vmatpush2.msra.mxu0 0.0
        %2726 = vmatprep.subr.mxu0 0.0
        %2727 = vmatpush2.msra.mxu0 0.0
        %2728 = vmatprep.subr.mxu0 0.0
        %2729 = vmatpush2.msra.mxu0 0.0
        %2730 = vmatprep.subr.mxu0 0.0
        %2731 = vmatpush2.msra.mxu0 0.0
        %2732 = vmatprep.subr.mxu0 0.0
        %2733 = vmatpush2.msra.mxu0 0.0
        %2734 = vmatprep.subr.mxu0 0.0
        %2735 = vmatpush2.msra.mxu0 0.0
        %2736 = vmatprep.subr.mxu0 0.0
        %2737 = vmatpush2.msra.mxu0 0.0
        %2738 = vmatprep.subr.mxu0 0.0
        %2739 = vmatpush2.msra.mxu0 0.0
        %2740 = vmatprep.subr.mxu0 0.0
        %2741 = vmatpush2.msra.mxu0 0.0
        %2742 = vmatprep.subr.mxu0 0.0
        %2743 = vmatpush2.msra.mxu0 0.0
        %2744 = vmatprep.subr.mxu0 0.0
        %2745 = vmatpush2.msra.mxu0 0.0
        %2746 = vmatprep.subr.mxu0 0.0
        %2747 = vmatpush2.msra.mxu0 0.0
        %2748 = vmatprep.subr.mxu0 0.0
        %2749 = vmatpush2.msra.mxu0 0.0
        %2750 = vmatprep.subr.mxu0 0.0
        %2751 = vmatpush2.msra.mxu0 0.0
        %2752 = vmatprep.mubr.f32.mxu0 0.0
        %2753 = vmatmul.mubr.f32.gmra.mxu0 %v2686
        %v2754 = vpop.f32.mrf.mxu0
        %v2755 = vadd.f32 0.0, %v2754
        %v2756 = vpop.f32.mrf.mxu0
        %2757 = vdwg.mxu0
        %v2758 = vmax.f32 %v2680, %v2755
        %v2759 = vpack.c.bf16 %v2758, %v2758
        %v2760 = vld [vmem:[#allocation2] sm:$0xf]
        %v2761 = vld [vmem:[#allocation2 + $0x4] sm:$0xf]
        %v2762 = vld [vmem:[#allocation2 + $0x8] sm:$0xf]
        %v2763 = vld [vmem:[#allocation2 + $0xc] sm:$0xf]
        %v2764 = vld [vmem:[#allocation2 + $0x10] sm:$0xf]
        %v2765 = vld [vmem:[#allocation2 + $0x14] sm:$0xf]
        %v2766 = vld [vmem:[#allocation2 + $0x18] sm:$0xf]
        %v2767 = vld [vmem:[#allocation2 + $0x1c] sm:$0xf]
        %v2768 = vld [vmem:[#allocation2 + $0x20] sm:$0xf]
        %v2769 = vld [vmem:[#allocation2 + $0x24] sm:$0xf]
        %s2770 = scalar_lea.vmem [#allocation2], 40
        %v2771 = vld [vmem:[%s2770] sm:$0xf]
        %v2772 = vld [vmem:[%s2770 + $0x4] sm:$0xf]
        %v2773 = vld [vmem:[%s2770 + $0x8] sm:$0xf]
        %v2774 = vld [vmem:[%s2770 + $0xc] sm:$0xf]
        %v2775 = vld [vmem:[%s2770 + $0x10] sm:$0xf]
        %v2776 = vld [vmem:[%s2770 + $0x14] sm:$0xf]
        %v2777 = vld [vmem:[%s2770 + $0x18] sm:$0xf]
        %v2778 = vld [vmem:[%s2770 + $0x1c] sm:$0xf]
        %v2779 = vld [vmem:[%s2770 + $0x20] sm:$0xf]
        %v2780 = vld [vmem:[%s2770 + $0x24] sm:$0xf]
        %v2782 = vshrl.u32 %v2759, 16
        %v2794 = vunpack.c.l.b16 %v2771
        %v2795 = vunpack.c.l.b16 %v2772
        %v2796 = vunpack.c.l.b16 %v2773
        %v2797 = vunpack.c.l.b16 %v2774
        %v2798 = vunpack.c.l.b16 %v2775
        %v2799 = vunpack.c.l.b16 %v2776
        %v2800 = vunpack.c.l.b16 %v2777
        %v2801 = vunpack.c.l.b16 %v2778
        %v2802 = vunpack.c.l.b16 %v2779
        %v2803 = vunpack.c.l.b16 %v2780
        %v2804 = vpack.c.b16 %v2795, %v2794
        %v2805 = vpack.c.b16 %v2797, %v2796
        %v2806 = vpack.c.b16 %v2799, %v2798
        %v2807 = vpack.c.b16 %v2801, %v2800
        %v2808 = vpack.c.b16 %v2803, %v2802
        %vm2814 = vcmask 654336
        %v2816 = vsel %vm2814, %v2782, 0
        %2818 = vmatprep.subr.bf16.mxu0 0
        %2819 = vmatpush1.bf16.msra.mxu0 0
        %2820 = vmatprep.subr.bf16.mxu0 0
        %2821 = vmatpush1.bf16.msra.mxu0 0
        %2822 = vmatprep.subr.bf16.mxu0 0
        %2823 = vmatpush1.bf16.msra.mxu0 0
        %2824 = vmatprep.subr.bf16.mxu0 0
        %2825 = vmatpush1.bf16.msra.mxu0 %v2808
        %2826 = vmatprep.subr.bf16.mxu0 0
        %2827 = vmatpush1.bf16.msra.mxu0 %v2807
        %2828 = vmatprep.subr.bf16.mxu0 0
        %2829 = vmatpush1.bf16.msra.mxu0 %v2806
        %2830 = vmatprep.subr.bf16.mxu0 0
        %2831 = vmatpush1.bf16.msra.mxu0 %v2805
        %2832 = vmatprep.subr.bf16.mxu0 0
        %2833 = vmatpush1.bf16.msra.mxu0 %v2804
        %2834 = vmatprep.subr.bf16.mxu0 0
        %2835 = vmatpush2.bf16.msra.mxu0 0
        %2836 = vmatprep.subr.bf16.mxu0 0
        %2837 = vmatpush2.bf16.msra.mxu0 0
        %2838 = vmatprep.subr.bf16.mxu0 0
        %2839 = vmatpush2.bf16.msra.mxu0 0
        %2840 = vmatprep.subr.bf16.mxu0 0
        %2841 = vmatpush2.bf16.msra.mxu0 0
        %2842 = vmatprep.subr.bf16.mxu0 0
        %2843 = vmatpush2.bf16.msra.mxu0 0
        %2844 = vmatprep.subr.bf16.mxu0 0
        %2845 = vmatpush2.bf16.msra.mxu0 0
        %2846 = vmatprep.subr.bf16.mxu0 0
        %2847 = vmatpush2.bf16.msra.mxu0 0
        %2848 = vmatprep.subr.bf16.mxu0 0
        %2849 = vmatpush2.bf16.msra.mxu0 0
        %2850 = vmatprep.mubr.bf16.mxu0 0
        %2851 = vmatmul.mubr.bf16.gmra.mxu0 %v2816
        %v2852 = vpop.f32.mrf.mxu0
        %v2853 = vadd.f32 0.0, %v2852
        %v2854 = vpop.f32.mrf.mxu0
        %v2855 = vpop.f32.mrf.mxu0
        %v2856 = vpop.f32.mrf.mxu0
        %2857 = vdwg.mxu0
        %v2868 = vunpack.c.l.b16 %v2760
        %v2869 = vunpack.c.l.b16 %v2761
        %v2870 = vunpack.c.l.b16 %v2762
        %v2871 = vunpack.c.l.b16 %v2763
        %v2872 = vunpack.c.l.b16 %v2764
        %v2873 = vunpack.c.l.b16 %v2765
        %v2874 = vunpack.c.l.b16 %v2766
        %v2875 = vunpack.c.l.b16 %v2767
        %v2876 = vunpack.c.l.b16 %v2768
        %v2877 = vunpack.c.l.b16 %v2769
        %v2878 = vpack.c.b16 %v2869, %v2868
        %v2879 = vpack.c.b16 %v2871, %v2870
        %v2880 = vpack.c.b16 %v2873, %v2872
        %v2881 = vpack.c.b16 %v2875, %v2874
        %v2882 = vpack.c.b16 %v2877, %v2876
        %v2888 = vsel %vm2814, %v2759, 0
        %2890 = vmatprep.subr.bf16.mxu0 0
        %2891 = vmatpush1.bf16.msra.mxu0 0
        %2892 = vmatprep.subr.bf16.mxu0 0
        %2893 = vmatpush1.bf16.msra.mxu0 0
        %2894 = vmatprep.subr.bf16.mxu0 0
        %2895 = vmatpush1.bf16.msra.mxu0 0
        %2896 = vmatprep.subr.bf16.mxu0 0
        %2897 = vmatpush1.bf16.msra.mxu0 %v2882
        %2898 = vmatprep.subr.bf16.mxu0 0
        %2899 = vmatpush1.bf16.msra.mxu0 %v2881
        %2900 = vmatprep.subr.bf16.mxu0 0
        %2901 = vmatpush1.bf16.msra.mxu0 %v2880
        %2902 = vmatprep.subr.bf16.mxu0 0
        %2903 = vmatpush1.bf16.msra.mxu0 %v2879
        %2904 = vmatprep.subr.bf16.mxu0 0
        %2905 = vmatpush1.bf16.msra.mxu0 %v2878
        %2906 = vmatprep.subr.bf16.mxu0 0
        %2907 = vmatpush2.bf16.msra.mxu0 0
        %2908 = vmatprep.subr.bf16.mxu0 0
        %2909 = vmatpush2.bf16.msra.mxu0 0
        %2910 = vmatprep.subr.bf16.mxu0 0
        %2911 = vmatpush2.bf16.msra.mxu0 0
        %2912 = vmatprep.subr.bf16.mxu0 0
        %2913 = vmatpush2.bf16.msra.mxu0 0
        %2914 = vmatprep.subr.bf16.mxu0 0
        %2915 = vmatpush2.bf16.msra.mxu0 0
        %2916 = vmatprep.subr.bf16.mxu0 0
        %2917 = vmatpush2.bf16.msra.mxu0 0
        %2918 = vmatprep.subr.bf16.mxu0 0
        %2919 = vmatpush2.bf16.msra.mxu0 0
        %2920 = vmatprep.subr.bf16.mxu0 0
        %2921 = vmatpush2.bf16.msra.mxu0 0
        %2922 = vmatprep.mubr.bf16.mxu0 0
        %2923 = vmatmul.mubr.bf16.gmra.mxu0 %v2888
        %v2924 = vpop.f32.mrf.mxu0
        %v2925 = vadd.f32 %v2853, %v2924
        %v2926 = vpop.f32.mrf.mxu0
        %v2927 = vpop.f32.mrf.mxu0
        %v2928 = vpop.f32.mrf.mxu0
        %2929 = vdwg.mxu0
        %s2930 = scalar_lea.vmem [#allocation2], 80
        %v2931 = vld [vmem:[%s2930] sm:$0xf]
        %v2932 = vld [vmem:[%s2930 + $0x4] sm:$0xf]
        %v2933 = vld [vmem:[%s2930 + $0x8] sm:$0xf]
        %v2934 = vld [vmem:[%s2930 + $0xc] sm:$0xf]
        %v2935 = vld [vmem:[%s2930 + $0x10] sm:$0xf]
        %v2936 = vld [vmem:[%s2930 + $0x14] sm:$0xf]
        %v2937 = vld [vmem:[%s2930 + $0x18] sm:$0xf]
        %v2938 = vld [vmem:[%s2930 + $0x1c] sm:$0xf]
        %v2939 = vld [vmem:[%s2930 + $0x20] sm:$0xf]
        %v2940 = vld [vmem:[%s2930 + $0x24] sm:$0xf]
        %v2942 = vrot.slane %v2759, 1
        %v2953 = vunpack.c.l.b16 %v2931
        %v2954 = vunpack.c.l.b16 %v2932
        %v2955 = vunpack.c.l.b16 %v2933
        %v2956 = vunpack.c.l.b16 %v2934
        %v2957 = vunpack.c.l.b16 %v2935
        %v2958 = vunpack.c.l.b16 %v2936
        %v2959 = vunpack.c.l.b16 %v2937
        %v2960 = vunpack.c.l.b16 %v2938
        %v2961 = vunpack.c.l.b16 %v2939
        %v2962 = vunpack.c.l.b16 %v2940
        %v2963 = vpack.c.b16 %v2954, %v2953
        %v2964 = vpack.c.b16 %v2956, %v2955
        %v2965 = vpack.c.b16 %v2958, %v2957
        %v2966 = vpack.c.b16 %v2960, %v2959
        %v2967 = vpack.c.b16 %v2962, %v2961
        %v2974 = vsel %vm2814, %v2942, 0
        %2976 = vmatprep.subr.bf16.mxu0 0
        %2977 = vmatpush1.bf16.msra.mxu0 0
        %2978 = vmatprep.subr.bf16.mxu0 0
        %2979 = vmatpush1.bf16.msra.mxu0 0
        %2980 = vmatprep.subr.bf16.mxu0 0
        %2981 = vmatpush1.bf16.msra.mxu0 0
        %2982 = vmatprep.subr.bf16.mxu0 0
        %2983 = vmatpush1.bf16.msra.mxu0 %v2967
        %2984 = vmatprep.subr.bf16.mxu0 0
        %2985 = vmatpush1.bf16.msra.mxu0 %v2966
        %2986 = vmatprep.subr.bf16.mxu0 0
        %2987 = vmatpush1.bf16.msra.mxu0 %v2965
        %2988 = vmatprep.subr.bf16.mxu0 0
        %2989 = vmatpush1.bf16.msra.mxu0 %v2964
        %2990 = vmatprep.subr.bf16.mxu0 0
        %2991 = vmatpush1.bf16.msra.mxu0 %v2963
        %2992 = vmatprep.subr.bf16.mxu0 0
        %2993 = vmatpush2.bf16.msra.mxu0 0
        %2994 = vmatprep.subr.bf16.mxu0 0
        %2995 = vmatpush2.bf16.msra.mxu0 0
        %2996 = vmatprep.subr.bf16.mxu0 0
        %2997 = vmatpush2.bf16.msra.mxu0 0
        %2998 = vmatprep.subr.bf16.mxu0 0
        %2999 = vmatpush2.bf16.msra.mxu0 0
        %3000 = vmatprep.subr.bf16.mxu0 0
        %3001 = vmatpush2.bf16.msra.mxu0 0
        %3002 = vmatprep.subr.bf16.mxu0 0
        %3003 = vmatpush2.bf16.msra.mxu0 0
        %3004 = vmatprep.subr.bf16.mxu0 0
        %3005 = vmatpush2.bf16.msra.mxu0 0
        %3006 = vmatprep.subr.bf16.mxu0 0
        %3007 = vmatpush2.bf16.msra.mxu0 0
        %3008 = vmatprep.mubr.bf16.mxu0 0
        %3009 = vmatmul.mubr.bf16.gmra.mxu0 %v2974
        %v3010 = vpop.f32.mrf.mxu0
        %v3011 = vadd.f32 0.0, %v3010
        %v3012 = vpop.f32.mrf.mxu0
        %v3013 = vpop.f32.mrf.mxu0
        %v3014 = vpop.f32.mrf.mxu0
        %3015 = vdwg.mxu0
        %v3016 = vadd.f32 %v2925, %v3011
        %s3017 = scalar_lea.vmem [#allocation2], 120
        %v3018 = vld [vmem:[%s3017] sm:$0xf]
        %v3019 = vld [vmem:[%s3017 + $0x4] sm:$0xf]
        %v3020 = vld [vmem:[%s3017 + $0x8] sm:$0xf]
        %v3021 = vld [vmem:[%s3017 + $0xc] sm:$0xf]
        %v3022 = vld [vmem:[%s3017 + $0x10] sm:$0xf]
        %v3023 = vld [vmem:[%s3017 + $0x14] sm:$0xf]
        %v3024 = vld [vmem:[%s3017 + $0x18] sm:$0xf]
        %v3025 = vld [vmem:[%s3017 + $0x1c] sm:$0xf]
        %v3026 = vld [vmem:[%s3017 + $0x20] sm:$0xf]
        %v3027 = vld [vmem:[%s3017 + $0x24] sm:$0xf]
        %v3028 = vrot.slane %v2782, 1
        %v3039 = vunpack.c.l.b16 %v3018
        %v3040 = vunpack.c.l.b16 %v3019
        %v3041 = vunpack.c.l.b16 %v3020
        %v3042 = vunpack.c.l.b16 %v3021
        %v3043 = vunpack.c.l.b16 %v3022
        %v3044 = vunpack.c.l.b16 %v3023
        %v3045 = vunpack.c.l.b16 %v3024
        %v3046 = vunpack.c.l.b16 %v3025
        %v3047 = vunpack.c.l.b16 %v3026
        %v3048 = vunpack.c.l.b16 %v3027
        %v3049 = vpack.c.b16 %v3040, %v3039
        %v3050 = vpack.c.b16 %v3042, %v3041
        %v3051 = vpack.c.b16 %v3044, %v3043
        %v3052 = vpack.c.b16 %v3046, %v3045
        %v3053 = vpack.c.b16 %v3048, %v3047
        %v3060 = vsel %vm2814, %v3028, 0
        %3062 = vmatprep.subr.bf16.mxu0 0
        %3063 = vmatpush1.bf16.msra.mxu0 0
        %3064 = vmatprep.subr.bf16.mxu0 0
        %3065 = vmatpush1.bf16.msra.mxu0 0
        %3066 = vmatprep.subr.bf16.mxu0 0
        %3067 = vmatpush1.bf16.msra.mxu0 0
        %3068 = vmatprep.subr.bf16.mxu0 0
        %3069 = vmatpush1.bf16.msra.mxu0 %v3053
        %3070 = vmatprep.subr.bf16.mxu0 0
        %3071 = vmatpush1.bf16.msra.mxu0 %v3052
        %3072 = vmatprep.subr.bf16.mxu0 0
        %3073 = vmatpush1.bf16.msra.mxu0 %v3051
        %3074 = vmatprep.subr.bf16.mxu0 0
        %3075 = vmatpush1.bf16.msra.mxu0 %v3050
        %3076 = vmatprep.subr.bf16.mxu0 0
        %3077 = vmatpush1.bf16.msra.mxu0 %v3049
        %3078 = vmatprep.subr.bf16.mxu0 0
        %3079 = vmatpush2.bf16.msra.mxu0 0
        %3080 = vmatprep.subr.bf16.mxu0 0
        %3081 = vmatpush2.bf16.msra.mxu0 0
        %3082 = vmatprep.subr.bf16.mxu0 0
        %3083 = vmatpush2.bf16.msra.mxu0 0
        %3084 = vmatprep.subr.bf16.mxu0 0
        %3085 = vmatpush2.bf16.msra.mxu0 0
        %3086 = vmatprep.subr.bf16.mxu0 0
        %3087 = vmatpush2.bf16.msra.mxu0 0
        %3088 = vmatprep.subr.bf16.mxu0 0
        %3089 = vmatpush2.bf16.msra.mxu0 0
        %3090 = vmatprep.subr.bf16.mxu0 0
        %3091 = vmatpush2.bf16.msra.mxu0 0
        %3092 = vmatprep.subr.bf16.mxu0 0
        %3093 = vmatpush2.bf16.msra.mxu0 0
        %3094 = vmatprep.mubr.bf16.mxu0 0
        %3095 = vmatmul.mubr.bf16.gmra.mxu0 %v3060
        %v3096 = vpop.f32.mrf.mxu0
        %v3097 = vadd.f32 0.0, %v3096
        %v3098 = vpop.f32.mrf.mxu0
        %v3099 = vpop.f32.mrf.mxu0
        %v3100 = vpop.f32.mrf.mxu0
        %3101 = vdwg.mxu0
        %v3102 = vadd.f32 %v3016, %v3097
        %s3103 = scalar_lea.vmem [#allocation2], 160
        %v3104 = vld [vmem:[%s3103] sm:$0xf]
        %v3105 = vld [vmem:[%s3103 + $0x4] sm:$0xf]
        %v3106 = vld [vmem:[%s3103 + $0x8] sm:$0xf]
        %v3107 = vld [vmem:[%s3103 + $0xc] sm:$0xf]
        %v3108 = vld [vmem:[%s3103 + $0x10] sm:$0xf]
        %v3109 = vld [vmem:[%s3103 + $0x14] sm:$0xf]
        %v3110 = vld [vmem:[%s3103 + $0x18] sm:$0xf]
        %v3111 = vld [vmem:[%s3103 + $0x1c] sm:$0xf]
        %v3112 = vld [vmem:[%s3103 + $0x20] sm:$0xf]
        %v3113 = vld [vmem:[%s3103 + $0x24] sm:$0xf]
        %v3114 = vrot.slane %v2759, 2
        %v3125 = vunpack.c.l.b16 %v3104
        %v3126 = vunpack.c.l.b16 %v3105
        %v3127 = vunpack.c.l.b16 %v3106
        %v3128 = vunpack.c.l.b16 %v3107
        %v3129 = vunpack.c.l.b16 %v3108
        %v3130 = vunpack.c.l.b16 %v3109
        %v3131 = vunpack.c.l.b16 %v3110
        %v3132 = vunpack.c.l.b16 %v3111
        %v3133 = vunpack.c.l.b16 %v3112
        %v3134 = vunpack.c.l.b16 %v3113
        %v3135 = vpack.c.b16 %v3126, %v3125
        %v3136 = vpack.c.b16 %v3128, %v3127
        %v3137 = vpack.c.b16 %v3130, %v3129
        %v3138 = vpack.c.b16 %v3132, %v3131
        %v3139 = vpack.c.b16 %v3134, %v3133
        %v3146 = vsel %vm2814, %v3114, 0
        %3148 = vmatprep.subr.bf16.mxu0 0
        %3149 = vmatpush1.bf16.msra.mxu0 0
        %3150 = vmatprep.subr.bf16.mxu0 0
        %3151 = vmatpush1.bf16.msra.mxu0 0
        %3152 = vmatprep.subr.bf16.mxu0 0
        %3153 = vmatpush1.bf16.msra.mxu0 0
        %3154 = vmatprep.subr.bf16.mxu0 0
        %3155 = vmatpush1.bf16.msra.mxu0 %v3139
        %3156 = vmatprep.subr.bf16.mxu0 0
        %3157 = vmatpush1.bf16.msra.mxu0 %v3138
        %3158 = vmatprep.subr.bf16.mxu0 0
        %3159 = vmatpush1.bf16.msra.mxu0 %v3137
        %3160 = vmatprep.subr.bf16.mxu0 0
        %3161 = vmatpush1.bf16.msra.mxu0 %v3136
        %3162 = vmatprep.subr.bf16.mxu0 0
        %3163 = vmatpush1.bf16.msra.mxu0 %v3135
        %3164 = vmatprep.subr.bf16.mxu0 0
        %3165 = vmatpush2.bf16.msra.mxu0 0
        %3166 = vmatprep.subr.bf16.mxu0 0
        %3167 = vmatpush2.bf16.msra.mxu0 0
        %3168 = vmatprep.subr.bf16.mxu0 0
        %3169 = vmatpush2.bf16.msra.mxu0 0
        %3170 = vmatprep.subr.bf16.mxu0 0
        %3171 = vmatpush2.bf16.msra.mxu0 0
        %3172 = vmatprep.subr.bf16.mxu0 0
        %3173 = vmatpush2.bf16.msra.mxu0 0
        %3174 = vmatprep.subr.bf16.mxu0 0
        %3175 = vmatpush2.bf16.msra.mxu0 0
        %3176 = vmatprep.subr.bf16.mxu0 0
        %3177 = vmatpush2.bf16.msra.mxu0 0
        %3178 = vmatprep.subr.bf16.mxu0 0
        %3179 = vmatpush2.bf16.msra.mxu0 0
        %3180 = vmatprep.mubr.bf16.mxu0 0
        %3181 = vmatmul.mubr.bf16.gmra.mxu0 %v3146
        %v3182 = vpop.f32.mrf.mxu0
        %v3183 = vadd.f32 0.0, %v3182
        %v3184 = vpop.f32.mrf.mxu0
        %v3185 = vpop.f32.mrf.mxu0
        %v3186 = vpop.f32.mrf.mxu0
        %3187 = vdwg.mxu0
        %v3188 = vadd.f32 %v3102, %v3183
        %v3189 = vld [vmem:[%s10] sm:$0x1]
        %v3190 = vadd.f32 %v3188, %v3189
        %v3191 = vmax.f32 %v3190, 0.0
        %v3192 = vpack.c.bf16 %v3191, %v3191
        %v3193 = vld [vmem:[#allocation5] sm:$0xf]
        %v3194 = vld [vmem:[#allocation5 + $0x4] sm:$0xf]
        %v3195 = vld [vmem:[#allocation5 + $0x8] sm:$0xf]
        %v3196 = vld [vmem:[#allocation5 + $0xc] sm:$0xf]
        %v3197 = vld [vmem:[#allocation5 + $0x10] sm:$0xf]
        %v3198 = vld [vmem:[#allocation5 + $0x14] sm:$0xf]
        %v3199 = vld [vmem:[#allocation5 + $0x18] sm:$0xf]
        %v3200 = vld [vmem:[#allocation5 + $0x1c] sm:$0xf]
        %v3201 = vld [vmem:[#allocation5 + $0x20] sm:$0xf]
        %v3202 = vld [vmem:[#allocation5 + $0x24] sm:$0xf]
        %v3203 = vld [vmem:[#allocation5 + $0x28] sm:$0xf]
        %v3204 = vld [vmem:[#allocation5 + $0x2c] sm:$0xf]
        %v3205 = vld [vmem:[#allocation5 + $0x30] sm:$0xf]
        %v3206 = vld [vmem:[#allocation5 + $0x34] sm:$0xf]
        %v3207 = vld [vmem:[#allocation5 + $0x38] sm:$0xf]
        %v3208 = vld [vmem:[#allocation5 + $0x3c] sm:$0xf]
        %v3209 = vld [vmem:[%s12] sm:$0x1]
        %v3226 = vunpack.c.l.b16 %v3193
        %v3227 = vunpack.c.l.b16 %v3194
        %v3228 = vunpack.c.l.b16 %v3195
        %v3229 = vunpack.c.l.b16 %v3196
        %v3230 = vunpack.c.l.b16 %v3197
        %v3231 = vunpack.c.l.b16 %v3198
        %v3232 = vunpack.c.l.b16 %v3199
        %v3233 = vunpack.c.l.b16 %v3200
        %v3234 = vunpack.c.l.b16 %v3201
        %v3235 = vunpack.c.l.b16 %v3202
        %v3236 = vunpack.c.l.b16 %v3203
        %v3237 = vunpack.c.l.b16 %v3204
        %v3238 = vunpack.c.l.b16 %v3205
        %v3239 = vunpack.c.l.b16 %v3206
        %v3240 = vunpack.c.l.b16 %v3207
        %v3241 = vunpack.c.l.b16 %v3208
        %v3242 = vpack.c.b16 %v3227, %v3226
        %v3243 = vpack.c.b16 %v3229, %v3228
        %v3244 = vpack.c.b16 %v3231, %v3230
        %v3245 = vpack.c.b16 %v3233, %v3232
        %v3246 = vpack.c.b16 %v3235, %v3234
        %v3247 = vpack.c.b16 %v3237, %v3236
        %v3248 = vpack.c.b16 %v3239, %v3238
        %v3249 = vpack.c.b16 %v3241, %v3240
        %3258 = vmatprep.subr.bf16.mxu0 0
        %3259 = vmatpush1.bf16.msra.mxu0 %v3249
        %3260 = vmatprep.subr.bf16.mxu0 0
        %3261 = vmatpush1.bf16.msra.mxu0 %v3248
        %3262 = vmatprep.subr.bf16.mxu0 0
        %3263 = vmatpush1.bf16.msra.mxu0 %v3247
        %3264 = vmatprep.subr.bf16.mxu0 0
        %3265 = vmatpush1.bf16.msra.mxu0 %v3246
        %3266 = vmatprep.subr.bf16.mxu0 0
        %3267 = vmatpush1.bf16.msra.mxu0 %v3245
        %3268 = vmatprep.subr.bf16.mxu0 0
        %3269 = vmatpush1.bf16.msra.mxu0 %v3244
        %3270 = vmatprep.subr.bf16.mxu0 0
        %3271 = vmatpush1.bf16.msra.mxu0 %v3243
        %3272 = vmatprep.subr.bf16.mxu0 0
        %3273 = vmatpush1.bf16.msra.mxu0 %v3242
        %3274 = vmatprep.subr.bf16.mxu0 0
        %3275 = vmatpush2.bf16.msra.mxu0 0
        %3276 = vmatprep.subr.bf16.mxu0 0
        %3277 = vmatpush2.bf16.msra.mxu0 0
        %3278 = vmatprep.subr.bf16.mxu0 0
        %3279 = vmatpush2.bf16.msra.mxu0 0
        %3280 = vmatprep.subr.bf16.mxu0 0
        %3281 = vmatpush2.bf16.msra.mxu0 0
        %3282 = vmatprep.subr.bf16.mxu0 0
        %3283 = vmatpush2.bf16.msra.mxu0 0
        %3284 = vmatprep.subr.bf16.mxu0 0
        %3285 = vmatpush2.bf16.msra.mxu0 0
        %3286 = vmatprep.subr.bf16.mxu0 0
        %3287 = vmatpush2.bf16.msra.mxu0 0
        %3288 = vmatprep.subr.bf16.mxu0 0
        %3289 = vmatpush2.bf16.msra.mxu0 0
        %3290 = vmatprep.mubr.bf16.mxu0 0
        %3291 = vmatmul.mubr.bf16.gmra.mxu0 %v3192
        %v3292 = vpop.f32.mrf.mxu0
        %v3293 = vadd.f32 %v3209, %v3292
        %v3294 = vpop.f32.mrf.mxu0
        %v3295 = vpop.f32.mrf.mxu0
        %v3296 = vpop.f32.mrf.mxu0
        %3297 = vdwg.mxu0
        %v3298 = vmax.f32 %v3293, 0.0
        %v3299 = vpack.c.bf16 %v3298, %v3298
        %v3300 = vld [vmem:[#allocation7] sm:$0xf]
        %v3301 = vld [vmem:[#allocation7 + $0x4] sm:$0xf]
        %v3302 = vld [vmem:[#allocation7 + $0x8] sm:$0xf]
        %v3303 = vld [vmem:[#allocation7 + $0xc] sm:$0xf]
        %v3304 = vld [vmem:[#allocation7 + $0x10] sm:$0xf]
        %v3305 = vld [vmem:[#allocation7 + $0x14] sm:$0xf]
        %v3306 = vld [vmem:[#allocation7 + $0x18] sm:$0xf]
        %v3307 = vld [vmem:[#allocation7 + $0x1c] sm:$0xf]
        %v3308 = vld [vmem:[#allocation7 + $0x20] sm:$0xf]
        %v3309 = vld [vmem:[#allocation7 + $0x24] sm:$0xf]
        %v3310 = vld [vmem:[#allocation7 + $0x28] sm:$0xf]
        %v3311 = vld [vmem:[#allocation7 + $0x2c] sm:$0xf]
        %v3312 = vld [vmem:[#allocation7 + $0x30] sm:$0xf]
        %v3313 = vld [vmem:[#allocation7 + $0x34] sm:$0xf]
        %v3314 = vld [vmem:[#allocation7 + $0x38] sm:$0xf]
        %v3315 = vld [vmem:[#allocation7 + $0x3c] sm:$0xf]
        %v3316 = vld [vmem:[%s14] sm:$0x1]
        %v3333 = vunpack.c.l.b16 %v3300
        %v3334 = vunpack.c.l.b16 %v3301
        %v3335 = vunpack.c.l.b16 %v3302
        %v3336 = vunpack.c.l.b16 %v3303
        %v3337 = vunpack.c.l.b16 %v3304
        %v3338 = vunpack.c.l.b16 %v3305
        %v3339 = vunpack.c.l.b16 %v3306
        %v3340 = vunpack.c.l.b16 %v3307
        %v3341 = vunpack.c.l.b16 %v3308
        %v3342 = vunpack.c.l.b16 %v3309
        %v3343 = vunpack.c.l.b16 %v3310
        %v3344 = vunpack.c.l.b16 %v3311
        %v3345 = vunpack.c.l.b16 %v3312
        %v3346 = vunpack.c.l.b16 %v3313
        %v3347 = vunpack.c.l.b16 %v3314
        %v3348 = vunpack.c.l.b16 %v3315
        %v3349 = vpack.c.b16 %v3334, %v3333
        %v3350 = vpack.c.b16 %v3336, %v3335
        %v3351 = vpack.c.b16 %v3338, %v3337
        %v3352 = vpack.c.b16 %v3340, %v3339
        %v3353 = vpack.c.b16 %v3342, %v3341
        %v3354 = vpack.c.b16 %v3344, %v3343
        %v3355 = vpack.c.b16 %v3346, %v3345
        %v3356 = vpack.c.b16 %v3348, %v3347
        %3365 = vmatprep.subr.bf16.mxu0 0
        %3366 = vmatpush1.bf16.msra.mxu0 %v3356
        %3367 = vmatprep.subr.bf16.mxu0 0
        %3368 = vmatpush1.bf16.msra.mxu0 %v3355
        %3369 = vmatprep.subr.bf16.mxu0 0
        %3370 = vmatpush1.bf16.msra.mxu0 %v3354
        %3371 = vmatprep.subr.bf16.mxu0 0
        %3372 = vmatpush1.bf16.msra.mxu0 %v3353
        %3373 = vmatprep.subr.bf16.mxu0 0
        %3374 = vmatpush1.bf16.msra.mxu0 %v3352
        %3375 = vmatprep.subr.bf16.mxu0 0
        %3376 = vmatpush1.bf16.msra.mxu0 %v3351
        %3377 = vmatprep.subr.bf16.mxu0 0
        %3378 = vmatpush1.bf16.msra.mxu0 %v3350
        %3379 = vmatprep.subr.bf16.mxu0 0
        %3380 = vmatpush1.bf16.msra.mxu0 %v3349
        %3381 = vmatprep.subr.bf16.mxu0 0
        %3382 = vmatpush2.bf16.msra.mxu0 0
        %3383 = vmatprep.subr.bf16.mxu0 0
        %3384 = vmatpush2.bf16.msra.mxu0 0
        %3385 = vmatprep.subr.bf16.mxu0 0
        %3386 = vmatpush2.bf16.msra.mxu0 0
        %3387 = vmatprep.subr.bf16.mxu0 0
        %3388 = vmatpush2.bf16.msra.mxu0 0
        %3389 = vmatprep.subr.bf16.mxu0 0
        %3390 = vmatpush2.bf16.msra.mxu0 0
        %3391 = vmatprep.subr.bf16.mxu0 0
        %3392 = vmatpush2.bf16.msra.mxu0 0
        %3393 = vmatprep.subr.bf16.mxu0 0
        %3394 = vmatpush2.bf16.msra.mxu0 0
        %3395 = vmatprep.subr.bf16.mxu0 0
        %3396 = vmatpush2.bf16.msra.mxu0 0
        %3397 = vmatprep.mubr.bf16.mxu0 0
        %3398 = vmatmul.mubr.bf16.gmra.mxu0 %v3299
        %v3399 = vpop.f32.mrf.mxu0
        %v3400 = vadd.f32 %v3316, %v3399
        %v3401 = vpop.f32.mrf.mxu0
        %v3402 = vpop.f32.mrf.mxu0
        %v3403 = vpop.f32.mrf.mxu0
        %3404 = vdwg.mxu0
        %3405 = vst [vmem:[%s530] sm:$0x1] %v3400
        %s3406 = sand.u32 %s359, 1
        %s3407 = scalar_lea.sflag [#allocation4], %s3406
        %s3408 = sand.u32 %s359, 1
        %s3409 = scalar_lea.vmem [#allocation8], %s3408
        // Predicated region
        $region93: #{lenet_forward.1} parent=79 // pred_check
          %p3410 = pneg %p369
        $region94: #{lenet_forward.1} parent=79 // pred_check_branch
          %3412 = sbr.rel (%p3410) target = $region96
        $region95: #{lenet_forward.1} parent=79 // pred_region
          %s3414 = ssub.s32 16, 16
          %3415 = vsyncadd %s3407, %s3414
          %s3416 = smul.addr %s31, 16
          %s3417 = scalar_lea.hbm %s15, %s3416
          %s3419 = sshll.u32 %s3409, 4
          %s3420 = int_to_ptr.vmem [resolvable:$true] %s3419
          %3422 = dma.vmem_to_hbm [thread:$0]  %s3420, 16, %s3417, %s3407
        $region96: #{lenet_forward.1} parent=79 // pred_fallthru
          _
      $region80: #{lenet_forward.1} parent=5 // pred_fallthru
        _
      %p3423 = scmp.le.s32.totalorder 2, %s26
      // Predicated region
      $region97: #{lenet_forward.1} parent=5 // pred_check
        %p3424 = pneg %p3423
      $region98: #{lenet_forward.1} parent=5 // pred_check_branch
        %3426 = sbr.rel (%p3424) target = $region100
      $region99: #{lenet_forward.1} parent=5 // pred_region
        %s3427 = ssub.s32 %s26, 2
        // Predicated region
        $region101: #{lenet_forward.1} parent=99 // pred_check
          %p3428 = pneg %p375
        $region102: #{lenet_forward.1} parent=99 // pred_check_branch
          %3430 = sbr.rel (%p3428) target = $region104
        $region103: #{lenet_forward.1} parent=99 // pred_region
          %s3431 = sand.u32 %s360, 1
          %s3432 = scalar_lea.sflag [#allocation4], %s3431
          %s3433 = sand.u32 %s360, 1
          %s3434 = scalar_lea.vmem [#allocation8], %s3433
          %3435 = dma.done %s3432, 16
        $region104: #{lenet_forward.1} parent=99 // pred_fallthru
          _
      $region100: #{lenet_forward.1} parent=5 // pred_fallthru
        _
    $region6: #{lenet_forward.1} parent=1 // loop_footer
      %s30 = sadd.s32 1, %s26
    $region7: #{lenet_forward.1} parent=1 // loop_footer_branch
      %25 = sbr.rel target = $region3
    $region8: #{lenet_forward.1} parent=1 // loop_exit
      _
    %3436 = vsyncpa [#allocation3], 1
    %s3437 = scalar_lea.sflag [#allocation3], 1
    %3438 = vsyncpa %s3437, 1
    %3439 = vsyncpa [#allocation6], 1
    %3440 = vsyncpa [#allocation4], 1
    %s3441 = scalar_lea.sflag [#allocation4], 1
    %3442 = vsyncpa %s3441, 1

</llo_original>
